<compile_context>
chip_gen: v7x
topology: tpu7x:2x2x1
jax: 0.10.0
libtpu: 0.0.40
codegen_flags: <defaults>
</compile_context>

<pallas_src>
import functools

import jax
import jax.numpy as jnp
from jax.experimental import pallas as pl
from jax.experimental.pallas import tpu as pltpu

LEAKY_SLOPE = 0.01   # nn.LeakyReLU default negative_slope
BN_EPS = 1e-5        # nn.BatchNorm2d default eps
LANE = 128


# ----------------------------------------------------------------------------
# small static helpers
# ----------------------------------------------------------------------------
def _round_up(x, m):
    return ((x + m - 1) // m) * m


def _hw_config():
    """(vmem_limit_bytes, target output rows per spatial tile) by generation."""
    try:
        cap = pltpu.get_tpu_info().vmem_capacity_bytes
    except Exception:
        cap = 64 * 1024 * 1024
    if cap >= 100 * 1024 * 1024:          # v5e / v6e: 128 MiB physical VMEM
        return 96 * 1024 * 1024, 4096
    return 32 * 1024 * 1024, 1536         # v7x: 64 MiB physical VMEM


def _pick_tile_h(H, W, target_rows):
    """Largest divisor of H whose tile fits the row budget, preferring
    sublane-aligned (th*(W+2) % 8 == 0) tiles."""
    wp = W + 2
    divs = [d for d in range(1, H + 1) if H % d == 0]
    fit = [d for d in divs if d * wp <= target_rows] or [1]
    aligned = [d for d in fit if (d * wp) % 8 == 0]
    return max(aligned) if aligned else max(fit)


def _pad_vec(v, cpad):
    return jnp.pad(v, (0, cpad - v.shape[0])).astype(jnp.float32)


def _bn_scale_shift(partial_stats, gamma_pad, beta_pad, count):
    """Reduce per-tile (sum, sum_sq) partials -> per-channel BN scale/shift."""
    tot = jnp.sum(partial_stats, axis=(0, 1))             # (2, Cpad)
    mean = tot[0] / count
    var = jnp.maximum(tot[1] / count - mean * mean, 0.0)  # single-pass var
    scale = gamma_pad * jax.lax.rsqrt(var + BN_EPS)
    shift = beta_pad - mean * scale
    return scale.reshape(1, -1), shift.reshape(1, -1)


def _flat_valid_cols(rows, wp):
    """In-kernel helper: flat row index (f32) and its column index (mod wp),
    computed with exact f32 floor-division (no integer div/mod needed)."""
    pf = jax.lax.broadcasted_iota(jnp.int32, (rows, 1), 0).astype(jnp.float32)
    colf = pf - jnp.floor(pf / wp) * wp
    return pf, colf


# ----------------------------------------------------------------------------
# Pallas kernels
# ----------------------------------------------------------------------------
def _conv1_stats_kernel(x_ref, w_ref, y_ref, ps_ref, *, th, wp, w_valid):
    """conv1 as one matmul on pre-im2col'ed rows + per-channel stat partials.

    x_ref : (1,1,Rp,K1)   bf16  haloed/edge-replicated im2col rows (zero tail)
    w_ref : (K1, Cpad)    bf16  resident conv1 weights
    y_ref : (1,1,Rp,Cpad) bf16  pre-BN conv1 output in conv2's haloed layout
    ps_ref: (1,1,2,Cpad)  f32   row0=sum, row1=sum_sq over interior positions
    """
    acc = jnp.dot(x_ref[0, 0], w_ref[...], preferred_element_type=jnp.float32)
    yq = acc.astype(jnp.bfloat16)
    y_ref[0, 0] = yq

    # stats of the *stored* (bf16-rounded) values, interior rows & real cols only
    rp = acc.shape[0]
    pf, colf = _flat_valid_cols(rp, wp)
    valid = ((pf >= wp) & (pf < (th + 1) * wp)
             & (colf >= 1.0) & (colf <= float(w_valid)))
    yf = yq.astype(jnp.float32) * valid.astype(jnp.float32)
    ps_ref[0, 0] = jnp.concatenate(
        [jnp.sum(yf, axis=0, keepdims=True),
         jnp.sum(yf * yf, axis=0, keepdims=True)], axis=0)


def _bn_act_conv_stats_kernel(a1_ref, sc_ref, sh_ref, w_ref,
                              y_ref, ps_ref, a_scr, *, th, wp, w_valid):
    """Fused: BN1-apply + LeakyReLU on the haloed conv1 tile, then conv2 as 9
    row-shifted matmuls + per-channel stat partials.  Grid axis 2 tiles the
    output channels; the activation is computed once (cn==0) into scratch.

    a1_ref: (1,1,Rp,Cpad)   bf16  haloed pre-BN conv1 tile
    sc/sh : (1, Cpad)       f32   resident BN1 scale / shift
    w_ref : (9, Cpad, tn)   bf16  conv2 per-tap weights (out-channel tile)
    y_ref : (1,1,r_out,tn)  bf16  pre-BN conv2 output
    ps_ref: (1,1,2,tn)      f32   conv2 batch-stat partials
    a_scr : (Rp, Cpad)      bf16  persistent VMEM scratch (activated tile)
    """
    cn = pl.program_id(2)

    @pl.when(cn == 0)
    def _():
        a = a1_ref[0, 0].astype(jnp.float32)
        a = a * sc_ref[...] + sh_ref[...]                 # BN1 (precomputed)
        a = jnp.where(a >= 0, a, LEAKY_SLOPE * a)         # LeakyReLU (f32 VPU)
        a_scr[...] = a.astype(jnp.bfloat16)               # bf16 MXU operand

    r_out = th * wp
    tn = w_ref.shape[2]
    acc = jnp.zeros((r_out, tn), jnp.float32)
    # TODO(synk): for v5e, pack the three dw shifts into K (3 matmuls of
    # K=3*Cpad) to cut accumulator read-modify-write passes.
    for t in range(9):
        dh, dw = divmod(t, 3)
        s0 = dh * wp + dw
        acc = acc + jnp.dot(a_scr[s0:s0 + r_out, :], w_ref[t],
                            preferred_element_type=jnp.float32)
    yq = acc.astype(jnp.bfloat16)
    y_ref[0, 0] = yq

    _, colf = _flat_valid_cols(r_out, wp)
    m = (colf < float(w_valid)).astype(jnp.float32)
    yf = yq.astype(jnp.float32) * m
    ps_ref[0, 0] = jnp.concatenate(
        [jnp.sum(yf, axis=0, keepdims=True),
         jnp.sum(yf * yf, axis=0, keepdims=True)], axis=0)


def _bn_act_kernel(y_ref, sc_ref, sh_ref, o_ref):
    """BN2-apply + LeakyReLU (pointwise, lane-dense)."""
    y = y_ref[0, 0].astype(jnp.float32) * sc_ref[...] + sh_ref[...]
    o_ref[0, 0] = jnp.where(y >= 0, y, LEAKY_SLOPE * y)


# ----------------------------------------------------------------------------
# pallas_call wrappers
# ----------------------------------------------------------------------------
def _conv1_call(x1, w1t, *, th, wp, w_valid, cpad, vmem_limit):
    n, nh, rp, k1 = x1.shape
    kernel = functools.partial(_conv1_stats_kernel, th=th, wp=wp, w_valid=w_valid)
    return pl.pallas_call(
        kernel,
        grid=(n, nh),
        in_specs=[
            pl.BlockSpec((1, 1, rp, k1), lambda i, j: (i, j, 0, 0)),
            pl.BlockSpec((k1, cpad), lambda i, j: (0, 0)),            # resident
        ],
        out_specs=[
            pl.BlockSpec((1, 1, rp, cpad), lambda i, j: (i, j, 0, 0)),
            pl.BlockSpec((1, 1, 2, cpad), lambda i, j: (i, j, 0, 0)),
        ],
        out_shape=[
            jax.ShapeDtypeStruct((n, nh, rp, cpad), jnp.bfloat16),
            jax.ShapeDtypeStruct((n, nh, 2, cpad), jnp.float32),
        ],
        compiler_params=pltpu.CompilerParams(
            dimension_semantics=("parallel", "parallel"),
            vmem_limit_bytes=vmem_limit),
    )(x1, w1t)


def _conv2_call(a1, scale1, shift1, w2t, *, th, wp, w_valid, cpad, tn,
                vmem_limit):
    n, nh, rp, _ = a1.shape
    r_out = th * wp
    n_cn = cpad // tn
    kernel = functools.partial(_bn_act_conv_stats_kernel,
                               th=th, wp=wp, w_valid=w_valid)
    return pl.pallas_call(
        kernel,
        grid=(n, nh, n_cn),
        in_specs=[
            pl.BlockSpec((1, 1, rp, cpad), lambda i, j, c: (i, j, 0, 0)),
            pl.BlockSpec((1, cpad), lambda i, j, c: (0, 0)),          # resident
            pl.BlockSpec((1, cpad), lambda i, j, c: (0, 0)),          # resident
            pl.BlockSpec((9, cpad, tn), lambda i, j, c: (0, 0, c)),
        ],
        out_specs=[
            pl.BlockSpec((1, 1, r_out, tn), lambda i, j, c: (i, j, 0, c)),
            pl.BlockSpec((1, 1, 2, tn), lambda i, j, c: (i, j, 0, c)),
        ],
        out_shape=[
            jax.ShapeDtypeStruct((n, nh, r_out, cpad), jnp.bfloat16),
            jax.ShapeDtypeStruct((n, nh, 2, cpad), jnp.float32),
        ],
        scratch_shapes=[pltpu.VMEM((rp, cpad), jnp.bfloat16)],
        compiler_params=pltpu.CompilerParams(
            dimension_semantics=("parallel", "parallel", "arbitrary"),
            vmem_limit_bytes=vmem_limit),
    )(a1, scale1, shift1, w2t)


def _bn_act_call(y2, scale2, shift2, *, cpad, vmem_limit):
    n, nh, r_out, _ = y2.shape
    return pl.pallas_call(
        _bn_act_kernel,
        grid=(n, nh),
        in_specs=[
            pl.BlockSpec((1, 1, r_out, cpad), lambda i, j: (i, j, 0, 0)),
            pl.BlockSpec((1, cpad), lambda i, j: (0, 0)),
            pl.BlockSpec((1, cpad), lambda i, j: (0, 0)),
        ],
        out_specs=pl.BlockSpec((1, 1, r_out, cpad), lambda i, j: (i, j, 0, 0)),
        out_shape=jax.ShapeDtypeStruct((n, nh, r_out, cpad), jnp.float32),
        compiler_params=pltpu.CompilerParams(
            dimension_semantics=("parallel", "parallel"),
            vmem_limit_bytes=vmem_limit),
    )(y2, scale2, shift2)


# ----------------------------------------------------------------------------
# DoubleConv forward
# ----------------------------------------------------------------------------
def double_conv(x_nchw, params, tile_h=None):
    """Forward pass of DoubleConv.  x_nchw: (N, C_in, H, W) float32."""
    w1, b1, g1, be1, w2, b2, g2, be2 = params
    # b1/b2 are exactly cancelled by training-mode BN mean subtraction -> dropped.
    del b1, b2
    N, cin, H, W = x_nchw.shape
    out_ch = w1.shape[0]
    cpad = _round_up(out_ch, LANE)           # lane-dense channel dim
    k1 = 9 * cin                             # conv1 contraction depth (im2col)
    vmem_limit, target_rows = _hw_config()
    if tile_h is None:
        tile_h = _pick_tile_h(H, W, target_rows)
    assert H % tile_h == 0, (H, tile_h)
    th, wp = tile_h, W + 2
    nh = H // th
    r_halo = (th + 2) * wp                   # haloed flattened rows per tile
    rp = _round_up(r_halo + 2, 8)            # +2 so conv2's shifted reads stay in-bounds
    tn = cpad if cpad <= 256 else 256        # conv2 output-channel tile
    count = jnp.float32(N * H * W)

    # constant operands (tiny, built once) -----------------------------------
    w1t = jnp.transpose(w1, (2, 3, 1, 0)).reshape(k1, out_ch)
    w1t = jnp.pad(w1t, ((0, 0), (0, cpad - out_ch))).astype(jnp.bfloat16)
    w2t = jnp.transpose(w2, (2, 3, 1, 0)).reshape(9, out_ch, out_ch)
    w2t = jnp.pad(w2t, ((0, 0), (0, cpad - out_ch),
                        (0, cpad - out_ch))).astype(jnp.bfloat16)
    g1p, be1p = _pad_vec(g1, cpad), _pad_vec(be1, cpad)
    g2p, be2p = _pad_vec(g2, cpad), _pad_vec(be2, cpad)

    # stage-1 input: im2col of the *small-cin* input, in conv2's haloed,
    # edge-replicated, flattened-row layout (position (j,k) of a tile maps to
    # output (clip(tile_start-1+j), clip(k-1)); cheap because channels = 9*cin).
    # TODO(synk): for large in_ch, give conv1 the same in-kernel 9-tap
    # structure as conv2 to avoid the 9x im2col blow-up of a wide input.
    x_nhwc = jnp.transpose(x_nchw.astype(jnp.bfloat16), (0, 2, 3, 1))
    xp = jnp.pad(x_nhwc, ((0, 0), (1, 1), (1, 1), (0, 0)), mode="edge")
    xi = jnp.concatenate(
        [xp[:, dh:dh + H, dw:dw + W, :] for dh in range(3) for dw in range(3)],
        axis=-1)                                               # (N, H, W, 9*cin)
    xi = jnp.pad(xi, ((0, 0), (1, 1), (1, 1), (0, 0)), mode="edge")
    xt = jnp.stack([xi[:, hh * th: hh * th + th + 2] for hh in range(nh)], axis=1)
    xt = xt.reshape(N, nh, r_halo, k1)
    xt = jnp.pad(xt, ((0, 0), (0, 0), (0, rp - r_halo), (0, 0)))

    # ---- stage 1: conv1 -> haloed pre-BN activation + batch-stat partials ---
    a1, ps1 = _conv1_call(xt, w1t, th=th, wp=wp, w_valid=W, cpad=cpad,
                          vmem_limit=vmem_limit)
    scale1, shift1 = _bn_scale_shift(ps1, g1p, be1p, count)

    # ---- stage 2: BN1-apply + LeakyReLU fused with conv2 + batch stats ------
    y2, ps2 = _conv2_call(a1, scale1, shift1, w2t, th=th, wp=wp, w_valid=W,
                          cpad=cpad, tn=tn, vmem_limit=vmem_limit)
    scale2, shift2 = _bn_scale_shift(ps2, g2p, be2p, count)

    # ---- stage 3: BN2-apply + LeakyReLU --------------------------------------
    out = _bn_act_call(y2, scale2, shift2, cpad=cpad, vmem_limit=vmem_limit)
    # wp->W column trim + Cpad->out_ch trim ride the boundary NHWC->NCHW
    # transpose (single fused XLA copy).
    out = out.reshape(N, nh, th, wp, cpad)[:, :, :, :W, :out_ch]
    out = out.reshape(N, H, W, out_ch)
    return jnp.transpose(out, (0, 3, 1, 2))


# ----------------------------------------------------------------------------
# Deterministic parameter init (shapes from DoubleConv.__init__)
# ----------------------------------------------------------------------------
def init_params(key, in_ch, out_ch):
    k1, k2, k3, k4 = jax.random.split(key, 4)
    bnd1 = 1.0 / jnp.sqrt(in_ch * 9.0)
    w1 = jax.random.uniform(k1, (out_ch, in_ch, 3, 3), jnp.float32, -bnd1, bnd1)
    b1 = jax.random.uniform(k2, (out_ch,), jnp.float32, -bnd1, bnd1)
    bnd2 = 1.0 / jnp.sqrt(out_ch * 9.0)
    w2 = jax.random.uniform(k3, (out_ch, out_ch, 3, 3), jnp.float32, -bnd2, bnd2)
    b2 = jax.random.uniform(k4, (out_ch,), jnp.float32, -bnd2, bnd2)
    g1 = jnp.ones((out_ch,), jnp.float32)
    be1 = jnp.zeros((out_ch,), jnp.float32)
    g2 = jnp.ones((out_ch,), jnp.float32)
    be2 = jnp.zeros((out_ch,), jnp.float32)
    return (w1, b1, g1, be1, w2, b2, g2, be2)


# ----------------------------------------------------------------------------
# Pure-JAX reference (same math, f32, includes the bias to show it cancels)
# ----------------------------------------------------------------------------
def _ref_block(x_nchw, w, b, g, be):
    xp = jnp.pad(x_nchw, ((0, 0), (0, 0), (1, 1), (1, 1)), mode="edge")
    y = jax.lax.conv_general_dilated(
        xp, w, window_strides=(1, 1), padding="VALID",
        dimension_numbers=("NCHW", "OIHW", "NCHW"),
        precision=jax.lax.Precision.HIGHEST)
    y = y + b.reshape(1, -1, 1, 1)
    mean = jnp.mean(y, axis=(0, 2, 3), keepdims=True)
    var = jnp.mean(jnp.square(y - mean), axis=(0, 2, 3), keepdims=True)
    y = (y - mean) * jax.lax.rsqrt(var + BN_EPS)
    y = y * g.reshape(1, -1, 1, 1) + be.reshape(1, -1, 1, 1)
    return jnp.where(y >= 0, y, LEAKY_SLOPE * y)


def double_conv_ref(x_nchw, params):
    w1, b1, g1, be1, w2, b2, g2, be2 = params
    y = _ref_block(x_nchw, w1, b1, g1, be1)
    return _ref_block(y, w2, b2, g2, be2)


if __name__ == "__main__":
    N, IN_CH, OUT_CH, H, W = 2, 4, 8, 16, 16
    key = jax.random.PRNGKey(0)
    kx, kp = jax.random.split(key)
    x = jax.random.normal(kx, (N, IN_CH, H, W), jnp.float32)
    params = init_params(kp, IN_CH, OUT_CH)

    # tile_h=8 -> 2 h-tiles per image, exercising the in-kernel halo path.
    run = jax.jit(functools.partial(double_conv, tile_h=8))
    out = jax.block_until_ready(run(x, params))
    ref = jax.block_until_ready(double_conv_ref(x, params))

    assert out.shape == (N, OUT_CH, H, W), out.shape
    assert bool(jnp.all(jnp.isfinite(out)))
    max_err = float(jnp.max(jnp.abs(out - ref)))
    mean_err = float(jnp.mean(jnp.abs(out - ref)))
    # bf16 MXU operands / bf16 intermediates -> looser tolerance than pure-f32.
    assert max_err < 1.5e-1, max_err
    assert mean_err < 3e-2, mean_err

    print("KERNEL_OK")
</pallas_src>

<mosaic_0001>
module attributes {stable_mosaic.version = 11 : i64} {
  func.func @_conv1_stats_kernel(%arg0: i32, %arg1: i32, %arg2: memref<1x1x184x36xbf16, #tpu.memory_space<vmem>>, %arg3: memref<36x128xbf16, #tpu.memory_space<vmem>>, %arg4: memref<1x1x184x128xbf16, #tpu.memory_space<vmem>>, %arg5: memref<1x1x2x128xf32, #tpu.memory_space<vmem>>) attributes {dimension_semantics = [#tpu.dimension_semantics<parallel>, #tpu.dimension_semantics<parallel>], iteration_bounds = array<i64: 2, 2>, scalar_prefetch = 0 : i64, scratch_operands = 0 : i64, tpu.core_type = #tpu.core_type<tc>, window_params = [{transform_indices = @transform_0, window_bounds = array<i64: 1, 1, 184, 36>}, {pipeline_mode = #tpu.pipeline_mode<synchronous>, transform_indices = @transform_1, window_bounds = array<i64: 36, 128>}, {transform_indices = @transform_2, window_bounds = array<i64: 1, 1, 184, 128>}, {transform_indices = @transform_3, window_bounds = array<i64: 1, 1, 2, 128>}]} {
    %c0 = arith.constant 0 : index
    %c0_0 = arith.constant 0 : index
    %c0_1 = arith.constant 0 : index
    %c0_2 = arith.constant 0 : index
    %0 = vector.load %arg2[%c0, %c0_0, %c0_1, %c0_2] : memref<1x1x184x36xbf16, #tpu.memory_space<vmem>>, vector<1x1x184x36xbf16>
    %1 = vector.shape_cast %0 : vector<1x1x184x36xbf16> to vector<184x36xbf16>
    %c0_3 = arith.constant 0 : index
    %c0_4 = arith.constant 0 : index
    %2 = vector.load %arg3[%c0_3, %c0_4] : memref<36x128xbf16, #tpu.memory_space<vmem>>, vector<36x128xbf16>
    %cst = arith.constant dense<0.000000e+00> : vector<184x128xf32>
    %3 = tpu.matmul %1, %2, %cst {dimension_numbers = #tpu.dot_dimension_numbers<[1], [0], [0], [1], [0, 0, 1, 1], [], []>} : vector<184x36xbf16>, vector<36x128xbf16>, vector<184x128xf32> -> vector<184x128xf32>
    %4 = arith.truncf %3 : vector<184x128xf32> to vector<184x128xbf16>
    %c0_5 = arith.constant 0 : index
    %c0_6 = arith.constant 0 : index
    %c0_7 = arith.constant 0 : index
    %c0_8 = arith.constant 0 : index
    %5 = vector.load %arg4[%c0_5, %c0_6, %c0_7, %c0_8] : memref<1x1x184x128xbf16, #tpu.memory_space<vmem>>, vector<1x1x184x128xbf16>
    %6 = vector.shape_cast %5 : vector<1x1x184x128xbf16> to vector<184x128xbf16>
    %7 = vector.shape_cast %4 : vector<184x128xbf16> to vector<1x1x184x128xbf16>
    tpu.vector_store %arg4[%c0_5, %c0_6, %c0_7, %c0_8], %7 {strides = array<i32>} : memref<1x1x184x128xbf16, #tpu.memory_space<vmem>>, vector<1x1x184x128xbf16>,
    %8 = tpu.iota {dimensions = array<i32: 0>} : vector<184x1xi32>
    %9 = arith.sitofp %8 : vector<184x1xi32> to vector<184x1xf32>
    %cst_9 = arith.constant 1.800000e+01 : f32
    %10 = vector.broadcast %cst_9 : f32 to vector<184x1xf32>
    %11 = arith.divf %9, %10 : vector<184x1xf32>
    %12 = math.floor %11 : vector<184x1xf32>
    %cst_10 = arith.constant 1.800000e+01 : f32
    %13 = vector.broadcast %cst_10 : f32 to vector<184x1xf32>
    %14 = arith.mulf %12, %13 : vector<184x1xf32>
    %15 = arith.subf %9, %14 : vector<184x1xf32>
    %cst_11 = arith.constant 1.800000e+01 : f32
    %16 = vector.broadcast %cst_11 : f32 to vector<184x1xf32>
    %17 = arith.cmpf oge, %9, %16 : vector<184x1xf32>
    %cst_12 = arith.constant 1.620000e+02 : f32
    %18 = vector.broadcast %cst_12 : f32 to vector<184x1xf32>
    %19 = arith.cmpf olt, %9, %18 : vector<184x1xf32>
    %20 = arith.andi %17, %19 : vector<184x1xi1>
    %cst_13 = arith.constant 1.000000e+00 : f32
    %21 = vector.broadcast %cst_13 : f32 to vector<184x1xf32>
    %22 = arith.cmpf oge, %15, %21 : vector<184x1xf32>
    %23 = arith.andi %20, %22 : vector<184x1xi1>
    %cst_14 = arith.constant 1.600000e+01 : f32
    %24 = vector.broadcast %cst_14 : f32 to vector<184x1xf32>
    %25 = arith.cmpf ole, %15, %24 : vector<184x1xf32>
    %26 = arith.andi %23, %25 : vector<184x1xi1>
    %27 = arith.extf %4 : vector<184x128xbf16> to vector<184x128xf32>
    %28 = arith.extui %26 : vector<184x1xi1> to vector<184x1xi32>
    %29 = arith.sitofp %28 : vector<184x1xi32> to vector<184x1xf32>
    %30 = vector.broadcast %29 : vector<184x1xf32> to vector<184x128xf32>
    %31 = arith.mulf %27, %30 : vector<184x128xf32>
    %cst_15 = arith.constant dense<0.000000e+00> : vector<128xf32>
    %32 = vector.multi_reduction <add>, %31, %cst_15 [0] : vector<184x128xf32> to vector<128xf32>
    %33 = vector.shape_cast %32 : vector<128xf32> to vector<1x128xf32>
    %34 = arith.mulf %31, %31 : vector<184x128xf32>
    %cst_16 = arith.constant dense<0.000000e+00> : vector<128xf32>
    %35 = vector.multi_reduction <add>, %34, %cst_16 [0] : vector<184x128xf32> to vector<128xf32>
    %36 = vector.shape_cast %35 : vector<128xf32> to vector<1x128xf32>
    %37 = tpu.concatenate %33, %36 in 0 : vector<1x128xf32>, vector<1x128xf32> -> vector<2x128xf32>
    %c0_17 = arith.constant 0 : index
    %c0_18 = arith.constant 0 : index
    %c0_19 = arith.constant 0 : index
    %c0_20 = arith.constant 0 : index
    %38 = vector.load %arg5[%c0_17, %c0_18, %c0_19, %c0_20] : memref<1x1x2x128xf32, #tpu.memory_space<vmem>>, vector<1x1x2x128xf32>
    %39 = vector.shape_cast %38 : vector<1x1x2x128xf32> to vector<2x128xf32>
    %40 = vector.shape_cast %37 : vector<2x128xf32> to vector<1x1x2x128xf32>
    tpu.vector_store %arg5[%c0_17, %c0_18, %c0_19, %c0_20], %40 {strides = array<i32>} : memref<1x1x2x128xf32, #tpu.memory_space<vmem>>, vector<1x1x2x128xf32>,
    return
  }
  func.func @transform_0(%arg0: i32, %arg1: i32) -> (i32, i32, i32, i32) {
    %c0_i32 = arith.constant 0 : i32
    %c0_i32_0 = arith.constant 0 : i32
    %c0_i32_1 = arith.constant 0 : i32
    return %arg0, %arg1, %c0_i32, %c0_i32_0 : i32, i32, i32, i32
  }
  func.func @transform_1(%arg0: i32, %arg1: i32) -> (i32, i32) {
    %c0_i32 = arith.constant 0 : i32
    %c0_i32_0 = arith.constant 0 : i32
    %c0_i32_1 = arith.constant 0 : i32
    return %c0_i32, %c0_i32_0 : i32, i32
  }
  func.func @transform_2(%arg0: i32, %arg1: i32) -> (i32, i32, i32, i32) {
    %c0_i32 = arith.constant 0 : i32
    %c0_i32_0 = arith.constant 0 : i32
    %c0_i32_1 = arith.constant 0 : i32
    return %arg0, %arg1, %c0_i32, %c0_i32_0 : i32, i32, i32, i32
  }
  func.func @transform_3(%arg0: i32, %arg1: i32) -> (i32, i32, i32, i32) {
    %c0_i32 = arith.constant 0 : i32
    %c0_i32_0 = arith.constant 0 : i32
    %c0_i32_1 = arith.constant 0 : i32
    return %arg0, %arg1, %c0_i32, %c0_i32_0 : i32, i32, i32, i32
  }
}

module attributes {stable_mosaic.version = 11 : i64} {
  func.func @_bn_act_kernel(%arg0: i32, %arg1: i32, %arg2: memref<1x1x144x128xbf16, #tpu.memory_space<vmem>>, %arg3: memref<1x128xf32, #tpu.memory_space<vmem>>, %arg4: memref<1x128xf32, #tpu.memory_space<vmem>>, %arg5: memref<1x1x144x128xf32, #tpu.memory_space<vmem>>) attributes {dimension_semantics = [#tpu.dimension_semantics<parallel>, #tpu.dimension_semantics<parallel>], iteration_bounds = array<i64: 2, 2>, scalar_prefetch = 0 : i64, scratch_operands = 0 : i64, tpu.core_type = #tpu.core_type<tc>, window_params = [{transform_indices = @transform_0, window_bounds = array<i64: 1, 1, 144, 128>}, {pipeline_mode = #tpu.pipeline_mode<synchronous>, transform_indices = @transform_1, window_bounds = array<i64: 1, 128>}, {pipeline_mode = #tpu.pipeline_mode<synchronous>, transform_indices = @transform_2, window_bounds = array<i64: 1, 128>}, {transform_indices = @transform_3, window_bounds = array<i64: 1, 1, 144, 128>}]} {
    %c0 = arith.constant 0 : index
    %c0_0 = arith.constant 0 : index
    %c0_1 = arith.constant 0 : index
    %c0_2 = arith.constant 0 : index
    %0 = vector.load %arg2[%c0, %c0_0, %c0_1, %c0_2] : memref<1x1x144x128xbf16, #tpu.memory_space<vmem>>, vector<1x1x144x128xbf16>
    %1 = vector.shape_cast %0 : vector<1x1x144x128xbf16> to vector<144x128xbf16>
    %2 = arith.extf %1 : vector<144x128xbf16> to vector<144x128xf32>
    %c0_3 = arith.constant 0 : index
    %c0_4 = arith.constant 0 : index
    %3 = vector.load %arg3[%c0_3, %c0_4] : memref<1x128xf32, #tpu.memory_space<vmem>>, vector<1x128xf32>
    %4 = vector.broadcast %3 : vector<1x128xf32> to vector<144x128xf32>
    %5 = arith.mulf %2, %4 : vector<144x128xf32>
    %c0_5 = arith.constant 0 : index
    %c0_6 = arith.constant 0 : index
    %6 = vector.load %arg4[%c0_5, %c0_6] : memref<1x128xf32, #tpu.memory_space<vmem>>, vector<1x128xf32>
    %7 = vector.broadcast %6 : vector<1x128xf32> to vector<144x128xf32>
    %8 = arith.addf %5, %7 : vector<144x128xf32>
    %cst = arith.constant 0.000000e+00 : f32
    %9 = vector.broadcast %cst : f32 to vector<144x128xf32>
    %10 = arith.cmpf oge, %8, %9 : vector<144x128xf32>
    %cst_7 = arith.constant 0.00999999977 : f32
    %11 = vector.broadcast %cst_7 : f32 to vector<144x128xf32>
    %12 = arith.mulf %11, %8 : vector<144x128xf32>
    %13 = arith.select %10, %8, %12 : vector<144x128xi1>, vector<144x128xf32>
    %c0_8 = arith.constant 0 : index
    %c0_9 = arith.constant 0 : index
    %c0_10 = arith.constant 0 : index
    %c0_11 = arith.constant 0 : index
    %14 = vector.load %arg5[%c0_8, %c0_9, %c0_10, %c0_11] : memref<1x1x144x128xf32, #tpu.memory_space<vmem>>, vector<1x1x144x128xf32>
    %15 = vector.shape_cast %14 : vector<1x1x144x128xf32> to vector<144x128xf32>
    %16 = vector.shape_cast %13 : vector<144x128xf32> to vector<1x1x144x128xf32>
    tpu.vector_store %arg5[%c0_8, %c0_9, %c0_10, %c0_11], %16 {strides = array<i32>} : memref<1x1x144x128xf32, #tpu.memory_space<vmem>>, vector<1x1x144x128xf32>,
    return
  }
  func.func @transform_0(%arg0: i32, %arg1: i32) -> (i32, i32, i32, i32) {
    %c0_i32 = arith.constant 0 : i32
    %c0_i32_0 = arith.constant 0 : i32
    %c0_i32_1 = arith.constant 0 : i32
    return %arg0, %arg1, %c0_i32, %c0_i32_0 : i32, i32, i32, i32
  }
  func.func @transform_1(%arg0: i32, %arg1: i32) -> (i32, i32) {
    %c0_i32 = arith.constant 0 : i32
    %c0_i32_0 = arith.constant 0 : i32
    %c0_i32_1 = arith.constant 0 : i32
    return %c0_i32, %c0_i32_0 : i32, i32
  }
  func.func @transform_2(%arg0: i32, %arg1: i32) -> (i32, i32) {
    %c0_i32 = arith.constant 0 : i32
    %c0_i32_0 = arith.constant 0 : i32
    %c0_i32_1 = arith.constant 0 : i32
    return %c0_i32, %c0_i32_0 : i32, i32
  }
  func.func @transform_3(%arg0: i32, %arg1: i32) -> (i32, i32, i32, i32) {
    %c0_i32 = arith.constant 0 : i32
    %c0_i32_0 = arith.constant 0 : i32
    %c0_i32_1 = arith.constant 0 : i32
    return %arg0, %arg1, %c0_i32, %c0_i32_0 : i32, i32, i32, i32
  }
}

module attributes {stable_mosaic.version = 11 : i64} {
  func.func @_bn_act_conv_stats_kernel(%arg0: i32, %arg1: i32, %arg2: i32, %arg3: memref<1x1x184x128xbf16, #tpu.memory_space<vmem>>, %arg4: memref<1x128xf32, #tpu.memory_space<vmem>>, %arg5: memref<1x128xf32, #tpu.memory_space<vmem>>, %arg6: memref<9x128x128xbf16, #tpu.memory_space<vmem>>, %arg7: memref<1x1x144x128xbf16, #tpu.memory_space<vmem>>, %arg8: memref<1x1x2x128xf32, #tpu.memory_space<vmem>>, %arg9: memref<184x128xbf16, #tpu.memory_space<vmem>>) attributes {dimension_semantics = [#tpu.dimension_semantics<parallel>, #tpu.dimension_semantics<parallel>, #tpu.dimension_semantics<arbitrary>], iteration_bounds = array<i64: 2, 2, 1>, scalar_prefetch = 0 : i64, scratch_operands = 1 : i64, tpu.core_type = #tpu.core_type<tc>, window_params = [{transform_indices = @transform_0, window_bounds = array<i64: 1, 1, 184, 128>}, {pipeline_mode = #tpu.pipeline_mode<synchronous>, transform_indices = @transform_1, window_bounds = array<i64: 1, 128>}, {pipeline_mode = #tpu.pipeline_mode<synchronous>, transform_indices = @transform_2, window_bounds = array<i64: 1, 128>}, {transform_indices = @transform_3, window_bounds = array<i64: 9, 128, 128>}, {transform_indices = @transform_4, window_bounds = array<i64: 1, 1, 144, 128>}, {transform_indices = @transform_5, window_bounds = array<i64: 1, 1, 2, 128>}]} {
    %c0_i32 = arith.constant 0 : i32
    %0 = arith.cmpi eq, %arg2, %c0_i32 : i32
    %1 = arith.extui %0 : i1 to i32
    %c0_i32_0 = arith.constant 0 : i32
    %2 = arith.cmpi ne, %1, %c0_i32_0 : i32
    scf.if %2 {
      %c0_53 = arith.constant 0 : index
      %c0_54 = arith.constant 0 : index
      %c0_55 = arith.constant 0 : index
      %c0_56 = arith.constant 0 : index
      %77 = vector.load %arg3[%c0_53, %c0_54, %c0_55, %c0_56] : memref<1x1x184x128xbf16, #tpu.memory_space<vmem>>, vector<1x1x184x128xbf16>
      %78 = vector.shape_cast %77 : vector<1x1x184x128xbf16> to vector<184x128xbf16>
      %79 = arith.extf %78 : vector<184x128xbf16> to vector<184x128xf32>
      %c0_57 = arith.constant 0 : index
      %c0_58 = arith.constant 0 : index
      %80 = vector.load %arg4[%c0_57, %c0_58] : memref<1x128xf32, #tpu.memory_space<vmem>>, vector<1x128xf32>
      %81 = vector.broadcast %80 : vector<1x128xf32> to vector<184x128xf32>
      %82 = arith.mulf %79, %81 : vector<184x128xf32>
      %c0_59 = arith.constant 0 : index
      %c0_60 = arith.constant 0 : index
      %83 = vector.load %arg5[%c0_59, %c0_60] : memref<1x128xf32, #tpu.memory_space<vmem>>, vector<1x128xf32>
      %84 = vector.broadcast %83 : vector<1x128xf32> to vector<184x128xf32>
      %85 = arith.addf %82, %84 : vector<184x128xf32>
      %cst_61 = arith.constant 0.000000e+00 : f32
      %86 = vector.broadcast %cst_61 : f32 to vector<184x128xf32>
      %87 = arith.cmpf oge, %85, %86 : vector<184x128xf32>
      %cst_62 = arith.constant 0.00999999977 : f32
      %88 = vector.broadcast %cst_62 : f32 to vector<184x128xf32>
      %89 = arith.mulf %88, %85 : vector<184x128xf32>
      %90 = arith.select %87, %85, %89 : vector<184x128xi1>, vector<184x128xf32>
      %91 = arith.truncf %90 : vector<184x128xf32> to vector<184x128xbf16>
      %c0_63 = arith.constant 0 : index
      %c0_64 = arith.constant 0 : index
      %92 = vector.load %arg9[%c0_63, %c0_64] : memref<184x128xbf16, #tpu.memory_space<vmem>>, vector<184x128xbf16>
      tpu.vector_store %arg9[%c0_63, %c0_64], %91 {strides = array<i32>} : memref<184x128xbf16, #tpu.memory_space<vmem>>, vector<184x128xbf16>,
    } else {
    }
    %cst = arith.constant 0.000000e+00 : f32
    %3 = vector.broadcast %cst : f32 to vector<144x128xf32>
    %c0 = arith.constant 0 : index
    %c0_1 = arith.constant 0 : index
    %4 = vector.load %arg9[%c0, %c0_1] : memref<184x128xbf16, #tpu.memory_space<vmem>>, vector<144x128xbf16>
    %c0_2 = arith.constant 0 : index
    %c0_3 = arith.constant 0 : index
    %c0_4 = arith.constant 0 : index
    %5 = vector.load %arg6[%c0_2, %c0_3, %c0_4] : memref<9x128x128xbf16, #tpu.memory_space<vmem>>, vector<1x128x128xbf16>
    %6 = vector.shape_cast %5 : vector<1x128x128xbf16> to vector<128x128xbf16>
    %cst_5 = arith.constant dense<0.000000e+00> : vector<144x128xf32>
    %7 = tpu.matmul %4, %6, %cst_5 {dimension_numbers = #tpu.dot_dimension_numbers<[1], [0], [0], [1], [0, 0, 1, 1], [], []>} : vector<144x128xbf16>, vector<128x128xbf16>, vector<144x128xf32> -> vector<144x128xf32>
    %8 = arith.addf %3, %7 : vector<144x128xf32>
    %c1 = arith.constant 1 : index
    %c0_6 = arith.constant 0 : index
    %9 = vector.load %arg9[%c1, %c0_6] : memref<184x128xbf16, #tpu.memory_space<vmem>>, vector<144x128xbf16>
    %c1_7 = arith.constant 1 : index
    %c0_8 = arith.constant 0 : index
    %c0_9 = arith.constant 0 : index
    %10 = vector.load %arg6[%c1_7, %c0_8, %c0_9] : memref<9x128x128xbf16, #tpu.memory_space<vmem>>, vector<1x128x128xbf16>
    %11 = vector.shape_cast %10 : vector<1x128x128xbf16> to vector<128x128xbf16>
    %cst_10 = arith.constant dense<0.000000e+00> : vector<144x128xf32>
    %12 = tpu.matmul %9, %11, %cst_10 {dimension_numbers = #tpu.dot_dimension_numbers<[1], [0], [0], [1], [0, 0, 1, 1], [], []>} : vector<144x128xbf16>, vector<128x128xbf16>, vector<144x128xf32> -> vector<144x128xf32>
    %13 = arith.addf %8, %12 : vector<144x128xf32>
    %c2 = arith.constant 2 : index
    %c0_11 = arith.constant 0 : index
    %14 = vector.load %arg9[%c2, %c0_11] : memref<184x128xbf16, #tpu.memory_space<vmem>>, vector<144x128xbf16>
    %c2_12 = arith.constant 2 : index
    %c0_13 = arith.constant 0 : index
    %c0_14 = arith.constant 0 : index
    %15 = vector.load %arg6[%c2_12, %c0_13, %c0_14] : memref<9x128x128xbf16, #tpu.memory_space<vmem>>, vector<1x128x128xbf16>
    %16 = vector.shape_cast %15 : vector<1x128x128xbf16> to vector<128x128xbf16>
    %cst_15 = arith.constant dense<0.000000e+00> : vector<144x128xf32>
    %17 = tpu.matmul %14, %16, %cst_15 {dimension_numbers = #tpu.dot_dimension_numbers<[1], [0], [0], [1], [0, 0, 1, 1], [], []>} : vector<144x128xbf16>, vector<128x128xbf16>, vector<144x128xf32> -> vector<144x128xf32>
    %18 = arith.addf %13, %17 : vector<144x128xf32>
    %c18 = arith.constant 18 : index
    %c0_16 = arith.constant 0 : index
    %19 = vector.load %arg9[%c18, %c0_16] : memref<184x128xbf16, #tpu.memory_space<vmem>>, vector<144x128xbf16>
    %c3 = arith.constant 3 : index
    %c0_17 = arith.constant 0 : index
    %c0_18 = arith.constant 0 : index
    %20 = vector.load %arg6[%c3, %c0_17, %c0_18] : memref<9x128x128xbf16, #tpu.memory_space<vmem>>, vector<1x128x128xbf16>
    %21 = vector.shape_cast %20 : vector<1x128x128xbf16> to vector<128x128xbf16>
    %cst_19 = arith.constant dense<0.000000e+00> : vector<144x128xf32>
    %22 = tpu.matmul %19, %21, %cst_19 {dimension_numbers = #tpu.dot_dimension_numbers<[1], [0], [0], [1], [0, 0, 1, 1], [], []>} : vector<144x128xbf16>, vector<128x128xbf16>, vector<144x128xf32> -> vector<144x128xf32>
    %23 = arith.addf %18, %22 : vector<144x128xf32>
    %c19 = arith.constant 19 : index
    %c0_20 = arith.constant 0 : index
    %24 = vector.load %arg9[%c19, %c0_20] : memref<184x128xbf16, #tpu.memory_space<vmem>>, vector<144x128xbf16>
    %c4 = arith.constant 4 : index
    %c0_21 = arith.constant 0 : index
    %c0_22 = arith.constant 0 : index
    %25 = vector.load %arg6[%c4, %c0_21, %c0_22] : memref<9x128x128xbf16, #tpu.memory_space<vmem>>, vector<1x128x128xbf16>
    %26 = vector.shape_cast %25 : vector<1x128x128xbf16> to vector<128x128xbf16>
    %cst_23 = arith.constant dense<0.000000e+00> : vector<144x128xf32>
    %27 = tpu.matmul %24, %26, %cst_23 {dimension_numbers = #tpu.dot_dimension_numbers<[1], [0], [0], [1], [0, 0, 1, 1], [], []>} : vector<144x128xbf16>, vector<128x128xbf16>, vector<144x128xf32> -> vector<144x128xf32>
    %28 = arith.addf %23, %27 : vector<144x128xf32>
    %c20 = arith.constant 20 : index
    %c0_24 = arith.constant 0 : index
    %29 = vector.load %arg9[%c20, %c0_24] : memref<184x128xbf16, #tpu.memory_space<vmem>>, vector<144x128xbf16>
    %c5 = arith.constant 5 : index
    %c0_25 = arith.constant 0 : index
    %c0_26 = arith.constant 0 : index
    %30 = vector.load %arg6[%c5, %c0_25, %c0_26] : memref<9x128x128xbf16, #tpu.memory_space<vmem>>, vector<1x128x128xbf16>
    %31 = vector.shape_cast %30 : vector<1x128x128xbf16> to vector<128x128xbf16>
    %cst_27 = arith.constant dense<0.000000e+00> : vector<144x128xf32>
    %32 = tpu.matmul %29, %31, %cst_27 {dimension_numbers = #tpu.dot_dimension_numbers<[1], [0], [0], [1], [0, 0, 1, 1], [], []>} : vector<144x128xbf16>, vector<128x128xbf16>, vector<144x128xf32> -> vector<144x128xf32>
    %33 = arith.addf %28, %32 : vector<144x128xf32>
    %c36 = arith.constant 36 : index
    %c0_28 = arith.constant 0 : index
    %34 = vector.load %arg9[%c36, %c0_28] : memref<184x128xbf16, #tpu.memory_space<vmem>>, vector<144x128xbf16>
    %c6 = arith.constant 6 : index
    %c0_29 = arith.constant 0 : index
    %c0_30 = arith.constant 0 : index
    %35 = vector.load %arg6[%c6, %c0_29, %c0_30] : memref<9x128x128xbf16, #tpu.memory_space<vmem>>, vector<1x128x128xbf16>
    %36 = vector.shape_cast %35 : vector<1x128x128xbf16> to vector<128x128xbf16>
    %cst_31 = arith.constant dense<0.000000e+00> : vector<144x128xf32>
    %37 = tpu.matmul %34, %36, %cst_31 {dimension_numbers = #tpu.dot_dimension_numbers<[1], [0], [0], [1], [0, 0, 1, 1], [], []>} : vector<144x128xbf16>, vector<128x128xbf16>, vector<144x128xf32> -> vector<144x128xf32>
    %38 = arith.addf %33, %37 : vector<144x128xf32>
    %c37 = arith.constant 37 : index
    %c0_32 = arith.constant 0 : index
    %39 = vector.load %arg9[%c37, %c0_32] : memref<184x128xbf16, #tpu.memory_space<vmem>>, vector<144x128xbf16>
    %c7 = arith.constant 7 : index
    %c0_33 = arith.constant 0 : index
    %c0_34 = arith.constant 0 : index
    %40 = vector.load %arg6[%c7, %c0_33, %c0_34] : memref<9x128x128xbf16, #tpu.memory_space<vmem>>, vector<1x128x128xbf16>
    %41 = vector.shape_cast %40 : vector<1x128x128xbf16> to vector<128x128xbf16>
    %cst_35 = arith.constant dense<0.000000e+00> : vector<144x128xf32>
    %42 = tpu.matmul %39, %41, %cst_35 {dimension_numbers = #tpu.dot_dimension_numbers<[1], [0], [0], [1], [0, 0, 1, 1], [], []>} : vector<144x128xbf16>, vector<128x128xbf16>, vector<144x128xf32> -> vector<144x128xf32>
    %43 = arith.addf %38, %42 : vector<144x128xf32>
    %c38 = arith.constant 38 : index
    %c0_36 = arith.constant 0 : index
    %44 = vector.load %arg9[%c38, %c0_36] : memref<184x128xbf16, #tpu.memory_space<vmem>>, vector<144x128xbf16>
    %c8 = arith.constant 8 : index
    %c0_37 = arith.constant 0 : index
    %c0_38 = arith.constant 0 : index
    %45 = vector.load %arg6[%c8, %c0_37, %c0_38] : memref<9x128x128xbf16, #tpu.memory_space<vmem>>, vector<1x128x128xbf16>
    %46 = vector.shape_cast %45 : vector<1x128x128xbf16> to vector<128x128xbf16>
    %cst_39 = arith.constant dense<0.000000e+00> : vector<144x128xf32>
    %47 = tpu.matmul %44, %46, %cst_39 {dimension_numbers = #tpu.dot_dimension_numbers<[1], [0], [0], [1], [0, 0, 1, 1], [], []>} : vector<144x128xbf16>, vector<128x128xbf16>, vector<144x128xf32> -> vector<144x128xf32>
    %48 = arith.addf %43, %47 : vector<144x128xf32>
    %49 = arith.truncf %48 : vector<144x128xf32> to vector<144x128xbf16>
    %c0_40 = arith.constant 0 : index
    %c0_41 = arith.constant 0 : index
    %c0_42 = arith.constant 0 : index
    %c0_43 = arith.constant 0 : index
    %50 = vector.load %arg7[%c0_40, %c0_41, %c0_42, %c0_43] : memref<1x1x144x128xbf16, #tpu.memory_space<vmem>>, vector<1x1x144x128xbf16>
    %51 = vector.shape_cast %50 : vector<1x1x144x128xbf16> to vector<144x128xbf16>
    %52 = vector.shape_cast %49 : vector<144x128xbf16> to vector<1x1x144x128xbf16>
    tpu.vector_store %arg7[%c0_40, %c0_41, %c0_42, %c0_43], %52 {strides = array<i32>} : memref<1x1x144x128xbf16, #tpu.memory_space<vmem>>, vector<1x1x144x128xbf16>,
    %53 = tpu.iota {dimensions = array<i32: 0>} : vector<144x1xi32>
    %54 = arith.sitofp %53 : vector<144x1xi32> to vector<144x1xf32>
    %cst_44 = arith.constant 1.800000e+01 : f32
    %55 = vector.broadcast %cst_44 : f32 to vector<144x1xf32>
    %56 = arith.divf %54, %55 : vector<144x1xf32>
    %57 = math.floor %56 : vector<144x1xf32>
    %cst_45 = arith.constant 1.800000e+01 : f32
    %58 = vector.broadcast %cst_45 : f32 to vector<144x1xf32>
    %59 = arith.mulf %57, %58 : vector<144x1xf32>
    %60 = arith.subf %54, %59 : vector<144x1xf32>
    %cst_46 = arith.constant 1.600000e+01 : f32
    %61 = vector.broadcast %cst_46 : f32 to vector<144x1xf32>
    %62 = arith.cmpf olt, %60, %61 : vector<144x1xf32>
    %63 = arith.extui %62 : vector<144x1xi1> to vector<144x1xi32>
    %64 = arith.sitofp %63 : vector<144x1xi32> to vector<144x1xf32>
    %65 = arith.extf %49 : vector<144x128xbf16> to vector<144x128xf32>
    %66 = vector.broadcast %64 : vector<144x1xf32> to vector<144x128xf32>
    %67 = arith.mulf %65, %66 : vector<144x128xf32>
    %cst_47 = arith.constant dense<0.000000e+00> : vector<128xf32>
    %68 = vector.multi_reduction <add>, %67, %cst_47 [0] : vector<144x128xf32> to vector<128xf32>
    %69 = vector.shape_cast %68 : vector<128xf32> to vector<1x128xf32>
    %70 = arith.mulf %67, %67 : vector<144x128xf32>
    %cst_48 = arith.constant dense<0.000000e+00> : vector<128xf32>
    %71 = vector.multi_reduction <add>, %70, %cst_48 [0] : vector<144x128xf32> to vector<128xf32>
    %72 = vector.shape_cast %71 : vector<128xf32> to vector<1x128xf32>
    %73 = tpu.concatenate %69, %72 in 0 : vector<1x128xf32>, vector<1x128xf32> -> vector<2x128xf32>
    %c0_49 = arith.constant 0 : index
    %c0_50 = arith.constant 0 : index
    %c0_51 = arith.constant 0 : index
    %c0_52 = arith.constant 0 : index
    %74 = vector.load %arg8[%c0_49, %c0_50, %c0_51, %c0_52] : memref<1x1x2x128xf32, #tpu.memory_space<vmem>>, vector<1x1x2x128xf32>
    %75 = vector.shape_cast %74 : vector<1x1x2x128xf32> to vector<2x128xf32>
    %76 = vector.shape_cast %73 : vector<2x128xf32> to vector<1x1x2x128xf32>
    tpu.vector_store %arg8[%c0_49, %c0_50, %c0_51, %c0_52], %76 {strides = array<i32>} : memref<1x1x2x128xf32, #tpu.memory_space<vmem>>, vector<1x1x2x128xf32>,
    return
  }
  func.func @transform_0(%arg0: i32, %arg1: i32, %arg2: i32) -> (i32, i32, i32, i32) {
    %c0_i32 = arith.constant 0 : i32
    %c0_i32_0 = arith.constant 0 : i32
    %c0_i32_1 = arith.constant 0 : i32
    return %arg0, %arg1, %c0_i32, %c0_i32_0 : i32, i32, i32, i32
  }
  func.func @transform_1(%arg0: i32, %arg1: i32, %arg2: i32) -> (i32, i32) {
    %c0_i32 = arith.constant 0 : i32
    %c0_i32_0 = arith.constant 0 : i32
    %c0_i32_1 = arith.constant 0 : i32
    return %c0_i32, %c0_i32_0 : i32, i32
  }
  func.func @transform_2(%arg0: i32, %arg1: i32, %arg2: i32) -> (i32, i32) {
    %c0_i32 = arith.constant 0 : i32
    %c0_i32_0 = arith.constant 0 : i32
    %c0_i32_1 = arith.constant 0 : i32
    return %c0_i32, %c0_i32_0 : i32, i32
  }
  func.func @transform_3(%arg0: i32, %arg1: i32, %arg2: i32) -> (i32, i32, i32) {
    %c0_i32 = arith.constant 0 : i32
    %c0_i32_0 = arith.constant 0 : i32
    %c0_i32_1 = arith.constant 0 : i32
    return %c0_i32, %c0_i32_0, %arg2 : i32, i32, i32
  }
  func.func @transform_4(%arg0: i32, %arg1: i32, %arg2: i32) -> (i32, i32, i32, i32) {
    %c0_i32 = arith.constant 0 : i32
    %c0_i32_0 = arith.constant 0 : i32
    return %arg0, %arg1, %c0_i32, %arg2 : i32, i32, i32, i32
  }
  func.func @transform_5(%arg0: i32, %arg1: i32, %arg2: i32) -> (i32, i32, i32, i32) {
    %c0_i32 = arith.constant 0 : i32
    %c0_i32_0 = arith.constant 0 : i32
    return %arg0, %arg1, %c0_i32, %arg2 : i32, i32, i32, i32
  }
}

</mosaic_0001>

<llo_original>
// kernel: double_conv.5
$region0: #{double_conv.5}
  #allocation0 [shape = 'u32[]', space=smem, size = 0x4, offset = 0x4, fixed_abs, tag = 'smem constant byte address 0x4 - core index']
  #allocation1 [shape = 'u32[144,128]{1,0:T(1,128)}', space=vmem, size = 0x12000, scoped, tag = 'internal scratch']
  %s0 = inlined_call_operand.vmem [shape: bf16[2,2,144,128], index: 0, kind: input, shape index: {}]
  %s1 = inlined_call_operand.vmem [shape: f32[1,128], index: 1, kind: input, shape index: {}]
  %s2 = inlined_call_operand.vmem [shape: f32[1,128], index: 2, kind: input, shape index: {}]
  %s3 = inlined_call_operand.vmem [shape: f32[2,2,144,128], index: 3, kind: output, shape index: {}]
  %s4 = sld [smem:[#allocation0]]
  $region45: #{double_conv.5} parent=0
    _
  %s6 = ssub.s32 1, %s4
  %s7 = scalar_select 0, %s6, %s4
  loop: start=0, step=1, limit=6
  $region2: #{double_conv.5} parent=0 // loop_pre_header
    _
  $region3: #{double_conv.5} parent=0 // loop_header
    %s9 = sphi 0, %s13
    %p10 = scmp.ge.s32.totalorder %s9, 6
    %s16 = sphi 0, %s28
    %s17 = sphi 0, %s24
    %s18 = sphi 0, %s16
    %s19 = sphi 0, %s17
    %s20 = sphi 0, %s18
    %s21 = sphi 0, %s19
    %s33 = sphi 0, %s35
    %s36 = sphi 0, %s33
    %s37 = sphi 0, %s36
    %s53 = sphi 0, %s37
    %s57 = sphi 0, %s57
    %s59 = sphi 0, %s57
    %s60 = sphi 0, %s59
    %s74 = sphi 0, %s60
    %s78 = sphi 0, %s78
    %s80 = sphi 0, %s78
    %s81 = sphi 0, %s80
    %s95 = sphi 0, %s81
    %s103 = sphi 0, %s105
    %s106 = sphi 0, %s103
    %s107 = sphi 0, %s106
    %s123 = sphi 0, %s107
  $region4: #{double_conv.5} parent=0 // loop_header_branch
    %12 = sbr.rel (%p10) target = $region8
  $region5: #{double_conv.5} parent=0 // loop_body
    %s14 = ssub.s32 %s9, 1
    %s15 = ssub.s32 %s9, 2
    %s22 = sadd.s32 1, %s17
    %p23 = scmp.ge.s32.totalorder %s22, 2
    %s24 = scalar_select %p23, 0, %s22
    %s25 = sadd.s32 1, %s16
    %s26 = scalar_select %p23, %s25, %s16
    %p27 = scmp.ge.s32.totalorder %s26, 2
    %s28 = scalar_select %p27, 0, %s26
    %s29 = ssub.s32 %s16, %s28
    %s30 = ssub.s32 %s17, %s24
    %s31 = sor.u32 %s29, %s30
    %p32 = scmp.eq.s32.totalorder %s31, 0
    %s34 = sadd.s32 %s33, 1
    %s35 = scalar_select %p32, %s33, %s34
    %p38 = pneg %p32
    %p39 = scmp.eq.s32.totalorder %s9, 3
    %p40 = por %p38, %p39
    %p41 = scmp.ne.s32.totalorder %s33, %s36
    %p42 = scmp.eq.s32.totalorder %s9, 0
    %p43 = por %p41, %p42
    %p44 = scmp.ne.s32.totalorder %s33, %s36
    %p45 = scmp.eq.s32.totalorder %s14, 3
    %p46 = por %p44, %p45
    %p47 = scmp.ne.s32.totalorder %s36, %s37
    %p48 = scmp.eq.s32.totalorder %s14, 0
    %p49 = por %p47, %p48
    %p50 = scmp.ne.s32.totalorder %s36, %s37
    %p51 = scmp.eq.s32.totalorder %s15, 3
    %p52 = por %p50, %p51
    %p54 = scmp.ne.s32.totalorder %s37, %s53
    %p55 = scmp.eq.s32.totalorder %s15, 0
    %p56 = por %p54, %p55
    %s58 = sadd.s32 %s57, 1
    %p61 = scmp.eq.s32.totalorder %s9, 3
    %p62 = scmp.ne.s32.totalorder %s57, %s59
    %p63 = scmp.eq.s32.totalorder %s9, 0
    %p64 = por %p62, %p63
    %p65 = scmp.ne.s32.totalorder %s57, %s59
    %p66 = scmp.eq.s32.totalorder %s14, 3
    %p67 = por %p65, %p66
    %p68 = scmp.ne.s32.totalorder %s59, %s60
    %p69 = scmp.eq.s32.totalorder %s14, 0
    %p70 = por %p68, %p69
    %p71 = scmp.ne.s32.totalorder %s59, %s60
    %p72 = scmp.eq.s32.totalorder %s15, 3
    %p73 = por %p71, %p72
    %p75 = scmp.ne.s32.totalorder %s60, %s74
    %p76 = scmp.eq.s32.totalorder %s15, 0
    %p77 = por %p75, %p76
    %s79 = sadd.s32 %s78, 1
    %p82 = scmp.eq.s32.totalorder %s9, 3
    %p83 = scmp.ne.s32.totalorder %s78, %s80
    %p84 = scmp.eq.s32.totalorder %s9, 0
    %p85 = por %p83, %p84
    %p86 = scmp.ne.s32.totalorder %s78, %s80
    %p87 = scmp.eq.s32.totalorder %s14, 3
    %p88 = por %p86, %p87
    %p89 = scmp.ne.s32.totalorder %s80, %s81
    %p90 = scmp.eq.s32.totalorder %s14, 0
    %p91 = por %p89, %p90
    %p92 = scmp.ne.s32.totalorder %s80, %s81
    %p93 = scmp.eq.s32.totalorder %s15, 3
    %p94 = por %p92, %p93
    %p96 = scmp.ne.s32.totalorder %s81, %s95
    %p97 = scmp.eq.s32.totalorder %s15, 0
    %p98 = por %p96, %p97
    %s99 = ssub.s32 %s16, %s28
    %s100 = ssub.s32 %s17, %s24
    %s101 = sor.u32 %s99, %s100
    %p102 = scmp.eq.s32.totalorder %s101, 0
    %s104 = sadd.s32 %s103, 1
    %s105 = scalar_select %p102, %s103, %s104
    %p108 = pneg %p102
    %p109 = scmp.eq.s32.totalorder %s9, 3
    %p110 = por %p108, %p109
    %p111 = scmp.ne.s32.totalorder %s103, %s106
    %p112 = scmp.eq.s32.totalorder %s9, 0
    %p113 = por %p111, %p112
    %p114 = scmp.ne.s32.totalorder %s103, %s106
    %p115 = scmp.eq.s32.totalorder %s14, 3
    %p116 = por %p114, %p115
    %p117 = scmp.ne.s32.totalorder %s106, %s107
    %p118 = scmp.eq.s32.totalorder %s14, 0
    %p119 = por %p117, %p118
    %p120 = scmp.ne.s32.totalorder %s106, %s107
    %p121 = scmp.eq.s32.totalorder %s15, 3
    %p122 = por %p120, %p121
    %p124 = scmp.ne.s32.totalorder %s107, %s123
    %p125 = scmp.eq.s32.totalorder %s15, 0
    %p126 = por %p124, %p125
    %p127 = scmp.le.s32.totalorder 1, %s9
    %p128 = scmp.lt.s32.totalorder %s9, 5
    %p129 = pnand %p127, %p128
    %p130 = pneg %p129
    // Predicated region
    $region9: #{double_conv.5} parent=5 // pred_check
      _
    $region10: #{double_conv.5} parent=5 // pred_check_branch
      %132 = sbr.rel (%p129) target = $region12
    $region11: #{double_conv.5} parent=5 // pred_region
      %s133 = ssub.s32 %s9, 1
      // Predicated region
      $region13: #{double_conv.5} parent=11 // pred_check
        %p134 = pneg %p70
      $region14: #{double_conv.5} parent=11 // pred_check_branch
        %136 = sbr.rel (%p134) target = $region16
      $region15: #{double_conv.5} parent=11 // pred_region
        _
      $region16: #{double_conv.5} parent=11 // pred_fallthru
        _
      // Predicated region
      $region17: #{double_conv.5} parent=11 // pred_check
        %p137 = pneg %p91
      $region18: #{double_conv.5} parent=11 // pred_check_branch
        %139 = sbr.rel (%p137) target = $region20
      $region19: #{double_conv.5} parent=11 // pred_region
        _
      $region20: #{double_conv.5} parent=11 // pred_fallthru
        _
    $region12: #{double_conv.5} parent=5 // pred_fallthru
      _
    %p140 = scmp.lt.s32.totalorder %s9, 4
    // Predicated region
    $region21: #{double_conv.5} parent=5 // pred_check
      %p141 = pneg %p140
    $region22: #{double_conv.5} parent=5 // pred_check_branch
      %143 = sbr.rel (%p141) target = $region24
    $region23: #{double_conv.5} parent=5 // pred_region
      // Predicated region
      $region25: #{double_conv.5} parent=23 // pred_check
        %p144 = pneg %p43
      $region26: #{double_conv.5} parent=23 // pred_check_branch
        %146 = sbr.rel (%p144) target = $region28
      $region27: #{double_conv.5} parent=23 // pred_region
        %p147 = scmp.lt.s32.totalorder %s16, 1
        %s148 = scalar_select %p147, %s16, 1
        %p149 = scmp.lt.s32.totalorder %s17, 1
        %s150 = scalar_select %p149, %s17, 1
        %s151 = smul.addr %s150, 18
        %s152 = smul.addr %s148, 36
        %s153 = sadd.s32 %s151, %s152
        %s154 = smul.addr %s153, 4
        %s155 = scalar_lea.vmem %s0, %s154
      $region28: #{double_conv.5} parent=23 // pred_fallthru
        _
    $region24: #{double_conv.5} parent=5 // pred_fallthru
      _
    %p156 = scmp.le.s32.totalorder 1, %s9
    %p157 = scmp.lt.s32.totalorder %s9, 5
    %p158 = pnand %p156, %p157
    %p159 = pneg %p158
    // Predicated region
    $region29: #{double_conv.5} parent=5 // pred_check
      _
    $region30: #{double_conv.5} parent=5 // pred_check_branch
      %161 = sbr.rel (%p158) target = $region32
    $region31: #{double_conv.5} parent=5 // pred_region
      %s162 = ssub.s32 %s9, 1
      %p163 = scmp.lt.s32.totalorder %s18, 1
      %s164 = scalar_select %p163, %s18, 1
      %p165 = scmp.lt.s32.totalorder %s19, 1
      %s166 = scalar_select %p165, %s19, 1
      %s167 = smul.addr %s166, 18
      %s168 = smul.addr %s164, 36
      %s169 = sadd.s32 %s167, %s168
      %s170 = smul.addr %s169, 4
      %s171 = scalar_lea.vmem %s0, %s170
      %p172 = pneg %p49
      %p173 = pneg %p46
      %p174 = pneg %p70
      %p175 = pneg %p67
      %p176 = pneg %p91
      %p177 = pneg %p88
      %p178 = pneg %p119
      %p179 = pneg %p116
      %p180 = scmp.lt.s32.totalorder %s18, 1
      %s181 = scalar_select %p180, %s18, 1
      %p182 = scmp.lt.s32.totalorder %s19, 1
      %s183 = scalar_select %p182, %s19, 1
      %s184 = smul.addr %s183, 18
      %s185 = smul.addr %s181, 36
      %s186 = sadd.s32 %s184, %s185
      %s187 = smul.addr %s186, 8
      %s188 = scalar_lea.vmem %s3, %s187
      %p189 = scmp.lt.s32.totalorder %s18, 1
      %s190 = scalar_select %p189, %s18, 1
      %p191 = scmp.lt.s32.totalorder %s19, 1
      %s192 = scalar_select %p191, %s19, 1
      %s193 = smul.addr %s192, 18
      %s194 = smul.addr %s190, 36
      %s195 = sadd.s32 %s193, %s194
      %s196 = smul.addr %s195, 4
      %s197 = scalar_lea.vmem %s0, %s196
      %p198 = scmp.lt.s32.totalorder %s18, 1
      %s199 = scalar_select %p198, %s18, 1
      %p200 = scmp.lt.s32.totalorder %s19, 1
      %s201 = scalar_select %p200, %s19, 1
      %s202 = smul.addr %s201, 18
      %s203 = smul.addr %s199, 36
      %s204 = sadd.s32 %s202, %s203
      %s205 = smul.addr %s204, 8
      %s206 = scalar_lea.vmem %s3, %s205
      %v207 = vld [vmem:[%s197] sm:$0xf]
      %v208 = vld [vmem:[%s197 + $0x4] sm:$0xf]
      %v209 = vld [vmem:[%s197 + $0x8] sm:$0xf]
      %v210 = vld [vmem:[%s197 + $0xc] sm:$0xf]
      %v211 = vld [vmem:[%s197 + $0x10] sm:$0xf]
      %v212 = vld [vmem:[%s197 + $0x14] sm:$0xf]
      %v213 = vld [vmem:[%s197 + $0x18] sm:$0xf]
      %v214 = vld [vmem:[%s197 + $0x1c] sm:$0xf]
      %v215 = vld [vmem:[%s197 + $0x20] sm:$0xf]
      %v216 = vld [vmem:[%s197 + $0x24] sm:$0xf]
      %v217 = vld [vmem:[%s197 + $0x28] sm:$0xf]
      %v218 = vld [vmem:[%s197 + $0x2c] sm:$0xf]
      %v219 = vld [vmem:[%s197 + $0x30] sm:$0xf]
      %v220 = vld [vmem:[%s197 + $0x34] sm:$0xf]
      %v221 = vld [vmem:[%s197 + $0x38] sm:$0xf]
      %v222 = vld [vmem:[%s197 + $0x3c] sm:$0xf]
      %v223 = vld [vmem:[%s197 + $0x40] sm:$0xf]
      %v224 = vld [vmem:[%s197 + $0x44] sm:$0xf]
      %v225 = vunpack.c.l.bf16 %v207
      %v226 = vunpack.c.l.bf16 %v208
      %v227 = vunpack.c.l.bf16 %v209
      %v228 = vunpack.c.l.bf16 %v210
      %v229 = vunpack.c.l.bf16 %v211
      %v230 = vunpack.c.l.bf16 %v212
      %v231 = vunpack.c.l.bf16 %v213
      %v232 = vunpack.c.l.bf16 %v214
      %v233 = vunpack.c.l.bf16 %v215
      %v234 = vunpack.c.l.bf16 %v216
      %v235 = vunpack.c.l.bf16 %v217
      %v236 = vunpack.c.l.bf16 %v218
      %v237 = vunpack.c.l.bf16 %v219
      %v238 = vunpack.c.l.bf16 %v220
      %v239 = vunpack.c.l.bf16 %v221
      %v240 = vunpack.c.l.bf16 %v222
      %v241 = vunpack.c.l.bf16 %v223
      %v242 = vunpack.c.l.bf16 %v224
      %v243 = vld [vmem:[%s1] sm:$0x1]
      %v245 = vlaneseq
      %v246 = vshrl.u32 %v245, 7
      %v247 = vsub.s32 0, %v246
      %v248 = vrot.slane %v243, %v247
      %v250 = vmul.f32 %v225, %v248
      %v251 = vmul.f32 %v226, %v248
      %v252 = vmul.f32 %v227, %v248
      %v253 = vmul.f32 %v228, %v248
      %v254 = vmul.f32 %v229, %v248
      %v255 = vmul.f32 %v230, %v248
      %v256 = vmul.f32 %v231, %v248
      %v257 = vmul.f32 %v232, %v248
      %v258 = vmul.f32 %v233, %v248
      %v259 = vmul.f32 %v234, %v248
      %v260 = vmul.f32 %v235, %v248
      %v261 = vmul.f32 %v236, %v248
      %v262 = vmul.f32 %v237, %v248
      %v263 = vmul.f32 %v238, %v248
      %v264 = vmul.f32 %v239, %v248
      %v265 = vmul.f32 %v240, %v248
      %v266 = vmul.f32 %v241, %v248
      %v267 = vmul.f32 %v242, %v248
      %v268 = vld [vmem:[%s2] sm:$0x1]
      %v270 = vlaneseq
      %v271 = vshrl.u32 %v270, 7
      %v272 = vsub.s32 0, %v271
      %v273 = vrot.slane %v268, %v272
      %v275 = vadd.f32 %v250, %v273
      %v276 = vadd.f32 %v251, %v273
      %v277 = vadd.f32 %v252, %v273
      %v278 = vadd.f32 %v253, %v273
      %v279 = vadd.f32 %v254, %v273
      %v280 = vadd.f32 %v255, %v273
      %v281 = vadd.f32 %v256, %v273
      %v282 = vadd.f32 %v257, %v273
      %v283 = vadd.f32 %v258, %v273
      %v284 = vadd.f32 %v259, %v273
      %v285 = vadd.f32 %v260, %v273
      %v286 = vadd.f32 %v261, %v273
      %v287 = vadd.f32 %v262, %v273
      %v288 = vadd.f32 %v263, %v273
      %v289 = vadd.f32 %v264, %v273
      %v290 = vadd.f32 %v265, %v273
      %v291 = vadd.f32 %v266, %v273
      %v292 = vadd.f32 %v267, %v273
      %vm293 = vcmp.ge.f32.partialorder %v275, 0.0
      %vm294 = vcmp.ge.f32.partialorder %v276, 0.0
      %vm295 = vcmp.ge.f32.partialorder %v277, 0.0
      %vm296 = vcmp.ge.f32.partialorder %v278, 0.0
      %vm297 = vcmp.ge.f32.partialorder %v279, 0.0
      %vm298 = vcmp.ge.f32.partialorder %v280, 0.0
      %vm299 = vcmp.ge.f32.partialorder %v281, 0.0
      %vm300 = vcmp.ge.f32.partialorder %v282, 0.0
      %vm301 = vcmp.ge.f32.partialorder %v283, 0.0
      %vm302 = vcmp.ge.f32.partialorder %v284, 0.0
      %vm303 = vcmp.ge.f32.partialorder %v285, 0.0
      %vm304 = vcmp.ge.f32.partialorder %v286, 0.0
      %vm305 = vcmp.ge.f32.partialorder %v287, 0.0
      %vm306 = vcmp.ge.f32.partialorder %v288, 0.0
      %vm307 = vcmp.ge.f32.partialorder %v289, 0.0
      %vm308 = vcmp.ge.f32.partialorder %v290, 0.0
      %vm309 = vcmp.ge.f32.partialorder %v291, 0.0
      %vm310 = vcmp.ge.f32.partialorder %v292, 0.0
      %v311 = vmul.f32 %v275, 0.01
      %v312 = vmul.f32 %v276, 0.01
      %v313 = vmul.f32 %v277, 0.01
      %v314 = vmul.f32 %v278, 0.01
      %v315 = vmul.f32 %v279, 0.01
      %v316 = vmul.f32 %v280, 0.01
      %v317 = vmul.f32 %v281, 0.01
      %v318 = vmul.f32 %v282, 0.01
      %v319 = vmul.f32 %v283, 0.01
      %v320 = vmul.f32 %v284, 0.01
      %v321 = vmul.f32 %v285, 0.01
      %v322 = vmul.f32 %v286, 0.01
      %v323 = vmul.f32 %v287, 0.01
      %v324 = vmul.f32 %v288, 0.01
      %v325 = vmul.f32 %v289, 0.01
      %v326 = vmul.f32 %v290, 0.01
      %v327 = vmul.f32 %v291, 0.01
      %v328 = vmul.f32 %v292, 0.01
      %v329 = vsel %vm293, %v275, %v311
      %v330 = vsel %vm294, %v276, %v312
      %v331 = vsel %vm295, %v277, %v313
      %v332 = vsel %vm296, %v278, %v314
      %v333 = vsel %vm297, %v279, %v315
      %v334 = vsel %vm298, %v280, %v316
      %v335 = vsel %vm299, %v281, %v317
      %v336 = vsel %vm300, %v282, %v318
      %v337 = vsel %vm301, %v283, %v319
      %v338 = vsel %vm302, %v284, %v320
      %v339 = vsel %vm303, %v285, %v321
      %v340 = vsel %vm304, %v286, %v322
      %v341 = vsel %vm305, %v287, %v323
      %v342 = vsel %vm306, %v288, %v324
      %v343 = vsel %vm307, %v289, %v325
      %v344 = vsel %vm308, %v290, %v326
      %v345 = vsel %vm309, %v291, %v327
      %v346 = vsel %vm310, %v292, %v328
      %347 = vst [vmem:[%s206] sm:$0xff] %v329
      %348 = vst [vmem:[%s206 + $0x8] sm:$0xff] %v330
      %349 = vst [vmem:[%s206 + $0x10] sm:$0xff] %v331
      %350 = vst [vmem:[%s206 + $0x18] sm:$0xff] %v332
      %351 = vst [vmem:[%s206 + $0x20] sm:$0xff] %v333
      %352 = vst [vmem:[%s206 + $0x28] sm:$0xff] %v334
      %353 = vst [vmem:[%s206 + $0x30] sm:$0xff] %v335
      %354 = vst [vmem:[%s206 + $0x38] sm:$0xff] %v336
      %355 = vst [vmem:[%s206 + $0x40] sm:$0xff] %v337
      %356 = vst [vmem:[%s206 + $0x48] sm:$0xff] %v338
      %357 = vst [vmem:[%s206 + $0x50] sm:$0xff] %v339
      %358 = vst [vmem:[%s206 + $0x58] sm:$0xff] %v340
      %359 = vst [vmem:[%s206 + $0x60] sm:$0xff] %v341
      %360 = vst [vmem:[%s206 + $0x68] sm:$0xff] %v342
      %361 = vst [vmem:[%s206 + $0x70] sm:$0xff] %v343
      %362 = vst [vmem:[%s206 + $0x78] sm:$0xff] %v344
      %363 = vst [vmem:[%s206 + $0x80] sm:$0xff] %v345
      %364 = vst [vmem:[%s206 + $0x88] sm:$0xff] %v346
      %p365 = scmp.lt.s32.totalorder %s18, 1
      %s366 = scalar_select %p365, %s18, 1
      %p367 = scmp.lt.s32.totalorder %s19, 1
      %s368 = scalar_select %p367, %s19, 1
      %s369 = smul.addr %s368, 18
      %s370 = smul.addr %s366, 36
      %s371 = sadd.s32 %s369, %s370
      %s372 = smul.addr %s371, 8
      %s373 = scalar_lea.vmem %s3, %s372
      // Predicated region
      $region33: #{double_conv.5} parent=31 // pred_check
        %p374 = pneg %p116
      $region34: #{double_conv.5} parent=31 // pred_check_branch
        %376 = sbr.rel (%p374) target = $region36
      $region35: #{double_conv.5} parent=31 // pred_region
        _
      $region36: #{double_conv.5} parent=31 // pred_fallthru
        _
    $region32: #{double_conv.5} parent=5 // pred_fallthru
      _
    %p377 = scmp.le.s32.totalorder 2, %s9
    // Predicated region
    $region37: #{double_conv.5} parent=5 // pred_check
      %p378 = pneg %p377
    $region38: #{double_conv.5} parent=5 // pred_check_branch
      %380 = sbr.rel (%p378) target = $region40
    $region39: #{double_conv.5} parent=5 // pred_region
      %s381 = ssub.s32 %s9, 2
      // Predicated region
      $region41: #{double_conv.5} parent=39 // pred_check
        %p382 = pneg %p122
      $region42: #{double_conv.5} parent=39 // pred_check_branch
        %384 = sbr.rel (%p382) target = $region44
      $region43: #{double_conv.5} parent=39 // pred_region
        %p385 = scmp.lt.s32.totalorder %s20, 1
        %s386 = scalar_select %p385, %s20, 1
        %p387 = scmp.lt.s32.totalorder %s21, 1
        %s388 = scalar_select %p387, %s21, 1
        %s389 = smul.addr %s388, 18
        %s390 = smul.addr %s386, 36
        %s391 = sadd.s32 %s389, %s390
        %s392 = smul.addr %s391, 8
        %s393 = scalar_lea.vmem %s3, %s392
      $region44: #{double_conv.5} parent=39 // pred_fallthru
        _
    $region40: #{double_conv.5} parent=5 // pred_fallthru
      _
  $region6: #{double_conv.5} parent=0 // loop_footer
    %s13 = sadd.s32 1, %s9
  $region7: #{double_conv.5} parent=0 // loop_footer_branch
    %8 = sbr.rel target = $region3
  $region8: #{double_conv.5} parent=0 // loop_exit
    _

// kernel: double_conv.3
$region0: #{double_conv.3}
  #allocation0 [shape = 'u32[]', space=smem, size = 0x4, offset = 0x4, fixed_abs, tag = 'smem constant byte address 0x4 - core index']
  #allocation1 [shape = 'u32[144,128]{1,0:T(1,128)}', space=vmem, size = 0x12000, scoped, tag = 'internal scratch']
  %s0 = inlined_call_operand.vmem [shape: bf16[2,2,184,36], index: 0, kind: input, shape index: {}]
  %s1 = inlined_call_operand.vmem [shape: bf16[36,128], index: 1, kind: input, shape index: {}]
  %s2 = inlined_call_operand.vmem [shape: bf16[2,2,184,128], index: 2, kind: output, shape index: {0}]
  %s3 = inlined_call_operand.vmem [shape: f32[2,2,2,128], index: 3, kind: output, shape index: {1}]
  %4 = xla_tuple %s2, %s3
  %s5 = sld [smem:[#allocation0]]
  $region49: #{double_conv.3} parent=0
    _
  %s7 = ssub.s32 1, %s5
  %s8 = scalar_select 0, %s7, %s5
  loop: start=0, step=1, limit=6
  $region2: #{double_conv.3} parent=0 // loop_pre_header
    _
  $region3: #{double_conv.3} parent=0 // loop_header
    %s10 = sphi 0, %s14
    %p11 = scmp.ge.s32.totalorder %s10, 6
    %s17 = sphi 0, %s29
    %s18 = sphi 0, %s25
    %s19 = sphi 0, %s17
    %s20 = sphi 0, %s18
    %s21 = sphi 0, %s19
    %s22 = sphi 0, %s20
    %s34 = sphi 0, %s36
    %s37 = sphi 0, %s34
    %s38 = sphi 0, %s37
    %s54 = sphi 0, %s38
    %s58 = sphi 0, %s58
    %s60 = sphi 0, %s58
    %s61 = sphi 0, %s60
    %s75 = sphi 0, %s61
    %s83 = sphi 0, %s85
    %s86 = sphi 0, %s83
    %s87 = sphi 0, %s86
    %s103 = sphi 0, %s87
    %s111 = sphi 0, %s113
    %s114 = sphi 0, %s111
    %s115 = sphi 0, %s114
    %s131 = sphi 0, %s115
  $region4: #{double_conv.3} parent=0 // loop_header_branch
    %13 = sbr.rel (%p11) target = $region8
  $region5: #{double_conv.3} parent=0 // loop_body
    %s15 = ssub.s32 %s10, 1
    %s16 = ssub.s32 %s10, 2
    %s23 = sadd.s32 1, %s18
    %p24 = scmp.ge.s32.totalorder %s23, 2
    %s25 = scalar_select %p24, 0, %s23
    %s26 = sadd.s32 1, %s17
    %s27 = scalar_select %p24, %s26, %s17
    %p28 = scmp.ge.s32.totalorder %s27, 2
    %s29 = scalar_select %p28, 0, %s27
    %s30 = ssub.s32 %s17, %s29
    %s31 = ssub.s32 %s18, %s25
    %s32 = sor.u32 %s30, %s31
    %p33 = scmp.eq.s32.totalorder %s32, 0
    %s35 = sadd.s32 %s34, 1
    %s36 = scalar_select %p33, %s34, %s35
    %p39 = pneg %p33
    %p40 = scmp.eq.s32.totalorder %s10, 3
    %p41 = por %p39, %p40
    %p42 = scmp.ne.s32.totalorder %s34, %s37
    %p43 = scmp.eq.s32.totalorder %s10, 0
    %p44 = por %p42, %p43
    %p45 = scmp.ne.s32.totalorder %s34, %s37
    %p46 = scmp.eq.s32.totalorder %s15, 3
    %p47 = por %p45, %p46
    %p48 = scmp.ne.s32.totalorder %s37, %s38
    %p49 = scmp.eq.s32.totalorder %s15, 0
    %p50 = por %p48, %p49
    %p51 = scmp.ne.s32.totalorder %s37, %s38
    %p52 = scmp.eq.s32.totalorder %s16, 3
    %p53 = por %p51, %p52
    %p55 = scmp.ne.s32.totalorder %s38, %s54
    %p56 = scmp.eq.s32.totalorder %s16, 0
    %p57 = por %p55, %p56
    %s59 = sadd.s32 %s58, 1
    %p62 = scmp.eq.s32.totalorder %s10, 3
    %p63 = scmp.ne.s32.totalorder %s58, %s60
    %p64 = scmp.eq.s32.totalorder %s10, 0
    %p65 = por %p63, %p64
    %p66 = scmp.ne.s32.totalorder %s58, %s60
    %p67 = scmp.eq.s32.totalorder %s15, 3
    %p68 = por %p66, %p67
    %p69 = scmp.ne.s32.totalorder %s60, %s61
    %p70 = scmp.eq.s32.totalorder %s15, 0
    %p71 = por %p69, %p70
    %p72 = scmp.ne.s32.totalorder %s60, %s61
    %p73 = scmp.eq.s32.totalorder %s16, 3
    %p74 = por %p72, %p73
    %p76 = scmp.ne.s32.totalorder %s61, %s75
    %p77 = scmp.eq.s32.totalorder %s16, 0
    %p78 = por %p76, %p77
    %s79 = ssub.s32 %s17, %s29
    %s80 = ssub.s32 %s18, %s25
    %s81 = sor.u32 %s79, %s80
    %p82 = scmp.eq.s32.totalorder %s81, 0
    %s84 = sadd.s32 %s83, 1
    %s85 = scalar_select %p82, %s83, %s84
    %p88 = pneg %p82
    %p89 = scmp.eq.s32.totalorder %s10, 3
    %p90 = por %p88, %p89
    %p91 = scmp.ne.s32.totalorder %s83, %s86
    %p92 = scmp.eq.s32.totalorder %s10, 0
    %p93 = por %p91, %p92
    %p94 = scmp.ne.s32.totalorder %s83, %s86
    %p95 = scmp.eq.s32.totalorder %s15, 3
    %p96 = por %p94, %p95
    %p97 = scmp.ne.s32.totalorder %s86, %s87
    %p98 = scmp.eq.s32.totalorder %s15, 0
    %p99 = por %p97, %p98
    %p100 = scmp.ne.s32.totalorder %s86, %s87
    %p101 = scmp.eq.s32.totalorder %s16, 3
    %p102 = por %p100, %p101
    %p104 = scmp.ne.s32.totalorder %s87, %s103
    %p105 = scmp.eq.s32.totalorder %s16, 0
    %p106 = por %p104, %p105
    %s107 = ssub.s32 %s17, %s29
    %s108 = ssub.s32 %s18, %s25
    %s109 = sor.u32 %s107, %s108
    %p110 = scmp.eq.s32.totalorder %s109, 0
    %s112 = sadd.s32 %s111, 1
    %s113 = scalar_select %p110, %s111, %s112
    %p116 = pneg %p110
    %p117 = scmp.eq.s32.totalorder %s10, 3
    %p118 = por %p116, %p117
    %p119 = scmp.ne.s32.totalorder %s111, %s114
    %p120 = scmp.eq.s32.totalorder %s10, 0
    %p121 = por %p119, %p120
    %p122 = scmp.ne.s32.totalorder %s111, %s114
    %p123 = scmp.eq.s32.totalorder %s15, 3
    %p124 = por %p122, %p123
    %p125 = scmp.ne.s32.totalorder %s114, %s115
    %p126 = scmp.eq.s32.totalorder %s15, 0
    %p127 = por %p125, %p126
    %p128 = scmp.ne.s32.totalorder %s114, %s115
    %p129 = scmp.eq.s32.totalorder %s16, 3
    %p130 = por %p128, %p129
    %p132 = scmp.ne.s32.totalorder %s115, %s131
    %p133 = scmp.eq.s32.totalorder %s16, 0
    %p134 = por %p132, %p133
    %p135 = scmp.le.s32.totalorder 1, %s10
    %p136 = scmp.lt.s32.totalorder %s10, 5
    %p137 = pnand %p135, %p136
    %p138 = pneg %p137
    // Predicated region
    $region9: #{double_conv.3} parent=5 // pred_check
      _
    $region10: #{double_conv.3} parent=5 // pred_check_branch
      %140 = sbr.rel (%p137) target = $region12
    $region11: #{double_conv.3} parent=5 // pred_region
      %s141 = ssub.s32 %s10, 1
      // Predicated region
      $region13: #{double_conv.3} parent=11 // pred_check
        %p142 = pneg %p71
      $region14: #{double_conv.3} parent=11 // pred_check_branch
        %144 = sbr.rel (%p142) target = $region16
      $region15: #{double_conv.3} parent=11 // pred_region
        _
      $region16: #{double_conv.3} parent=11 // pred_fallthru
        _
    $region12: #{double_conv.3} parent=5 // pred_fallthru
      _
    %p145 = scmp.lt.s32.totalorder %s10, 4
    // Predicated region
    $region17: #{double_conv.3} parent=5 // pred_check
      %p146 = pneg %p145
    $region18: #{double_conv.3} parent=5 // pred_check_branch
      %148 = sbr.rel (%p146) target = $region20
    $region19: #{double_conv.3} parent=5 // pred_region
      // Predicated region
      $region21: #{double_conv.3} parent=19 // pred_check
        %p149 = pneg %p44
      $region22: #{double_conv.3} parent=19 // pred_check_branch
        %151 = sbr.rel (%p149) target = $region24
      $region23: #{double_conv.3} parent=19 // pred_region
        %p152 = scmp.lt.s32.totalorder %s17, 1
        %s153 = scalar_select %p152, %s17, 1
        %p154 = scmp.lt.s32.totalorder %s18, 1
        %s155 = scalar_select %p154, %s18, 1
        %s156 = smul.addr %s155, 23
        %s157 = smul.addr %s153, 46
        %s158 = sadd.s32 %s156, %s157
        %s159 = smul.addr %s158, 4
        %s160 = scalar_lea.vmem %s0, %s159
      $region24: #{double_conv.3} parent=19 // pred_fallthru
        _
    $region20: #{double_conv.3} parent=5 // pred_fallthru
      _
    %p161 = scmp.le.s32.totalorder 1, %s10
    %p162 = scmp.lt.s32.totalorder %s10, 5
    %p163 = pnand %p161, %p162
    %p164 = pneg %p163
    // Predicated region
    $region25: #{double_conv.3} parent=5 // pred_check
      _
    $region26: #{double_conv.3} parent=5 // pred_check_branch
      %166 = sbr.rel (%p163) target = $region28
    $region27: #{double_conv.3} parent=5 // pred_region
      %s167 = ssub.s32 %s10, 1
      %p168 = scmp.lt.s32.totalorder %s19, 1
      %s169 = scalar_select %p168, %s19, 1
      %p170 = scmp.lt.s32.totalorder %s20, 1
      %s171 = scalar_select %p170, %s20, 1
      %s172 = smul.addr %s171, 23
      %s173 = smul.addr %s169, 46
      %s174 = sadd.s32 %s172, %s173
      %s175 = smul.addr %s174, 4
      %s176 = scalar_lea.vmem %s0, %s175
      %p177 = pneg %p50
      %p178 = pneg %p47
      %p179 = pneg %p71
      %p180 = pneg %p68
      %p181 = pneg %p99
      %p182 = pneg %p96
      %p183 = scmp.lt.s32.totalorder %s19, 1
      %s184 = scalar_select %p183, %s19, 1
      %p185 = scmp.lt.s32.totalorder %s20, 1
      %s186 = scalar_select %p185, %s20, 1
      %s187 = smul.addr %s186, 23
      %s188 = smul.addr %s184, 46
      %s189 = sadd.s32 %s187, %s188
      %s190 = smul.addr %s189, 4
      %s191 = scalar_lea.vmem %s2, %s190
      %p192 = pneg %p127
      %p193 = pneg %p124
      %p194 = scmp.lt.s32.totalorder %s19, 1
      %s195 = scalar_select %p194, %s19, 1
      %p196 = scmp.lt.s32.totalorder %s20, 1
      %s197 = scalar_select %p196, %s20, 1
      %s198 = smul.addr %s195, 2
      %s199 = sadd.s32 %s197, %s198
      %s200 = smul.addr %s199, 2
      %s201 = scalar_lea.vmem %s3, %s200
      %p202 = scmp.lt.s32.totalorder %s19, 1
      %s203 = scalar_select %p202, %s19, 1
      %p204 = scmp.lt.s32.totalorder %s20, 1
      %s205 = scalar_select %p204, %s20, 1
      %s206 = smul.addr %s205, 23
      %s207 = smul.addr %s203, 46
      %s208 = sadd.s32 %s206, %s207
      %s209 = smul.addr %s208, 4
      %s210 = scalar_lea.vmem %s0, %s209
      %p211 = scmp.lt.s32.totalorder %s19, 1
      %s212 = scalar_select %p211, %s19, 1
      %p213 = scmp.lt.s32.totalorder %s20, 1
      %s214 = scalar_select %p213, %s20, 1
      %s215 = smul.addr %s214, 23
      %s216 = smul.addr %s212, 46
      %s217 = sadd.s32 %s215, %s216
      %s218 = smul.addr %s217, 4
      %s219 = scalar_lea.vmem %s2, %s218
      %p220 = scmp.lt.s32.totalorder %s19, 1
      %s221 = scalar_select %p220, %s19, 1
      %p222 = scmp.lt.s32.totalorder %s20, 1
      %s223 = scalar_select %p222, %s20, 1
      %s224 = smul.addr %s221, 2
      %s225 = sadd.s32 %s223, %s224
      %s226 = smul.addr %s225, 2
      %s227 = scalar_lea.vmem %s3, %s226
      %v229 = vld [vmem:[%s210] sm:$0xf]
      %v230 = vld [vmem:[%s210 + $0x4] sm:$0xf]
      %v231 = vld [vmem:[%s210 + $0x8] sm:$0xf]
      %v232 = vld [vmem:[%s210 + $0xc] sm:$0xf]
      %v233 = vld [vmem:[%s210 + $0x10] sm:$0xf]
      %v234 = vld [vmem:[%s210 + $0x14] sm:$0xf]
      %v235 = vld [vmem:[%s210 + $0x18] sm:$0xf]
      %v236 = vld [vmem:[%s210 + $0x1c] sm:$0xf]
      %v237 = vld [vmem:[%s210 + $0x20] sm:$0xf]
      %v238 = vld [vmem:[%s210 + $0x24] sm:$0xf]
      %v239 = vld [vmem:[%s210 + $0x28] sm:$0xf]
      %v240 = vld [vmem:[%s210 + $0x2c] sm:$0xf]
      %v241 = vld [vmem:[%s210 + $0x30] sm:$0xf]
      %v242 = vld [vmem:[%s210 + $0x34] sm:$0xf]
      %v243 = vld [vmem:[%s210 + $0x38] sm:$0xf]
      %v244 = vld [vmem:[%s210 + $0x3c] sm:$0xf]
      %v245 = vld [vmem:[%s210 + $0x40] sm:$0xf]
      %v246 = vld [vmem:[%s210 + $0x44] sm:$0xf]
      %v247 = vld [vmem:[%s210 + $0x48] sm:$0xf]
      %v248 = vld [vmem:[%s210 + $0x4c] sm:$0xf]
      %v249 = vld [vmem:[%s210 + $0x50] sm:$0xf]
      %v250 = vld [vmem:[%s210 + $0x54] sm:$0xf]
      %v251 = vld [vmem:[%s210 + $0x58] sm:$0xf]
      %v252 = vld [vmem:[%s1] sm:$0xf]
      %v253 = vld [vmem:[%s1 + $0x4] sm:$0xf]
      %v254 = vld [vmem:[%s1 + $0x8] sm:$0xf]
      %v255 = vld [vmem:[%s1 + $0xc] sm:$0xf]
      %v256 = vld [vmem:[%s1 + $0x10] sm:$0x3]
      %v280 = vunpack.c.l.b16 %v229
      %v281 = vunpack.c.l.b16 %v230
      %v282 = vunpack.c.l.b16 %v231
      %v283 = vunpack.c.l.b16 %v232
      %v284 = vunpack.c.l.b16 %v233
      %v285 = vunpack.c.l.b16 %v234
      %v286 = vunpack.c.l.b16 %v235
      %v287 = vunpack.c.l.b16 %v236
      %v288 = vunpack.c.l.b16 %v237
      %v289 = vunpack.c.l.b16 %v238
      %v290 = vunpack.c.l.b16 %v239
      %v291 = vunpack.c.l.b16 %v240
      %v292 = vunpack.c.l.b16 %v241
      %v293 = vunpack.c.l.b16 %v242
      %v294 = vunpack.c.l.b16 %v243
      %v295 = vunpack.c.l.b16 %v244
      %v296 = vunpack.c.l.b16 %v245
      %v297 = vunpack.c.l.b16 %v246
      %v298 = vunpack.c.l.b16 %v247
      %v299 = vunpack.c.l.b16 %v248
      %v300 = vunpack.c.l.b16 %v249
      %v301 = vunpack.c.l.b16 %v250
      %v302 = vunpack.c.l.b16 %v251
      %v303 = vpack.c.b16 %v281, %v280
      %v304 = vpack.c.b16 %v283, %v282
      %v305 = vpack.c.b16 %v285, %v284
      %v306 = vpack.c.b16 %v287, %v286
      %v307 = vpack.c.b16 %v289, %v288
      %v308 = vpack.c.b16 %v291, %v290
      %v309 = vpack.c.b16 %v293, %v292
      %v310 = vpack.c.b16 %v295, %v294
      %v311 = vpack.c.b16 %v297, %v296
      %v312 = vpack.c.b16 %v299, %v298
      %v313 = vpack.c.b16 %v301, %v300
      %v314 = vpack.c.b16 %v302, %v302
      %v320 = vunpack.c.l.b16 %v252
      %v321 = vunpack.c.l.b16 %v253
      %v322 = vunpack.c.l.b16 %v254
      %v323 = vunpack.c.l.b16 %v255
      %v324 = vunpack.c.l.b16 %v256
      %v325 = vpack.c.b16 %v321, %v320
      %v326 = vpack.c.b16 %v323, %v322
      %v327 = vpack.c.b16 %v324, %v324
      %vm330 = vcmask 293888
      %v332 = vsel %vm330, %v303, 0
      %v335 = vsel %vm330, %v304, 0
      %v338 = vsel %vm330, %v305, 0
      %v341 = vsel %vm330, %v306, 0
      %v344 = vsel %vm330, %v307, 0
      %v347 = vsel %vm330, %v308, 0
      %v350 = vsel %vm330, %v309, 0
      %v353 = vsel %vm330, %v310, 0
      %v356 = vsel %vm330, %v311, 0
      %v359 = vsel %vm330, %v312, 0
      %v362 = vsel %vm330, %v313, 0
      %v365 = vsel %vm330, %v314, 0
      %vm367 = vcmask 1041408
      %v369 = vsel %vm367, %v327, 0
      %371 = vmatprep.subr.bf16.mxu0 0
      %372 = vmatpush1.bf16.msra.mxu0 %v325
      %373 = vmatprep.subr.bf16.mxu0 0
      %374 = vmatpush1.bf16.msra.mxu0 %v326
      %375 = vmatprep.subr.bf16.mxu0 0
      %376 = vmatpush1.bf16.msra.mxu0 %v369
      %377 = vmatprep.subr.bf16.mxu0 0
      %378 = vmatpush1.bf16.msra.mxu0 0
      %379 = vmatprep.subr.bf16.mxu0 0
      %380 = vmatpush1.bf16.msra.mxu0 0
      %381 = vmatprep.subr.bf16.mxu0 0
      %382 = vmatpush1.bf16.msra.mxu0 0
      %383 = vmatprep.subr.bf16.mxu0 0
      %384 = vmatpush1.bf16.msra.mxu0 0
      %385 = vmatprep.subr.bf16.mxu0 0
      %386 = vmatpush1.bf16.msra.mxu0 0
      %387 = vmatprep.subr.bf16.mxu0 0
      %388 = vmatpush1.bf16.msra.mxu0 0
      %389 = vmatprep.subr.bf16.mxu0 0
      %390 = vmatpush1.bf16.msra.mxu0 0
      %391 = vmatprep.subr.bf16.mxu0 0
      %392 = vmatpush1.bf16.msra.mxu0 0
      %393 = vmatprep.subr.bf16.mxu0 0
      %394 = vmatpush1.bf16.msra.mxu0 0
      %395 = vmatprep.subr.bf16.mxu0 0
      %396 = vmatpush1.bf16.msra.mxu0 0
      %397 = vmatprep.subr.bf16.mxu0 0
      %398 = vmatpush1.bf16.msra.mxu0 0
      %399 = vmatprep.subr.bf16.mxu0 0
      %400 = vmatpush1.bf16.msra.mxu0 0
      %401 = vmatprep.subr.bf16.mxu0 0
      %402 = vmatpush1.bf16.msra.mxu0 0
      %403 = vmatprep.mubr.bf16.mxu0 0
      %404 = vmatmul.mubr.bf16.gmra.mrb[0].mxu0 %v332
      %v405 = vpop.f32.mrb[0].mxu0
      %v406 = vadd.f32 0.0, %v405
      %v407 = vpop.f32.mrb[0].mxu0
      %v408 = vpop.f32.mrb[0].mxu0
      %v409 = vadd.f32 0.0, %v408
      %v410 = vpop.f32.mrb[0].mxu0
      %411 = vmatprep.mubr.bf16.mxu0 0
      %412 = vmatmul.mubr.bf16.gmra.mrb[0].mxu0 %v335
      %v413 = vpop.f32.mrb[0].mxu0
      %v414 = vadd.f32 0.0, %v413
      %v415 = vpop.f32.mrb[0].mxu0
      %v416 = vpop.f32.mrb[0].mxu0
      %v417 = vadd.f32 0.0, %v416
      %v418 = vpop.f32.mrb[0].mxu0
      %419 = vmatprep.mubr.bf16.mxu0 0
      %420 = vmatmul.mubr.bf16.gmra.mrb[0].mxu0 %v338
      %v421 = vpop.f32.mrb[0].mxu0
      %v422 = vadd.f32 0.0, %v421
      %v423 = vpop.f32.mrb[0].mxu0
      %v424 = vpop.f32.mrb[0].mxu0
      %v425 = vadd.f32 0.0, %v424
      %v426 = vpop.f32.mrb[0].mxu0
      %427 = vmatprep.mubr.bf16.mxu0 0
      %428 = vmatmul.mubr.bf16.gmra.mrb[0].mxu0 %v341
      %v429 = vpop.f32.mrb[0].mxu0
      %v430 = vadd.f32 0.0, %v429
      %v431 = vpop.f32.mrb[0].mxu0
      %v432 = vpop.f32.mrb[0].mxu0
      %v433 = vadd.f32 0.0, %v432
      %v434 = vpop.f32.mrb[0].mxu0
      %435 = vmatprep.mubr.bf16.mxu0 0
      %436 = vmatmul.mubr.bf16.gmra.mrb[0].mxu0 %v344
      %v437 = vpop.f32.mrb[0].mxu0
      %v438 = vadd.f32 0.0, %v437
      %v439 = vpop.f32.mrb[0].mxu0
      %v440 = vpop.f32.mrb[0].mxu0
      %v441 = vadd.f32 0.0, %v440
      %v442 = vpop.f32.mrb[0].mxu0
      %443 = vmatprep.mubr.bf16.mxu0 0
      %444 = vmatmul.mubr.bf16.gmra.mrb[0].mxu0 %v347
      %v445 = vpop.f32.mrb[0].mxu0
      %v446 = vadd.f32 0.0, %v445
      %v447 = vpop.f32.mrb[0].mxu0
      %v448 = vpop.f32.mrb[0].mxu0
      %v449 = vadd.f32 0.0, %v448
      %v450 = vpop.f32.mrb[0].mxu0
      %451 = vmatprep.mubr.bf16.mxu0 0
      %452 = vmatmul.mubr.bf16.gmra.mrb[0].mxu0 %v350
      %v453 = vpop.f32.mrb[0].mxu0
      %v454 = vadd.f32 0.0, %v453
      %v455 = vpop.f32.mrb[0].mxu0
      %v456 = vpop.f32.mrb[0].mxu0
      %v457 = vadd.f32 0.0, %v456
      %v458 = vpop.f32.mrb[0].mxu0
      %459 = vmatprep.mubr.bf16.mxu0 0
      %460 = vmatmul.mubr.bf16.gmra.mrb[0].mxu0 %v353
      %v461 = vpop.f32.mrb[0].mxu0
      %v462 = vadd.f32 0.0, %v461
      %v463 = vpop.f32.mrb[0].mxu0
      %v464 = vpop.f32.mrb[0].mxu0
      %v465 = vadd.f32 0.0, %v464
      %v466 = vpop.f32.mrb[0].mxu0
      %467 = vmatprep.mubr.bf16.mxu0 0
      %468 = vmatmul.mubr.bf16.gmra.mrb[0].mxu0 %v356
      %v469 = vpop.f32.mrb[0].mxu0
      %v470 = vadd.f32 0.0, %v469
      %v471 = vpop.f32.mrb[0].mxu0
      %v472 = vpop.f32.mrb[0].mxu0
      %v473 = vadd.f32 0.0, %v472
      %v474 = vpop.f32.mrb[0].mxu0
      %475 = vmatprep.mubr.bf16.mxu0 0
      %476 = vmatmul.mubr.bf16.gmra.mrb[0].mxu0 %v359
      %v477 = vpop.f32.mrb[0].mxu0
      %v478 = vadd.f32 0.0, %v477
      %v479 = vpop.f32.mrb[0].mxu0
      %v480 = vpop.f32.mrb[0].mxu0
      %v481 = vadd.f32 0.0, %v480
      %v482 = vpop.f32.mrb[0].mxu0
      %483 = vmatprep.mubr.bf16.mxu0 0
      %484 = vmatmul.mubr.bf16.gmra.mrb[0].mxu0 %v362
      %v485 = vpop.f32.mrb[0].mxu0
      %v486 = vadd.f32 0.0, %v485
      %v487 = vpop.f32.mrb[0].mxu0
      %v488 = vpop.f32.mrb[0].mxu0
      %v489 = vadd.f32 0.0, %v488
      %v490 = vpop.f32.mrb[0].mxu0
      %491 = vmatprep.mubr.bf16.mxu0 0
      %492 = vmatmul.mubr.bf16.gmra.mrb[0].mxu0 %v365
      %v493 = vpop.f32.mrb[0].mxu0
      %v494 = vadd.f32 0.0, %v493
      %v495 = vpop.f32.mrb[0].mxu0
      %v496 = vpop.f32.mrb[0].mxu0
      %v497 = vpop.f32.mrb[0].mxu0
      %498 = vdwg.mxu0
      %v499 = vpack.c.bf16 %v409, %v406
      %v500 = vpack.c.bf16 %v417, %v414
      %v501 = vpack.c.bf16 %v425, %v422
      %v502 = vpack.c.bf16 %v433, %v430
      %v503 = vpack.c.bf16 %v441, %v438
      %v504 = vpack.c.bf16 %v449, %v446
      %v505 = vpack.c.bf16 %v457, %v454
      %v506 = vpack.c.bf16 %v465, %v462
      %v507 = vpack.c.bf16 %v473, %v470
      %v508 = vpack.c.bf16 %v481, %v478
      %v509 = vpack.c.bf16 %v489, %v486
      %v510 = vpack.c.bf16 %v494, %v494
      %v523 = vunpack.c.l.b16 %v499
      %v524 = vunpack.c.h.b16 %v499
      %v525 = vunpack.c.l.b16 %v500
      %v526 = vunpack.c.h.b16 %v500
      %v527 = vunpack.c.l.b16 %v501
      %v528 = vunpack.c.h.b16 %v501
      %v529 = vunpack.c.l.b16 %v502
      %v530 = vunpack.c.h.b16 %v502
      %v531 = vunpack.c.l.b16 %v503
      %v532 = vunpack.c.h.b16 %v503
      %v533 = vunpack.c.l.b16 %v504
      %v534 = vunpack.c.h.b16 %v504
      %v535 = vunpack.c.l.b16 %v505
      %v536 = vunpack.c.h.b16 %v505
      %v537 = vunpack.c.l.b16 %v506
      %v538 = vunpack.c.h.b16 %v506
      %v539 = vunpack.c.l.b16 %v507
      %v540 = vunpack.c.h.b16 %v507
      %v541 = vunpack.c.l.b16 %v508
      %v542 = vunpack.c.h.b16 %v508
      %v543 = vunpack.c.l.b16 %v509
      %v544 = vunpack.c.h.b16 %v509
      %v545 = vunpack.c.l.b16 %v510
      %v546 = vpack.c.b16 %v523, %v523
      %v547 = vpack.c.b16 %v524, %v524
      %v548 = vpack.c.b16 %v525, %v525
      %v549 = vpack.c.b16 %v526, %v526
      %v550 = vpack.c.b16 %v527, %v527
      %v551 = vpack.c.b16 %v528, %v528
      %v552 = vpack.c.b16 %v529, %v529
      %v553 = vpack.c.b16 %v530, %v530
      %v554 = vpack.c.b16 %v531, %v531
      %v555 = vpack.c.b16 %v532, %v532
      %v556 = vpack.c.b16 %v533, %v533
      %v557 = vpack.c.b16 %v534, %v534
      %v558 = vpack.c.b16 %v535, %v535
      %v559 = vpack.c.b16 %v536, %v536
      %v560 = vpack.c.b16 %v537, %v537
      %v561 = vpack.c.b16 %v538, %v538
      %v562 = vpack.c.b16 %v539, %v539
      %v563 = vpack.c.b16 %v540, %v540
      %v564 = vpack.c.b16 %v541, %v541
      %v565 = vpack.c.b16 %v542, %v542
      %v566 = vpack.c.b16 %v543, %v543
      %v567 = vpack.c.b16 %v544, %v544
      %v568 = vpack.c.b16 %v545, %v545
      %592 = vst [vmem:[%s219] sm:$0xf] %v546
      %593 = vst [vmem:[%s219 + $0x4] sm:$0xf] %v547
      %594 = vst [vmem:[%s219 + $0x8] sm:$0xf] %v548
      %595 = vst [vmem:[%s219 + $0xc] sm:$0xf] %v549
      %596 = vst [vmem:[%s219 + $0x10] sm:$0xf] %v550
      %597 = vst [vmem:[%s219 + $0x14] sm:$0xf] %v551
      %598 = vst [vmem:[%s219 + $0x18] sm:$0xf] %v552
      %599 = vst [vmem:[%s219 + $0x1c] sm:$0xf] %v553
      %600 = vst [vmem:[%s219 + $0x20] sm:$0xf] %v554
      %601 = vst [vmem:[%s219 + $0x24] sm:$0xf] %v555
      %602 = vst [vmem:[%s219 + $0x28] sm:$0xf] %v556
      %603 = vst [vmem:[%s219 + $0x2c] sm:$0xf] %v557
      %604 = vst [vmem:[%s219 + $0x30] sm:$0xf] %v558
      %605 = vst [vmem:[%s219 + $0x34] sm:$0xf] %v559
      %606 = vst [vmem:[%s219 + $0x38] sm:$0xf] %v560
      %607 = vst [vmem:[%s219 + $0x3c] sm:$0xf] %v561
      %608 = vst [vmem:[%s219 + $0x40] sm:$0xf] %v562
      %609 = vst [vmem:[%s219 + $0x44] sm:$0xf] %v563
      %610 = vst [vmem:[%s219 + $0x48] sm:$0xf] %v564
      %611 = vst [vmem:[%s219 + $0x4c] sm:$0xf] %v565
      %612 = vst [vmem:[%s219 + $0x50] sm:$0xf] %v566
      %613 = vst [vmem:[%s219 + $0x54] sm:$0xf] %v567
      %614 = vst [vmem:[%s219 + $0x58] sm:$0xf] %v568
      %v615 = vlaneseq
      %v616 = vshrl.u32 %v615, 7
      %v617 = vadd.s32 %v616, 8
      %v618 = vadd.s32 %v616, 16
      %v619 = vadd.s32 %v616, 24
      %v620 = vadd.s32 %v616, 32
      %v621 = vadd.s32 %v616, 40
      %v622 = vadd.s32 %v616, 48
      %v623 = vadd.s32 %v616, 56
      %v624 = vadd.s32 %v616, 64
      %v625 = vadd.s32 %v616, 72
      %v626 = vadd.s32 %v616, 80
      %v627 = vadd.s32 %v616, 88
      %v628 = vadd.s32 %v616, 96
      %v629 = vadd.s32 %v616, 104
      %v630 = vadd.s32 %v616, 112
      %v631 = vadd.s32 %v616, 120
      %v632 = vadd.s32 %v616, 128
      %v633 = vadd.s32 %v616, 136
      %v634 = vadd.s32 %v616, 144
      %v635 = vadd.s32 %v616, 152
      %v636 = vadd.s32 %v616, 160
      %v637 = vadd.s32 %v616, 168
      %v638 = vadd.s32 %v616, 176
      %v639 = vcvt.s32.f32 %v616
      %v640 = vcvt.s32.f32 %v617
      %v641 = vcvt.s32.f32 %v618
      %v642 = vcvt.s32.f32 %v619
      %v643 = vcvt.s32.f32 %v620
      %v644 = vcvt.s32.f32 %v621
      %v645 = vcvt.s32.f32 %v622
      %v646 = vcvt.s32.f32 %v623
      %v647 = vcvt.s32.f32 %v624
      %v648 = vcvt.s32.f32 %v625
      %v649 = vcvt.s32.f32 %v626
      %v650 = vcvt.s32.f32 %v627
      %v651 = vcvt.s32.f32 %v628
      %v652 = vcvt.s32.f32 %v629
      %v653 = vcvt.s32.f32 %v630
      %v654 = vcvt.s32.f32 %v631
      %v655 = vcvt.s32.f32 %v632
      %v656 = vcvt.s32.f32 %v633
      %v657 = vcvt.s32.f32 %v634
      %v658 = vcvt.s32.f32 %v635
      %v659 = vcvt.s32.f32 %v636
      %v660 = vcvt.s32.f32 %v637
      %v661 = vcvt.s32.f32 %v638
      %v662 = vrcp.pop 18.0
      %v663 = vmul.f32 %v639, %v662
      %v664 = vmul.f32 %v640, %v662
      %v665 = vmul.f32 %v641, %v662
      %v666 = vmul.f32 %v642, %v662
      %v667 = vmul.f32 %v643, %v662
      %v668 = vmul.f32 %v644, %v662
      %v669 = vmul.f32 %v645, %v662
      %v670 = vmul.f32 %v646, %v662
      %v671 = vmul.f32 %v647, %v662
      %v672 = vmul.f32 %v648, %v662
      %v673 = vmul.f32 %v649, %v662
      %v674 = vmul.f32 %v650, %v662
      %v675 = vmul.f32 %v651, %v662
      %v676 = vmul.f32 %v652, %v662
      %v677 = vmul.f32 %v653, %v662
      %v678 = vmul.f32 %v654, %v662
      %v679 = vmul.f32 %v655, %v662
      %v680 = vmul.f32 %v656, %v662
      %v681 = vmul.f32 %v657, %v662
      %v682 = vmul.f32 %v658, %v662
      %v683 = vmul.f32 %v659, %v662
      %v684 = vmul.f32 %v660, %v662
      %v685 = vmul.f32 %v661, %v662
      %v686 = vfloor.f32 %v663
      %v687 = vfloor.f32 %v664
      %v688 = vfloor.f32 %v665
      %v689 = vfloor.f32 %v666
      %v690 = vfloor.f32 %v667
      %v691 = vfloor.f32 %v668
      %v692 = vfloor.f32 %v669
      %v693 = vfloor.f32 %v670
      %v694 = vfloor.f32 %v671
      %v695 = vfloor.f32 %v672
      %v696 = vfloor.f32 %v673
      %v697 = vfloor.f32 %v674
      %v698 = vfloor.f32 %v675
      %v699 = vfloor.f32 %v676
      %v700 = vfloor.f32 %v677
      %v701 = vfloor.f32 %v678
      %v702 = vfloor.f32 %v679
      %v703 = vfloor.f32 %v680
      %v704 = vfloor.f32 %v681
      %v705 = vfloor.f32 %v682
      %v706 = vfloor.f32 %v683
      %v707 = vfloor.f32 %v684
      %v708 = vfloor.f32 %v685
      %v709 = vmul.f32 %v686, 18.0
      %v710 = vmul.f32 %v687, 18.0
      %v711 = vmul.f32 %v688, 18.0
      %v712 = vmul.f32 %v689, 18.0
      %v713 = vmul.f32 %v690, 18.0
      %v714 = vmul.f32 %v691, 18.0
      %v715 = vmul.f32 %v692, 18.0
      %v716 = vmul.f32 %v693, 18.0
      %v717 = vmul.f32 %v694, 18.0
      %v718 = vmul.f32 %v695, 18.0
      %v719 = vmul.f32 %v696, 18.0
      %v720 = vmul.f32 %v697, 18.0
      %v721 = vmul.f32 %v698, 18.0
      %v722 = vmul.f32 %v699, 18.0
      %v723 = vmul.f32 %v700, 18.0
      %v724 = vmul.f32 %v701, 18.0
      %v725 = vmul.f32 %v702, 18.0
      %v726 = vmul.f32 %v703, 18.0
      %v727 = vmul.f32 %v704, 18.0
      %v728 = vmul.f32 %v705, 18.0
      %v729 = vmul.f32 %v706, 18.0
      %v730 = vmul.f32 %v707, 18.0
      %v731 = vmul.f32 %v708, 18.0
      %v732 = vsub.f32 %v639, %v709
      %v733 = vsub.f32 %v640, %v710
      %v734 = vsub.f32 %v641, %v711
      %v735 = vsub.f32 %v642, %v712
      %v736 = vsub.f32 %v643, %v713
      %v737 = vsub.f32 %v644, %v714
      %v738 = vsub.f32 %v645, %v715
      %v739 = vsub.f32 %v646, %v716
      %v740 = vsub.f32 %v647, %v717
      %v741 = vsub.f32 %v648, %v718
      %v742 = vsub.f32 %v649, %v719
      %v743 = vsub.f32 %v650, %v720
      %v744 = vsub.f32 %v651, %v721
      %v745 = vsub.f32 %v652, %v722
      %v746 = vsub.f32 %v653, %v723
      %v747 = vsub.f32 %v654, %v724
      %v748 = vsub.f32 %v655, %v725
      %v749 = vsub.f32 %v656, %v726
      %v750 = vsub.f32 %v657, %v727
      %v751 = vsub.f32 %v658, %v728
      %v752 = vsub.f32 %v659, %v729
      %v753 = vsub.f32 %v660, %v730
      %v754 = vsub.f32 %v661, %v731
      %vm755 = vcmp.ge.f32.partialorder %v639, 18.0
      %vm756 = vcmp.ge.f32.partialorder %v640, 18.0
      %vm757 = vcmp.ge.f32.partialorder %v641, 18.0
      %vm758 = vcmp.ge.f32.partialorder %v642, 18.0
      %vm759 = vcmp.ge.f32.partialorder %v643, 18.0
      %vm760 = vcmp.ge.f32.partialorder %v644, 18.0
      %vm761 = vcmp.ge.f32.partialorder %v645, 18.0
      %vm762 = vcmp.ge.f32.partialorder %v646, 18.0
      %vm763 = vcmp.ge.f32.partialorder %v647, 18.0
      %vm764 = vcmp.ge.f32.partialorder %v648, 18.0
      %vm765 = vcmp.ge.f32.partialorder %v649, 18.0
      %vm766 = vcmp.ge.f32.partialorder %v650, 18.0
      %vm767 = vcmp.ge.f32.partialorder %v651, 18.0
      %vm768 = vcmp.ge.f32.partialorder %v652, 18.0
      %vm769 = vcmp.ge.f32.partialorder %v653, 18.0
      %vm770 = vcmp.ge.f32.partialorder %v654, 18.0
      %vm771 = vcmp.ge.f32.partialorder %v655, 18.0
      %vm772 = vcmp.ge.f32.partialorder %v656, 18.0
      %vm773 = vcmp.ge.f32.partialorder %v657, 18.0
      %vm774 = vcmp.ge.f32.partialorder %v658, 18.0
      %vm775 = vcmp.ge.f32.partialorder %v659, 18.0
      %vm776 = vcmp.ge.f32.partialorder %v660, 18.0
      %vm777 = vcmp.ge.f32.partialorder %v661, 18.0
      %vm778 = vcmp.lt.f32.partialorder %v639, 162.0
      %vm779 = vcmp.lt.f32.partialorder %v640, 162.0
      %vm780 = vcmp.lt.f32.partialorder %v641, 162.0
      %vm781 = vcmp.lt.f32.partialorder %v642, 162.0
      %vm782 = vcmp.lt.f32.partialorder %v643, 162.0
      %vm783 = vcmp.lt.f32.partialorder %v644, 162.0
      %vm784 = vcmp.lt.f32.partialorder %v645, 162.0
      %vm785 = vcmp.lt.f32.partialorder %v646, 162.0
      %vm786 = vcmp.lt.f32.partialorder %v647, 162.0
      %vm787 = vcmp.lt.f32.partialorder %v648, 162.0
      %vm788 = vcmp.lt.f32.partialorder %v649, 162.0
      %vm789 = vcmp.lt.f32.partialorder %v650, 162.0
      %vm790 = vcmp.lt.f32.partialorder %v651, 162.0
      %vm791 = vcmp.lt.f32.partialorder %v652, 162.0
      %vm792 = vcmp.lt.f32.partialorder %v653, 162.0
      %vm793 = vcmp.lt.f32.partialorder %v654, 162.0
      %vm794 = vcmp.lt.f32.partialorder %v655, 162.0
      %vm795 = vcmp.lt.f32.partialorder %v656, 162.0
      %vm796 = vcmp.lt.f32.partialorder %v657, 162.0
      %vm797 = vcmp.lt.f32.partialorder %v658, 162.0
      %vm798 = vcmp.lt.f32.partialorder %v659, 162.0
      %vm799 = vcmp.lt.f32.partialorder %v660, 162.0
      %vm800 = vcmp.lt.f32.partialorder %v661, 162.0
      %vm801 = vmand %vm755, %vm778
      %vm802 = vmand %vm756, %vm779
      %vm803 = vmand %vm757, %vm780
      %vm804 = vmand %vm758, %vm781
      %vm805 = vmand %vm759, %vm782
      %vm806 = vmand %vm760, %vm783
      %vm807 = vmand %vm761, %vm784
      %vm808 = vmand %vm762, %vm785
      %vm809 = vmand %vm763, %vm786
      %vm810 = vmand %vm764, %vm787
      %vm811 = vmand %vm765, %vm788
      %vm812 = vmand %vm766, %vm789
      %vm813 = vmand %vm767, %vm790
      %vm814 = vmand %vm768, %vm791
      %vm815 = vmand %vm769, %vm792
      %vm816 = vmand %vm770, %vm793
      %vm817 = vmand %vm771, %vm794
      %vm818 = vmand %vm772, %vm795
      %vm819 = vmand %vm773, %vm796
      %vm820 = vmand %vm774, %vm797
      %vm821 = vmand %vm775, %vm798
      %vm822 = vmand %vm776, %vm799
      %vm823 = vmand %vm777, %vm800
      %vm824 = vcmp.ge.f32.partialorder %v732, 1.0
      %vm825 = vcmp.ge.f32.partialorder %v733, 1.0
      %vm826 = vcmp.ge.f32.partialorder %v734, 1.0
      %vm827 = vcmp.ge.f32.partialorder %v735, 1.0
      %vm828 = vcmp.ge.f32.partialorder %v736, 1.0
      %vm829 = vcmp.ge.f32.partialorder %v737, 1.0
      %vm830 = vcmp.ge.f32.partialorder %v738, 1.0
      %vm831 = vcmp.ge.f32.partialorder %v739, 1.0
      %vm832 = vcmp.ge.f32.partialorder %v740, 1.0
      %vm833 = vcmp.ge.f32.partialorder %v741, 1.0
      %vm834 = vcmp.ge.f32.partialorder %v742, 1.0
      %vm835 = vcmp.ge.f32.partialorder %v743, 1.0
      %vm836 = vcmp.ge.f32.partialorder %v744, 1.0
      %vm837 = vcmp.ge.f32.partialorder %v745, 1.0
      %vm838 = vcmp.ge.f32.partialorder %v746, 1.0
      %vm839 = vcmp.ge.f32.partialorder %v747, 1.0
      %vm840 = vcmp.ge.f32.partialorder %v748, 1.0
      %vm841 = vcmp.ge.f32.partialorder %v749, 1.0
      %vm842 = vcmp.ge.f32.partialorder %v750, 1.0
      %vm843 = vcmp.ge.f32.partialorder %v751, 1.0
      %vm844 = vcmp.ge.f32.partialorder %v752, 1.0
      %vm845 = vcmp.ge.f32.partialorder %v753, 1.0
      %vm846 = vcmp.ge.f32.partialorder %v754, 1.0
      %vm847 = vmand %vm801, %vm824
      %vm848 = vmand %vm802, %vm825
      %vm849 = vmand %vm803, %vm826
      %vm850 = vmand %vm804, %vm827
      %vm851 = vmand %vm805, %vm828
      %vm852 = vmand %vm806, %vm829
      %vm853 = vmand %vm807, %vm830
      %vm854 = vmand %vm808, %vm831
      %vm855 = vmand %vm809, %vm832
      %vm856 = vmand %vm810, %vm833
      %vm857 = vmand %vm811, %vm834
      %vm858 = vmand %vm812, %vm835
      %vm859 = vmand %vm813, %vm836
      %vm860 = vmand %vm814, %vm837
      %vm861 = vmand %vm815, %vm838
      %vm862 = vmand %vm816, %vm839
      %vm863 = vmand %vm817, %vm840
      %vm864 = vmand %vm818, %vm841
      %vm865 = vmand %vm819, %vm842
      %vm866 = vmand %vm820, %vm843
      %vm867 = vmand %vm821, %vm844
      %vm868 = vmand %vm822, %vm845
      %vm869 = vmand %vm823, %vm846
      %vm870 = vcmp.le.f32.partialorder %v732, 16.0
      %vm871 = vcmp.le.f32.partialorder %v733, 16.0
      %vm872 = vcmp.le.f32.partialorder %v734, 16.0
      %vm873 = vcmp.le.f32.partialorder %v735, 16.0
      %vm874 = vcmp.le.f32.partialorder %v736, 16.0
      %vm875 = vcmp.le.f32.partialorder %v737, 16.0
      %vm876 = vcmp.le.f32.partialorder %v738, 16.0
      %vm877 = vcmp.le.f32.partialorder %v739, 16.0
      %vm878 = vcmp.le.f32.partialorder %v740, 16.0
      %vm879 = vcmp.le.f32.partialorder %v741, 16.0
      %vm880 = vcmp.le.f32.partialorder %v742, 16.0
      %vm881 = vcmp.le.f32.partialorder %v743, 16.0
      %vm882 = vcmp.le.f32.partialorder %v744, 16.0
      %vm883 = vcmp.le.f32.partialorder %v745, 16.0
      %vm884 = vcmp.le.f32.partialorder %v746, 16.0
      %vm885 = vcmp.le.f32.partialorder %v747, 16.0
      %vm886 = vcmp.le.f32.partialorder %v748, 16.0
      %vm887 = vcmp.le.f32.partialorder %v749, 16.0
      %vm888 = vcmp.le.f32.partialorder %v750, 16.0
      %vm889 = vcmp.le.f32.partialorder %v751, 16.0
      %vm890 = vcmp.le.f32.partialorder %v752, 16.0
      %vm891 = vcmp.le.f32.partialorder %v753, 16.0
      %vm892 = vcmp.le.f32.partialorder %v754, 16.0
      %vm893 = vmand %vm847, %vm870
      %vm894 = vmand %vm848, %vm871
      %vm895 = vmand %vm849, %vm872
      %vm896 = vmand %vm850, %vm873
      %vm897 = vmand %vm851, %vm874
      %vm898 = vmand %vm852, %vm875
      %vm899 = vmand %vm853, %vm876
      %vm900 = vmand %vm854, %vm877
      %vm901 = vmand %vm855, %vm878
      %vm902 = vmand %vm856, %vm879
      %vm903 = vmand %vm857, %vm880
      %vm904 = vmand %vm858, %vm881
      %vm905 = vmand %vm859, %vm882
      %vm906 = vmand %vm860, %vm883
      %vm907 = vmand %vm861, %vm884
      %vm908 = vmand %vm862, %vm885
      %vm909 = vmand %vm863, %vm886
      %vm910 = vmand %vm864, %vm887
      %vm911 = vmand %vm865, %vm888
      %vm912 = vmand %vm866, %vm889
      %vm913 = vmand %vm867, %vm890
      %vm914 = vmand %vm868, %vm891
      %vm915 = vmand %vm869, %vm892
      %v916 = vunpack.c.l.bf16 %v499
      %v917 = vunpack.c.h.bf16 %v499
      %v918 = vunpack.c.l.bf16 %v500
      %v919 = vunpack.c.h.bf16 %v500
      %v920 = vunpack.c.l.bf16 %v501
      %v921 = vunpack.c.h.bf16 %v501
      %v922 = vunpack.c.l.bf16 %v502
      %v923 = vunpack.c.h.bf16 %v502
      %v924 = vunpack.c.l.bf16 %v503
      %v925 = vunpack.c.h.bf16 %v503
      %v926 = vunpack.c.l.bf16 %v504
      %v927 = vunpack.c.h.bf16 %v504
      %v928 = vunpack.c.l.bf16 %v505
      %v929 = vunpack.c.h.bf16 %v505
      %v930 = vunpack.c.l.bf16 %v506
      %v931 = vunpack.c.h.bf16 %v506
      %v932 = vunpack.c.l.bf16 %v507
      %v933 = vunpack.c.h.bf16 %v507
      %v934 = vunpack.c.l.bf16 %v508
      %v935 = vunpack.c.h.bf16 %v508
      %v936 = vunpack.c.l.bf16 %v509
      %v937 = vunpack.c.h.bf16 %v509
      %v938 = vunpack.c.l.bf16 %v510
      %v939 = vsel %vm893, 1, 0
      %v940 = vsel %vm894, 1, 0
      %v941 = vsel %vm895, 1, 0
      %v942 = vsel %vm896, 1, 0
      %v943 = vsel %vm897, 1, 0
      %v944 = vsel %vm898, 1, 0
      %v945 = vsel %vm899, 1, 0
      %v946 = vsel %vm900, 1, 0
      %v947 = vsel %vm901, 1, 0
      %v948 = vsel %vm902, 1, 0
      %v949 = vsel %vm903, 1, 0
      %v950 = vsel %vm904, 1, 0
      %v951 = vsel %vm905, 1, 0
      %v952 = vsel %vm906, 1, 0
      %v953 = vsel %vm907, 1, 0
      %v954 = vsel %vm908, 1, 0
      %v955 = vsel %vm909, 1, 0
      %v956 = vsel %vm910, 1, 0
      %v957 = vsel %vm911, 1, 0
      %v958 = vsel %vm912, 1, 0
      %v959 = vsel %vm913, 1, 0
      %v960 = vsel %vm914, 1, 0
      %v961 = vsel %vm915, 1, 0
      %v962 = vcvt.s32.f32 %v939
      %v963 = vcvt.s32.f32 %v940
      %v964 = vcvt.s32.f32 %v941
      %v965 = vcvt.s32.f32 %v942
      %v966 = vcvt.s32.f32 %v943
      %v967 = vcvt.s32.f32 %v944
      %v968 = vcvt.s32.f32 %v945
      %v969 = vcvt.s32.f32 %v946
      %v970 = vcvt.s32.f32 %v947
      %v971 = vcvt.s32.f32 %v948
      %v972 = vcvt.s32.f32 %v949
      %v973 = vcvt.s32.f32 %v950
      %v974 = vcvt.s32.f32 %v951
      %v975 = vcvt.s32.f32 %v952
      %v976 = vcvt.s32.f32 %v953
      %v977 = vcvt.s32.f32 %v954
      %v978 = vcvt.s32.f32 %v955
      %v979 = vcvt.s32.f32 %v956
      %v980 = vcvt.s32.f32 %v957
      %v981 = vcvt.s32.f32 %v958
      %v982 = vcvt.s32.f32 %v959
      %v983 = vcvt.s32.f32 %v960
      %v984 = vcvt.s32.f32 %v961
      %v985 = vmul.f32 %v916, %v962
      %v986 = vmul.f32 %v917, %v963
      %v987 = vmul.f32 %v918, %v964
      %v988 = vmul.f32 %v919, %v965
      %v989 = vmul.f32 %v920, %v966
      %v990 = vmul.f32 %v921, %v967
      %v991 = vmul.f32 %v922, %v968
      %v992 = vmul.f32 %v923, %v969
      %v993 = vmul.f32 %v924, %v970
      %v994 = vmul.f32 %v925, %v971
      %v995 = vmul.f32 %v926, %v972
      %v996 = vmul.f32 %v927, %v973
      %v997 = vmul.f32 %v928, %v974
      %v998 = vmul.f32 %v929, %v975
      %v999 = vmul.f32 %v930, %v976
      %v1000 = vmul.f32 %v931, %v977
      %v1001 = vmul.f32 %v932, %v978
      %v1002 = vmul.f32 %v933, %v979
      %v1003 = vmul.f32 %v934, %v980
      %v1004 = vmul.f32 %v935, %v981
      %v1005 = vmul.f32 %v936, %v982
      %v1006 = vmul.f32 %v937, %v983
      %v1007 = vmul.f32 %v938, %v984
      %v1008 = vadd.f32 %v985, %v986
      %v1009 = vadd.f32 %v1008, %v987
      %v1010 = vadd.f32 %v1009, %v988
      %v1011 = vadd.f32 %v1010, %v989
      %v1012 = vadd.f32 %v1011, %v990
      %v1013 = vadd.f32 %v1012, %v991
      %v1014 = vadd.f32 %v1013, %v992
      %v1015 = vadd.f32 %v1014, %v993
      %v1016 = vadd.f32 %v1015, %v994
      %v1017 = vadd.f32 %v1016, %v995
      %v1018 = vadd.f32 %v1017, %v996
      %v1019 = vadd.f32 %v1018, %v997
      %v1020 = vadd.f32 %v1019, %v998
      %v1021 = vadd.f32 %v1020, %v999
      %v1022 = vadd.f32 %v1021, %v1000
      %v1023 = vadd.f32 %v1022, %v1001
      %v1024 = vadd.f32 %v1023, %v1002
      %v1025 = vadd.f32 %v1024, %v1003
      %v1026 = vadd.f32 %v1025, %v1004
      %v1027 = vadd.f32 %v1026, %v1005
      %v1028 = vadd.f32 %v1027, %v1006
      %v1029 = vadd.f32 %v1028, %v1007
      %v1030 = vrot.slane %v1029, 4
      %v1031 = vadd.f32 %v1029, %v1030
      %v1032 = vrot.slane %v1031, 2
      %v1033 = vadd.f32 %v1031, %v1032
      %v1034 = vrot.slane %v1033, 1
      %v1035 = vadd.f32 %v1033, %v1034
      %v1036 = vmul.f32 %v985, %v985
      %v1037 = vmul.f32 %v986, %v986
      %v1038 = vmul.f32 %v987, %v987
      %v1039 = vmul.f32 %v988, %v988
      %v1040 = vmul.f32 %v989, %v989
      %v1041 = vmul.f32 %v990, %v990
      %v1042 = vmul.f32 %v991, %v991
      %v1043 = vmul.f32 %v992, %v992
      %v1044 = vmul.f32 %v993, %v993
      %v1045 = vmul.f32 %v994, %v994
      %v1046 = vmul.f32 %v995, %v995
      %v1047 = vmul.f32 %v996, %v996
      %v1048 = vmul.f32 %v997, %v997
      %v1049 = vmul.f32 %v998, %v998
      %v1050 = vmul.f32 %v999, %v999
      %v1051 = vmul.f32 %v1000, %v1000
      %v1052 = vmul.f32 %v1001, %v1001
      %v1053 = vmul.f32 %v1002, %v1002
      %v1054 = vmul.f32 %v1003, %v1003
      %v1055 = vmul.f32 %v1004, %v1004
      %v1056 = vmul.f32 %v1005, %v1005
      %v1057 = vmul.f32 %v1006, %v1006
      %v1058 = vmul.f32 %v1007, %v1007
      %v1059 = vadd.f32 %v1036, %v1037
      %v1060 = vadd.f32 %v1059, %v1038
      %v1061 = vadd.f32 %v1060, %v1039
      %v1062 = vadd.f32 %v1061, %v1040
      %v1063 = vadd.f32 %v1062, %v1041
      %v1064 = vadd.f32 %v1063, %v1042
      %v1065 = vadd.f32 %v1064, %v1043
      %v1066 = vadd.f32 %v1065, %v1044
      %v1067 = vadd.f32 %v1066, %v1045
      %v1068 = vadd.f32 %v1067, %v1046
      %v1069 = vadd.f32 %v1068, %v1047
      %v1070 = vadd.f32 %v1069, %v1048
      %v1071 = vadd.f32 %v1070, %v1049
      %v1072 = vadd.f32 %v1071, %v1050
      %v1073 = vadd.f32 %v1072, %v1051
      %v1074 = vadd.f32 %v1073, %v1052
      %v1075 = vadd.f32 %v1074, %v1053
      %v1076 = vadd.f32 %v1075, %v1054
      %v1077 = vadd.f32 %v1076, %v1055
      %v1078 = vadd.f32 %v1077, %v1056
      %v1079 = vadd.f32 %v1078, %v1057
      %v1080 = vadd.f32 %v1079, %v1058
      %v1081 = vrot.slane %v1080, 4
      %v1082 = vadd.f32 %v1080, %v1081
      %v1083 = vrot.slane %v1082, 2
      %v1084 = vadd.f32 %v1082, %v1083
      %v1085 = vrot.slane %v1084, 1
      %v1086 = vadd.f32 %v1084, %v1085
      %vm1087 = vcmask 1040384
      %v1088 = vsel %vm1087, %v1035, %v1086
      %1089 = vst [vmem:[%s227] sm:$0x3] %v1088
      %p1090 = scmp.lt.s32.totalorder %s19, 1
      %s1091 = scalar_select %p1090, %s19, 1
      %p1092 = scmp.lt.s32.totalorder %s20, 1
      %s1093 = scalar_select %p1092, %s20, 1
      %s1094 = smul.addr %s1093, 23
      %s1095 = smul.addr %s1091, 46
      %s1096 = sadd.s32 %s1094, %s1095
      %s1097 = smul.addr %s1096, 4
      %s1098 = scalar_lea.vmem %s2, %s1097
      %p1099 = scmp.lt.s32.totalorder %s19, 1
      %s1100 = scalar_select %p1099, %s19, 1
      %p1101 = scmp.lt.s32.totalorder %s20, 1
      %s1102 = scalar_select %p1101, %s20, 1
      %s1103 = smul.addr %s1100, 2
      %s1104 = sadd.s32 %s1102, %s1103
      %s1105 = smul.addr %s1104, 2
      %s1106 = scalar_lea.vmem %s3, %s1105
      // Predicated region
      $region29: #{double_conv.3} parent=27 // pred_check
        %p1107 = pneg %p96
      $region30: #{double_conv.3} parent=27 // pred_check_branch
        %1109 = sbr.rel (%p1107) target = $region32
      $region31: #{double_conv.3} parent=27 // pred_region
        _
      $region32: #{double_conv.3} parent=27 // pred_fallthru
        _
      // Predicated region
      $region33: #{double_conv.3} parent=27 // pred_check
        %p1110 = pneg %p124
      $region34: #{double_conv.3} parent=27 // pred_check_branch
        %1112 = sbr.rel (%p1110) target = $region36
      $region35: #{double_conv.3} parent=27 // pred_region
        _
      $region36: #{double_conv.3} parent=27 // pred_fallthru
        _
    $region28: #{double_conv.3} parent=5 // pred_fallthru
      _
    %p1113 = scmp.le.s32.totalorder 2, %s10
    // Predicated region
    $region37: #{double_conv.3} parent=5 // pred_check
      %p1114 = pneg %p1113
    $region38: #{double_conv.3} parent=5 // pred_check_branch
      %1116 = sbr.rel (%p1114) target = $region40
    $region39: #{double_conv.3} parent=5 // pred_region
      %s1117 = ssub.s32 %s10, 2
      // Predicated region
      $region41: #{double_conv.3} parent=39 // pred_check
        %p1118 = pneg %p102
      $region42: #{double_conv.3} parent=39 // pred_check_branch
        %1120 = sbr.rel (%p1118) target = $region44
      $region43: #{double_conv.3} parent=39 // pred_region
        %p1121 = scmp.lt.s32.totalorder %s21, 1
        %s1122 = scalar_select %p1121, %s21, 1
        %p1123 = scmp.lt.s32.totalorder %s22, 1
        %s1124 = scalar_select %p1123, %s22, 1
        %s1125 = smul.addr %s1124, 23
        %s1126 = smul.addr %s1122, 46
        %s1127 = sadd.s32 %s1125, %s1126
        %s1128 = smul.addr %s1127, 4
        %s1129 = scalar_lea.vmem %s2, %s1128
      $region44: #{double_conv.3} parent=39 // pred_fallthru
        _
      // Predicated region
      $region45: #{double_conv.3} parent=39 // pred_check
        %p1130 = pneg %p130
      $region46: #{double_conv.3} parent=39 // pred_check_branch
        %1132 = sbr.rel (%p1130) target = $region48
      $region47: #{double_conv.3} parent=39 // pred_region
        %p1133 = scmp.lt.s32.totalorder %s21, 1
        %s1134 = scalar_select %p1133, %s21, 1
        %p1135 = scmp.lt.s32.totalorder %s22, 1
        %s1136 = scalar_select %p1135, %s22, 1
        %s1137 = smul.addr %s1134, 2
        %s1138 = sadd.s32 %s1136, %s1137
        %s1139 = smul.addr %s1138, 2
        %s1140 = scalar_lea.vmem %s3, %s1139
      $region48: #{double_conv.3} parent=39 // pred_fallthru
        _
    $region40: #{double_conv.3} parent=5 // pred_fallthru
      _
  $region6: #{double_conv.3} parent=0 // loop_footer
    %s14 = sadd.s32 1, %s10
  $region7: #{double_conv.3} parent=0 // loop_footer_branch
    %9 = sbr.rel target = $region3
  $region8: #{double_conv.3} parent=0 // loop_exit
    _

// kernel: double_conv.4
$region0: #{double_conv.4}
  #allocation0 [shape = 'u32[]', space=smem, size = 0x4, offset = 0x4, fixed_abs, tag = 'smem constant byte address 0x4 - core index']
  #allocation1 [shape = 'u32[144,128]{1,0:T(1,128)}', space=vmem, size = 0x12000, scoped, tag = 'internal scratch']
  #allocation2 [shape = 'bf16[184,128]{1,0:T(8,128)(2,1)}', space=vmem, size = 0xb800, scoped, tag = 'scratch operand']
  %s0 = inlined_call_operand.vmem [shape: bf16[2,2,184,128], index: 0, kind: input, shape index: {}]
  %s1 = inlined_call_operand.vmem [shape: f32[1,128], index: 1, kind: input, shape index: {}]
  %s2 = inlined_call_operand.vmem [shape: f32[1,128], index: 2, kind: input, shape index: {}]
  %s3 = inlined_call_operand.vmem [shape: bf16[9,128,128], index: 3, kind: input, shape index: {}]
  %s4 = inlined_call_operand.vmem [shape: bf16[2,2,144,128], index: 4, kind: output, shape index: {0}]
  %s5 = inlined_call_operand.vmem [shape: f32[2,2,2,128], index: 5, kind: output, shape index: {1}]
  %6 = xla_tuple %s4, %s5
  %s7 = sld [smem:[#allocation0]]
  $region61: #{double_conv.4} parent=0
    _
  %s9 = ssub.s32 1, %s7
  %s10 = scalar_select 0, %s9, %s7
  loop: start=0, step=1, limit=6
  $region2: #{double_conv.4} parent=0 // loop_pre_header
    _
  $region3: #{double_conv.4} parent=0 // loop_header
    %s12 = sphi 0, %s16
    %p13 = scmp.ge.s32.totalorder %s12, 6
    %s19 = sphi 0, %s38
    %s20 = sphi 0, %s34
    %s21 = sphi 0, %s30
    %s22 = sphi 0, %s19
    %s23 = sphi 0, %s20
    %s24 = sphi 0, %s21
    %s25 = sphi 0, %s22
    %s26 = sphi 0, %s23
    %s27 = sphi 0, %s24
    %s43 = sphi 0, %s45
    %s46 = sphi 0, %s43
    %s47 = sphi 0, %s46
    %s63 = sphi 0, %s47
    %s67 = sphi 0, %s67
    %s69 = sphi 0, %s67
    %s70 = sphi 0, %s69
    %s84 = sphi 0, %s70
    %s88 = sphi 0, %s88
    %s90 = sphi 0, %s88
    %s91 = sphi 0, %s90
    %s105 = sphi 0, %s91
    %s111 = sphi 0, %s113
    %s114 = sphi 0, %s111
    %s115 = sphi 0, %s114
    %s131 = sphi 0, %s115
    %s141 = sphi 0, %s143
    %s144 = sphi 0, %s141
    %s145 = sphi 0, %s144
    %s161 = sphi 0, %s145
    %s171 = sphi 0, %s173
    %s174 = sphi 0, %s171
    %s175 = sphi 0, %s174
    %s191 = sphi 0, %s175
  $region4: #{double_conv.4} parent=0 // loop_header_branch
    %15 = sbr.rel (%p13) target = $region8
  $region5: #{double_conv.4} parent=0 // loop_body
    %s17 = ssub.s32 %s12, 1
    %s18 = ssub.s32 %s12, 2
    %s28 = sadd.s32 1, %s21
    %p29 = scmp.ge.s32.totalorder %s28, 1
    %s30 = scalar_select %p29, 0, %s28
    %s31 = sadd.s32 1, %s20
    %s32 = scalar_select %p29, %s31, %s20
    %p33 = scmp.ge.s32.totalorder %s32, 2
    %s34 = scalar_select %p33, 0, %s32
    %s35 = sadd.s32 1, %s19
    %s36 = scalar_select %p33, %s35, %s19
    %p37 = scmp.ge.s32.totalorder %s36, 2
    %s38 = scalar_select %p37, 0, %s36
    %s39 = ssub.s32 %s19, %s38
    %s40 = ssub.s32 %s20, %s34
    %s41 = sor.u32 %s39, %s40
    %p42 = scmp.eq.s32.totalorder %s41, 0
    %s44 = sadd.s32 %s43, 1
    %s45 = scalar_select %p42, %s43, %s44
    %p48 = pneg %p42
    %p49 = scmp.eq.s32.totalorder %s12, 3
    %p50 = por %p48, %p49
    %p51 = scmp.ne.s32.totalorder %s43, %s46
    %p52 = scmp.eq.s32.totalorder %s12, 0
    %p53 = por %p51, %p52
    %p54 = scmp.ne.s32.totalorder %s43, %s46
    %p55 = scmp.eq.s32.totalorder %s17, 3
    %p56 = por %p54, %p55
    %p57 = scmp.ne.s32.totalorder %s46, %s47
    %p58 = scmp.eq.s32.totalorder %s17, 0
    %p59 = por %p57, %p58
    %p60 = scmp.ne.s32.totalorder %s46, %s47
    %p61 = scmp.eq.s32.totalorder %s18, 3
    %p62 = por %p60, %p61
    %p64 = scmp.ne.s32.totalorder %s47, %s63
    %p65 = scmp.eq.s32.totalorder %s18, 0
    %p66 = por %p64, %p65
    %s68 = sadd.s32 %s67, 1
    %p71 = scmp.eq.s32.totalorder %s12, 3
    %p72 = scmp.ne.s32.totalorder %s67, %s69
    %p73 = scmp.eq.s32.totalorder %s12, 0
    %p74 = por %p72, %p73
    %p75 = scmp.ne.s32.totalorder %s67, %s69
    %p76 = scmp.eq.s32.totalorder %s17, 3
    %p77 = por %p75, %p76
    %p78 = scmp.ne.s32.totalorder %s69, %s70
    %p79 = scmp.eq.s32.totalorder %s17, 0
    %p80 = por %p78, %p79
    %p81 = scmp.ne.s32.totalorder %s69, %s70
    %p82 = scmp.eq.s32.totalorder %s18, 3
    %p83 = por %p81, %p82
    %p85 = scmp.ne.s32.totalorder %s70, %s84
    %p86 = scmp.eq.s32.totalorder %s18, 0
    %p87 = por %p85, %p86
    %s89 = sadd.s32 %s88, 1
    %p92 = scmp.eq.s32.totalorder %s12, 3
    %p93 = scmp.ne.s32.totalorder %s88, %s90
    %p94 = scmp.eq.s32.totalorder %s12, 0
    %p95 = por %p93, %p94
    %p96 = scmp.ne.s32.totalorder %s88, %s90
    %p97 = scmp.eq.s32.totalorder %s17, 3
    %p98 = por %p96, %p97
    %p99 = scmp.ne.s32.totalorder %s90, %s91
    %p100 = scmp.eq.s32.totalorder %s17, 0
    %p101 = por %p99, %p100
    %p102 = scmp.ne.s32.totalorder %s90, %s91
    %p103 = scmp.eq.s32.totalorder %s18, 3
    %p104 = por %p102, %p103
    %p106 = scmp.ne.s32.totalorder %s91, %s105
    %p107 = scmp.eq.s32.totalorder %s18, 0
    %p108 = por %p106, %p107
    %s109 = ssub.s32 %s21, %s30
    %p110 = scmp.eq.s32.totalorder %s109, 0
    %s112 = sadd.s32 %s111, 1
    %s113 = scalar_select %p110, %s111, %s112
    %p116 = pneg %p110
    %p117 = scmp.eq.s32.totalorder %s12, 3
    %p118 = por %p116, %p117
    %p119 = scmp.ne.s32.totalorder %s111, %s114
    %p120 = scmp.eq.s32.totalorder %s12, 0
    %p121 = por %p119, %p120
    %p122 = scmp.ne.s32.totalorder %s111, %s114
    %p123 = scmp.eq.s32.totalorder %s17, 3
    %p124 = por %p122, %p123
    %p125 = scmp.ne.s32.totalorder %s114, %s115
    %p126 = scmp.eq.s32.totalorder %s17, 0
    %p127 = por %p125, %p126
    %p128 = scmp.ne.s32.totalorder %s114, %s115
    %p129 = scmp.eq.s32.totalorder %s18, 3
    %p130 = por %p128, %p129
    %p132 = scmp.ne.s32.totalorder %s115, %s131
    %p133 = scmp.eq.s32.totalorder %s18, 0
    %p134 = por %p132, %p133
    %s135 = ssub.s32 %s19, %s38
    %s136 = ssub.s32 %s20, %s34
    %s137 = sor.u32 %s135, %s136
    %s138 = ssub.s32 %s21, %s30
    %s139 = sor.u32 %s137, %s138
    %p140 = scmp.eq.s32.totalorder %s139, 0
    %s142 = sadd.s32 %s141, 1
    %s143 = scalar_select %p140, %s141, %s142
    %p146 = pneg %p140
    %p147 = scmp.eq.s32.totalorder %s12, 3
    %p148 = por %p146, %p147
    %p149 = scmp.ne.s32.totalorder %s141, %s144
    %p150 = scmp.eq.s32.totalorder %s12, 0
    %p151 = por %p149, %p150
    %p152 = scmp.ne.s32.totalorder %s141, %s144
    %p153 = scmp.eq.s32.totalorder %s17, 3
    %p154 = por %p152, %p153
    %p155 = scmp.ne.s32.totalorder %s144, %s145
    %p156 = scmp.eq.s32.totalorder %s17, 0
    %p157 = por %p155, %p156
    %p158 = scmp.ne.s32.totalorder %s144, %s145
    %p159 = scmp.eq.s32.totalorder %s18, 3
    %p160 = por %p158, %p159
    %p162 = scmp.ne.s32.totalorder %s145, %s161
    %p163 = scmp.eq.s32.totalorder %s18, 0
    %p164 = por %p162, %p163
    %s165 = ssub.s32 %s19, %s38
    %s166 = ssub.s32 %s20, %s34
    %s167 = sor.u32 %s165, %s166
    %s168 = ssub.s32 %s21, %s30
    %s169 = sor.u32 %s167, %s168
    %p170 = scmp.eq.s32.totalorder %s169, 0
    %s172 = sadd.s32 %s171, 1
    %s173 = scalar_select %p170, %s171, %s172
    %p176 = pneg %p170
    %p177 = scmp.eq.s32.totalorder %s12, 3
    %p178 = por %p176, %p177
    %p179 = scmp.ne.s32.totalorder %s171, %s174
    %p180 = scmp.eq.s32.totalorder %s12, 0
    %p181 = por %p179, %p180
    %p182 = scmp.ne.s32.totalorder %s171, %s174
    %p183 = scmp.eq.s32.totalorder %s17, 3
    %p184 = por %p182, %p183
    %p185 = scmp.ne.s32.totalorder %s174, %s175
    %p186 = scmp.eq.s32.totalorder %s17, 0
    %p187 = por %p185, %p186
    %p188 = scmp.ne.s32.totalorder %s174, %s175
    %p189 = scmp.eq.s32.totalorder %s18, 3
    %p190 = por %p188, %p189
    %p192 = scmp.ne.s32.totalorder %s175, %s191
    %p193 = scmp.eq.s32.totalorder %s18, 0
    %p194 = por %p192, %p193
    %p195 = scmp.le.s32.totalorder 1, %s12
    %p196 = scmp.lt.s32.totalorder %s12, 5
    %p197 = pnand %p195, %p196
    %p198 = pneg %p197
    // Predicated region
    $region9: #{double_conv.4} parent=5 // pred_check
      _
    $region10: #{double_conv.4} parent=5 // pred_check_branch
      %200 = sbr.rel (%p197) target = $region12
    $region11: #{double_conv.4} parent=5 // pred_region
      %s201 = ssub.s32 %s12, 1
      // Predicated region
      $region13: #{double_conv.4} parent=11 // pred_check
        %p202 = pneg %p80
      $region14: #{double_conv.4} parent=11 // pred_check_branch
        %204 = sbr.rel (%p202) target = $region16
      $region15: #{double_conv.4} parent=11 // pred_region
        _
      $region16: #{double_conv.4} parent=11 // pred_fallthru
        _
      // Predicated region
      $region17: #{double_conv.4} parent=11 // pred_check
        %p205 = pneg %p101
      $region18: #{double_conv.4} parent=11 // pred_check_branch
        %207 = sbr.rel (%p205) target = $region20
      $region19: #{double_conv.4} parent=11 // pred_region
        _
      $region20: #{double_conv.4} parent=11 // pred_fallthru
        _
      // Predicated region
      $region21: #{double_conv.4} parent=11 // pred_check
        %p208 = pneg %p127
      $region22: #{double_conv.4} parent=11 // pred_check_branch
        %210 = sbr.rel (%p208) target = $region24
      $region23: #{double_conv.4} parent=11 // pred_region
        %p211 = scmp.lt.s32.totalorder %s24, 0
        %s212 = scalar_select %p211, %s24, 0
        %s213 = smul.addr %s212, 4
        %s214 = scalar_lea.vmem %s3, %s213
      $region24: #{double_conv.4} parent=11 // pred_fallthru
        _
    $region12: #{double_conv.4} parent=5 // pred_fallthru
      _
    %p215 = scmp.lt.s32.totalorder %s12, 4
    // Predicated region
    $region25: #{double_conv.4} parent=5 // pred_check
      %p216 = pneg %p215
    $region26: #{double_conv.4} parent=5 // pred_check_branch
      %218 = sbr.rel (%p216) target = $region28
    $region27: #{double_conv.4} parent=5 // pred_region
      // Predicated region
      $region29: #{double_conv.4} parent=27 // pred_check
        %p219 = pneg %p53
      $region30: #{double_conv.4} parent=27 // pred_check_branch
        %221 = sbr.rel (%p219) target = $region32
      $region31: #{double_conv.4} parent=27 // pred_region
        %p222 = scmp.lt.s32.totalorder %s19, 1
        %s223 = scalar_select %p222, %s19, 1
        %p224 = scmp.lt.s32.totalorder %s20, 1
        %s225 = scalar_select %p224, %s20, 1
        %s226 = smul.addr %s225, 23
        %s227 = smul.addr %s223, 46
        %s228 = sadd.s32 %s226, %s227
        %s229 = smul.addr %s228, 4
        %s230 = scalar_lea.vmem %s0, %s229
      $region32: #{double_conv.4} parent=27 // pred_fallthru
        _
    $region28: #{double_conv.4} parent=5 // pred_fallthru
      _
    %p231 = scmp.le.s32.totalorder 1, %s12
    %p232 = scmp.lt.s32.totalorder %s12, 5
    %p233 = pnand %p231, %p232
    %p234 = pneg %p233
    // Predicated region
    $region33: #{double_conv.4} parent=5 // pred_check
      _
    $region34: #{double_conv.4} parent=5 // pred_check_branch
      %236 = sbr.rel (%p233) target = $region36
    $region35: #{double_conv.4} parent=5 // pred_region
      %s237 = ssub.s32 %s12, 1
      %p238 = scmp.lt.s32.totalorder %s22, 1
      %s239 = scalar_select %p238, %s22, 1
      %p240 = scmp.lt.s32.totalorder %s23, 1
      %s241 = scalar_select %p240, %s23, 1
      %s242 = smul.addr %s241, 23
      %s243 = smul.addr %s239, 46
      %s244 = sadd.s32 %s242, %s243
      %s245 = smul.addr %s244, 4
      %s246 = scalar_lea.vmem %s0, %s245
      %p247 = pneg %p59
      %p248 = pneg %p56
      %p249 = pneg %p80
      %p250 = pneg %p77
      %p251 = pneg %p101
      %p252 = pneg %p98
      %p253 = scmp.lt.s32.totalorder %s24, 0
      %s254 = scalar_select %p253, %s24, 0
      %s255 = smul.addr %s254, 4
      %s256 = scalar_lea.vmem %s3, %s255
      %p257 = pneg %p127
      %p258 = pneg %p124
      %p259 = pneg %p157
      %p260 = pneg %p154
      %p261 = scmp.lt.s32.totalorder %s22, 1
      %s262 = scalar_select %p261, %s22, 1
      %p263 = scmp.lt.s32.totalorder %s23, 1
      %s264 = scalar_select %p263, %s23, 1
      %p265 = scmp.lt.s32.totalorder %s24, 0
      %s266 = scalar_select %p265, %s24, 0
      %s267 = smul.addr %s264, 18
      %s268 = sadd.s32 %s266, %s267
      %s269 = smul.addr %s262, 36
      %s270 = sadd.s32 %s268, %s269
      %s271 = smul.addr %s270, 4
      %s272 = scalar_lea.vmem %s4, %s271
      %p273 = pneg %p187
      %p274 = pneg %p184
      %p275 = scmp.lt.s32.totalorder %s22, 1
      %s276 = scalar_select %p275, %s22, 1
      %p277 = scmp.lt.s32.totalorder %s23, 1
      %s278 = scalar_select %p277, %s23, 1
      %p279 = scmp.lt.s32.totalorder %s24, 0
      %s280 = scalar_select %p279, %s24, 0
      %s281 = sadd.s32 %s280, %s278
      %s282 = smul.addr %s276, 2
      %s283 = sadd.s32 %s281, %s282
      %s284 = smul.addr %s283, 2
      %s285 = scalar_lea.vmem %s5, %s284
      %p286 = scmp.lt.s32.totalorder %s22, 1
      %s287 = scalar_select %p286, %s22, 1
      %p288 = scmp.lt.s32.totalorder %s23, 1
      %s289 = scalar_select %p288, %s23, 1
      %s290 = smul.addr %s289, 23
      %s291 = smul.addr %s287, 46
      %s292 = sadd.s32 %s290, %s291
      %s293 = smul.addr %s292, 4
      %s294 = scalar_lea.vmem %s0, %s293
      %p295 = scmp.lt.s32.totalorder %s24, 0
      %s296 = scalar_select %p295, %s24, 0
      %s297 = smul.addr %s296, 4
      %s298 = scalar_lea.vmem %s3, %s297
      %p299 = scmp.lt.s32.totalorder %s22, 1
      %s300 = scalar_select %p299, %s22, 1
      %p301 = scmp.lt.s32.totalorder %s23, 1
      %s302 = scalar_select %p301, %s23, 1
      %p303 = scmp.lt.s32.totalorder %s24, 0
      %s304 = scalar_select %p303, %s24, 0
      %s305 = smul.addr %s302, 18
      %s306 = sadd.s32 %s304, %s305
      %s307 = smul.addr %s300, 36
      %s308 = sadd.s32 %s306, %s307
      %s309 = smul.addr %s308, 4
      %s310 = scalar_lea.vmem %s4, %s309
      %p311 = scmp.lt.s32.totalorder %s22, 1
      %s312 = scalar_select %p311, %s22, 1
      %p313 = scmp.lt.s32.totalorder %s23, 1
      %s314 = scalar_select %p313, %s23, 1
      %p315 = scmp.lt.s32.totalorder %s24, 0
      %s316 = scalar_select %p315, %s24, 0
      %s317 = sadd.s32 %s316, %s314
      %s318 = smul.addr %s312, 2
      %s319 = sadd.s32 %s317, %s318
      %s320 = smul.addr %s319, 2
      %s321 = scalar_lea.vmem %s5, %s320
      %p323 = scmp.eq.s32.totalorder %s24, 0
      // Predicated region
      $region37: #{double_conv.4} parent=35 // pred_check
        %p324 = pneg %p323
      $region38: #{double_conv.4} parent=35 // pred_check_branch
        %326 = sbr.rel (%p324) target = $region40
      $region39: #{double_conv.4} parent=35 // pred_region
        %v327 = vld [vmem:[%s294] sm:$0xf]
        %v328 = vld [vmem:[%s294 + $0x4] sm:$0xf]
        %v329 = vld [vmem:[%s294 + $0x8] sm:$0xf]
        %v330 = vld [vmem:[%s294 + $0xc] sm:$0xf]
        %v331 = vld [vmem:[%s294 + $0x10] sm:$0xf]
        %v332 = vld [vmem:[%s294 + $0x14] sm:$0xf]
        %v333 = vld [vmem:[%s294 + $0x18] sm:$0xf]
        %v334 = vld [vmem:[%s294 + $0x1c] sm:$0xf]
        %v335 = vld [vmem:[%s294 + $0x20] sm:$0xf]
        %v336 = vld [vmem:[%s294 + $0x24] sm:$0xf]
        %v337 = vld [vmem:[%s294 + $0x28] sm:$0xf]
        %v338 = vld [vmem:[%s294 + $0x2c] sm:$0xf]
        %v339 = vld [vmem:[%s294 + $0x30] sm:$0xf]
        %v340 = vld [vmem:[%s294 + $0x34] sm:$0xf]
        %v341 = vld [vmem:[%s294 + $0x38] sm:$0xf]
        %v342 = vld [vmem:[%s294 + $0x3c] sm:$0xf]
        %v343 = vld [vmem:[%s294 + $0x40] sm:$0xf]
        %v344 = vld [vmem:[%s294 + $0x44] sm:$0xf]
        %v345 = vld [vmem:[%s294 + $0x48] sm:$0xf]
        %v346 = vld [vmem:[%s294 + $0x4c] sm:$0xf]
        %v347 = vld [vmem:[%s294 + $0x50] sm:$0xf]
        %v348 = vld [vmem:[%s294 + $0x54] sm:$0xf]
        %v349 = vld [vmem:[%s294 + $0x58] sm:$0xf]
        %v350 = vunpack.c.l.bf16 %v327
        %v351 = vunpack.c.l.bf16 %v328
        %v352 = vunpack.c.l.bf16 %v329
        %v353 = vunpack.c.l.bf16 %v330
        %v354 = vunpack.c.l.bf16 %v331
        %v355 = vunpack.c.l.bf16 %v332
        %v356 = vunpack.c.l.bf16 %v333
        %v357 = vunpack.c.l.bf16 %v334
        %v358 = vunpack.c.l.bf16 %v335
        %v359 = vunpack.c.l.bf16 %v336
        %v360 = vunpack.c.l.bf16 %v337
        %v361 = vunpack.c.l.bf16 %v338
        %v362 = vunpack.c.l.bf16 %v339
        %v363 = vunpack.c.l.bf16 %v340
        %v364 = vunpack.c.l.bf16 %v341
        %v365 = vunpack.c.l.bf16 %v342
        %v366 = vunpack.c.l.bf16 %v343
        %v367 = vunpack.c.l.bf16 %v344
        %v368 = vunpack.c.l.bf16 %v345
        %v369 = vunpack.c.l.bf16 %v346
        %v370 = vunpack.c.l.bf16 %v347
        %v371 = vunpack.c.l.bf16 %v348
        %v372 = vunpack.c.l.bf16 %v349
        %v373 = vld [vmem:[%s1] sm:$0x1]
        %v375 = vlaneseq
        %v376 = vshrl.u32 %v375, 7
        %v377 = vsub.s32 0, %v376
        %v378 = vrot.slane %v373, %v377
        %v380 = vmul.f32 %v350, %v378
        %v381 = vmul.f32 %v351, %v378
        %v382 = vmul.f32 %v352, %v378
        %v383 = vmul.f32 %v353, %v378
        %v384 = vmul.f32 %v354, %v378
        %v385 = vmul.f32 %v355, %v378
        %v386 = vmul.f32 %v356, %v378
        %v387 = vmul.f32 %v357, %v378
        %v388 = vmul.f32 %v358, %v378
        %v389 = vmul.f32 %v359, %v378
        %v390 = vmul.f32 %v360, %v378
        %v391 = vmul.f32 %v361, %v378
        %v392 = vmul.f32 %v362, %v378
        %v393 = vmul.f32 %v363, %v378
        %v394 = vmul.f32 %v364, %v378
        %v395 = vmul.f32 %v365, %v378
        %v396 = vmul.f32 %v366, %v378
        %v397 = vmul.f32 %v367, %v378
        %v398 = vmul.f32 %v368, %v378
        %v399 = vmul.f32 %v369, %v378
        %v400 = vmul.f32 %v370, %v378
        %v401 = vmul.f32 %v371, %v378
        %v402 = vmul.f32 %v372, %v378
        %v403 = vld [vmem:[%s2] sm:$0x1]
        %v405 = vlaneseq
        %v406 = vshrl.u32 %v405, 7
        %v407 = vsub.s32 0, %v406
        %v408 = vrot.slane %v403, %v407
        %v410 = vadd.f32 %v380, %v408
        %v411 = vadd.f32 %v381, %v408
        %v412 = vadd.f32 %v382, %v408
        %v413 = vadd.f32 %v383, %v408
        %v414 = vadd.f32 %v384, %v408
        %v415 = vadd.f32 %v385, %v408
        %v416 = vadd.f32 %v386, %v408
        %v417 = vadd.f32 %v387, %v408
        %v418 = vadd.f32 %v388, %v408
        %v419 = vadd.f32 %v389, %v408
        %v420 = vadd.f32 %v390, %v408
        %v421 = vadd.f32 %v391, %v408
        %v422 = vadd.f32 %v392, %v408
        %v423 = vadd.f32 %v393, %v408
        %v424 = vadd.f32 %v394, %v408
        %v425 = vadd.f32 %v395, %v408
        %v426 = vadd.f32 %v396, %v408
        %v427 = vadd.f32 %v397, %v408
        %v428 = vadd.f32 %v398, %v408
        %v429 = vadd.f32 %v399, %v408
        %v430 = vadd.f32 %v400, %v408
        %v431 = vadd.f32 %v401, %v408
        %v432 = vadd.f32 %v402, %v408
        %vm433 = vcmp.ge.f32.partialorder %v410, 0.0
        %vm434 = vcmp.ge.f32.partialorder %v411, 0.0
        %vm435 = vcmp.ge.f32.partialorder %v412, 0.0
        %vm436 = vcmp.ge.f32.partialorder %v413, 0.0
        %vm437 = vcmp.ge.f32.partialorder %v414, 0.0
        %vm438 = vcmp.ge.f32.partialorder %v415, 0.0
        %vm439 = vcmp.ge.f32.partialorder %v416, 0.0
        %vm440 = vcmp.ge.f32.partialorder %v417, 0.0
        %vm441 = vcmp.ge.f32.partialorder %v418, 0.0
        %vm442 = vcmp.ge.f32.partialorder %v419, 0.0
        %vm443 = vcmp.ge.f32.partialorder %v420, 0.0
        %vm444 = vcmp.ge.f32.partialorder %v421, 0.0
        %vm445 = vcmp.ge.f32.partialorder %v422, 0.0
        %vm446 = vcmp.ge.f32.partialorder %v423, 0.0
        %vm447 = vcmp.ge.f32.partialorder %v424, 0.0
        %vm448 = vcmp.ge.f32.partialorder %v425, 0.0
        %vm449 = vcmp.ge.f32.partialorder %v426, 0.0
        %vm450 = vcmp.ge.f32.partialorder %v427, 0.0
        %vm451 = vcmp.ge.f32.partialorder %v428, 0.0
        %vm452 = vcmp.ge.f32.partialorder %v429, 0.0
        %vm453 = vcmp.ge.f32.partialorder %v430, 0.0
        %vm454 = vcmp.ge.f32.partialorder %v431, 0.0
        %vm455 = vcmp.ge.f32.partialorder %v432, 0.0
        %v456 = vmul.f32 %v410, 0.01
        %v457 = vmul.f32 %v411, 0.01
        %v458 = vmul.f32 %v412, 0.01
        %v459 = vmul.f32 %v413, 0.01
        %v460 = vmul.f32 %v414, 0.01
        %v461 = vmul.f32 %v415, 0.01
        %v462 = vmul.f32 %v416, 0.01
        %v463 = vmul.f32 %v417, 0.01
        %v464 = vmul.f32 %v418, 0.01
        %v465 = vmul.f32 %v419, 0.01
        %v466 = vmul.f32 %v420, 0.01
        %v467 = vmul.f32 %v421, 0.01
        %v468 = vmul.f32 %v422, 0.01
        %v469 = vmul.f32 %v423, 0.01
        %v470 = vmul.f32 %v424, 0.01
        %v471 = vmul.f32 %v425, 0.01
        %v472 = vmul.f32 %v426, 0.01
        %v473 = vmul.f32 %v427, 0.01
        %v474 = vmul.f32 %v428, 0.01
        %v475 = vmul.f32 %v429, 0.01
        %v476 = vmul.f32 %v430, 0.01
        %v477 = vmul.f32 %v431, 0.01
        %v478 = vmul.f32 %v432, 0.01
        %v479 = vsel %vm433, %v410, %v456
        %v480 = vsel %vm434, %v411, %v457
        %v481 = vsel %vm435, %v412, %v458
        %v482 = vsel %vm436, %v413, %v459
        %v483 = vsel %vm437, %v414, %v460
        %v484 = vsel %vm438, %v415, %v461
        %v485 = vsel %vm439, %v416, %v462
        %v486 = vsel %vm440, %v417, %v463
        %v487 = vsel %vm441, %v418, %v464
        %v488 = vsel %vm442, %v419, %v465
        %v489 = vsel %vm443, %v420, %v466
        %v490 = vsel %vm444, %v421, %v467
        %v491 = vsel %vm445, %v422, %v468
        %v492 = vsel %vm446, %v423, %v469
        %v493 = vsel %vm447, %v424, %v470
        %v494 = vsel %vm448, %v425, %v471
        %v495 = vsel %vm449, %v426, %v472
        %v496 = vsel %vm450, %v427, %v473
        %v497 = vsel %vm451, %v428, %v474
        %v498 = vsel %vm452, %v429, %v475
        %v499 = vsel %vm453, %v430, %v476
        %v500 = vsel %vm454, %v431, %v477
        %v501 = vsel %vm455, %v432, %v478
        %v502 = vpack.c.bf16 %v480, %v479
        %v503 = vpack.c.bf16 %v482, %v481
        %v504 = vpack.c.bf16 %v484, %v483
        %v505 = vpack.c.bf16 %v486, %v485
        %v506 = vpack.c.bf16 %v488, %v487
        %v507 = vpack.c.bf16 %v490, %v489
        %v508 = vpack.c.bf16 %v492, %v491
        %v509 = vpack.c.bf16 %v494, %v493
        %v510 = vpack.c.bf16 %v496, %v495
        %v511 = vpack.c.bf16 %v498, %v497
        %v512 = vpack.c.bf16 %v500, %v499
        %v513 = vpack.c.bf16 %v501, %v501
        %v526 = vunpack.c.l.b16 %v502
        %v527 = vunpack.c.h.b16 %v502
        %v528 = vunpack.c.l.b16 %v503
        %v529 = vunpack.c.h.b16 %v503
        %v530 = vunpack.c.l.b16 %v504
        %v531 = vunpack.c.h.b16 %v504
        %v532 = vunpack.c.l.b16 %v505
        %v533 = vunpack.c.h.b16 %v505
        %v534 = vunpack.c.l.b16 %v506
        %v535 = vunpack.c.h.b16 %v506
        %v536 = vunpack.c.l.b16 %v507
        %v537 = vunpack.c.h.b16 %v507
        %v538 = vunpack.c.l.b16 %v508
        %v539 = vunpack.c.h.b16 %v508
        %v540 = vunpack.c.l.b16 %v509
        %v541 = vunpack.c.h.b16 %v509
        %v542 = vunpack.c.l.b16 %v510
        %v543 = vunpack.c.h.b16 %v510
        %v544 = vunpack.c.l.b16 %v511
        %v545 = vunpack.c.h.b16 %v511
        %v546 = vunpack.c.l.b16 %v512
        %v547 = vunpack.c.h.b16 %v512
        %v548 = vunpack.c.l.b16 %v513
        %v549 = vpack.c.b16 %v526, %v526
        %v550 = vpack.c.b16 %v527, %v527
        %v551 = vpack.c.b16 %v528, %v528
        %v552 = vpack.c.b16 %v529, %v529
        %v553 = vpack.c.b16 %v530, %v530
        %v554 = vpack.c.b16 %v531, %v531
        %v555 = vpack.c.b16 %v532, %v532
        %v556 = vpack.c.b16 %v533, %v533
        %v557 = vpack.c.b16 %v534, %v534
        %v558 = vpack.c.b16 %v535, %v535
        %v559 = vpack.c.b16 %v536, %v536
        %v560 = vpack.c.b16 %v537, %v537
        %v561 = vpack.c.b16 %v538, %v538
        %v562 = vpack.c.b16 %v539, %v539
        %v563 = vpack.c.b16 %v540, %v540
        %v564 = vpack.c.b16 %v541, %v541
        %v565 = vpack.c.b16 %v542, %v542
        %v566 = vpack.c.b16 %v543, %v543
        %v567 = vpack.c.b16 %v544, %v544
        %v568 = vpack.c.b16 %v545, %v545
        %v569 = vpack.c.b16 %v546, %v546
        %v570 = vpack.c.b16 %v547, %v547
        %v571 = vpack.c.b16 %v548, %v548
        %595 = vst [vmem:[#allocation2] sm:$0xf] %v549
        %596 = vst [vmem:[#allocation2 + $0x4] sm:$0xf] %v550
        %597 = vst [vmem:[#allocation2 + $0x8] sm:$0xf] %v551
        %598 = vst [vmem:[#allocation2 + $0xc] sm:$0xf] %v552
        %599 = vst [vmem:[#allocation2 + $0x10] sm:$0xf] %v553
        %600 = vst [vmem:[#allocation2 + $0x14] sm:$0xf] %v554
        %601 = vst [vmem:[#allocation2 + $0x18] sm:$0xf] %v555
        %602 = vst [vmem:[#allocation2 + $0x1c] sm:$0xf] %v556
        %603 = vst [vmem:[#allocation2 + $0x20] sm:$0xf] %v557
        %604 = vst [vmem:[#allocation2 + $0x24] sm:$0xf] %v558
        %605 = vst [vmem:[#allocation2 + $0x28] sm:$0xf] %v559
        %606 = vst [vmem:[#allocation2 + $0x2c] sm:$0xf] %v560
        %607 = vst [vmem:[#allocation2 + $0x30] sm:$0xf] %v561
        %608 = vst [vmem:[#allocation2 + $0x34] sm:$0xf] %v562
        %609 = vst [vmem:[#allocation2 + $0x38] sm:$0xf] %v563
        %610 = vst [vmem:[#allocation2 + $0x3c] sm:$0xf] %v564
        %611 = vst [vmem:[#allocation2 + $0x40] sm:$0xf] %v565
        %612 = vst [vmem:[#allocation2 + $0x44] sm:$0xf] %v566
        %613 = vst [vmem:[#allocation2 + $0x48] sm:$0xf] %v567
        %614 = vst [vmem:[#allocation2 + $0x4c] sm:$0xf] %v568
        %615 = vst [vmem:[#allocation2 + $0x50] sm:$0xf] %v569
        %616 = vst [vmem:[#allocation2 + $0x54] sm:$0xf] %v570
        %617 = vst [vmem:[#allocation2 + $0x58] sm:$0xf] %v571
      $region40: #{double_conv.4} parent=35 // pred_fallthru
        _
      %v618 = vld [vmem:[#allocation2] sm:$0xf]
      %v619 = vld [vmem:[#allocation2 + $0x4] sm:$0xf]
      %v620 = vld [vmem:[#allocation2 + $0x8] sm:$0xf]
      %v621 = vld [vmem:[#allocation2 + $0xc] sm:$0xf]
      %v622 = vld [vmem:[#allocation2 + $0x10] sm:$0xf]
      %v623 = vld [vmem:[#allocation2 + $0x14] sm:$0xf]
      %v624 = vld [vmem:[#allocation2 + $0x18] sm:$0xf]
      %v625 = vld [vmem:[#allocation2 + $0x1c] sm:$0xf]
      %v626 = vld [vmem:[#allocation2 + $0x20] sm:$0xf]
      %v627 = vld [vmem:[#allocation2 + $0x24] sm:$0xf]
      %v628 = vld [vmem:[#allocation2 + $0x28] sm:$0xf]
      %v629 = vld [vmem:[#allocation2 + $0x2c] sm:$0xf]
      %v630 = vld [vmem:[#allocation2 + $0x30] sm:$0xf]
      %v631 = vld [vmem:[#allocation2 + $0x34] sm:$0xf]
      %v632 = vld [vmem:[#allocation2 + $0x38] sm:$0xf]
      %v633 = vld [vmem:[#allocation2 + $0x3c] sm:$0xf]
      %v634 = vld [vmem:[#allocation2 + $0x40] sm:$0xf]
      %v635 = vld [vmem:[#allocation2 + $0x44] sm:$0xf]
      %v636 = vld [vmem:[%s298] sm:$0xf]
      %v637 = vld [vmem:[%s298 + $0x4] sm:$0xf]
      %v638 = vld [vmem:[%s298 + $0x8] sm:$0xf]
      %v639 = vld [vmem:[%s298 + $0xc] sm:$0xf]
      %v640 = vld [vmem:[%s298 + $0x10] sm:$0xf]
      %v641 = vld [vmem:[%s298 + $0x14] sm:$0xf]
      %v642 = vld [vmem:[%s298 + $0x18] sm:$0xf]
      %v643 = vld [vmem:[%s298 + $0x1c] sm:$0xf]
      %v644 = vld [vmem:[%s298 + $0x20] sm:$0xf]
      %v645 = vld [vmem:[%s298 + $0x24] sm:$0xf]
      %v646 = vld [vmem:[%s298 + $0x28] sm:$0xf]
      %v647 = vld [vmem:[%s298 + $0x2c] sm:$0xf]
      %v648 = vld [vmem:[%s298 + $0x30] sm:$0xf]
      %v649 = vld [vmem:[%s298 + $0x34] sm:$0xf]
      %v650 = vld [vmem:[%s298 + $0x38] sm:$0xf]
      %v651 = vld [vmem:[%s298 + $0x3c] sm:$0xf]
      %v652 = vld [vmem:[#allocation2 + $0x48] sm:$0x1]
      %s653 = scalar_lea.vmem %s298, 64
      %v654 = vld [vmem:[%s653] sm:$0xf]
      %v655 = vld [vmem:[%s653 + $0x4] sm:$0xf]
      %v656 = vld [vmem:[%s653 + $0x8] sm:$0xf]
      %v657 = vld [vmem:[%s653 + $0xc] sm:$0xf]
      %v658 = vld [vmem:[%s653 + $0x10] sm:$0xf]
      %v659 = vld [vmem:[%s653 + $0x14] sm:$0xf]
      %v660 = vld [vmem:[%s653 + $0x18] sm:$0xf]
      %v661 = vld [vmem:[%s653 + $0x1c] sm:$0xf]
      %v662 = vld [vmem:[%s653 + $0x20] sm:$0xf]
      %v663 = vld [vmem:[%s653 + $0x24] sm:$0xf]
      %v664 = vld [vmem:[%s653 + $0x28] sm:$0xf]
      %v665 = vld [vmem:[%s653 + $0x2c] sm:$0xf]
      %v666 = vld [vmem:[%s653 + $0x30] sm:$0xf]
      %v667 = vld [vmem:[%s653 + $0x34] sm:$0xf]
      %v668 = vld [vmem:[%s653 + $0x38] sm:$0xf]
      %v669 = vld [vmem:[%s653 + $0x3c] sm:$0xf]
      %v689 = vunpack.c.l.b16 %v618
      %v690 = vunpack.c.l.b16 %v619
      %v691 = vunpack.c.l.b16 %v620
      %v692 = vunpack.c.l.b16 %v621
      %v693 = vunpack.c.l.b16 %v622
      %v694 = vunpack.c.l.b16 %v623
      %v695 = vunpack.c.l.b16 %v624
      %v696 = vunpack.c.l.b16 %v625
      %v697 = vunpack.c.l.b16 %v626
      %v698 = vunpack.c.l.b16 %v627
      %v699 = vunpack.c.l.b16 %v628
      %v700 = vunpack.c.l.b16 %v629
      %v701 = vunpack.c.l.b16 %v630
      %v702 = vunpack.c.l.b16 %v631
      %v703 = vunpack.c.l.b16 %v632
      %v704 = vunpack.c.l.b16 %v633
      %v705 = vunpack.c.l.b16 %v634
      %v706 = vunpack.c.l.b16 %v635
      %v707 = vunpack.c.l.b16 %v652
      %v708 = vpack.c.b16 %v690, %v689
      %v709 = vpack.c.b16 %v692, %v691
      %v710 = vpack.c.b16 %v694, %v693
      %v711 = vpack.c.b16 %v696, %v695
      %v712 = vpack.c.b16 %v698, %v697
      %v713 = vpack.c.b16 %v700, %v699
      %v714 = vpack.c.b16 %v702, %v701
      %v715 = vpack.c.b16 %v704, %v703
      %v716 = vpack.c.b16 %v706, %v705
      %v717 = vpack.c.b16 %v707, %v707
      %vm718 = vsmask.f32 7424
      %v720 = vshrl.u32 %v708, 16
      %v722 = vshll.u32 %v708, 16
      %v724 = vrot.slane %v722, 1
      %v725 = vor.u32 %v720, %v724
      %v727 = vshll.u32 %v709, 16
      %v729 = vrot.slane %v727, 1
      %v730 = vsel %vm718, %v725, %v729
      %v731 = vshrl.u32 %v709, 16
      %v733 = vor.u32 %v731, %v729
      %v735 = vshll.u32 %v710, 16
      %v737 = vrot.slane %v735, 1
      %v738 = vsel %vm718, %v733, %v737
      %v739 = vshrl.u32 %v710, 16
      %v741 = vor.u32 %v739, %v737
      %v743 = vshll.u32 %v711, 16
      %v745 = vrot.slane %v743, 1
      %v746 = vsel %vm718, %v741, %v745
      %v747 = vshrl.u32 %v711, 16
      %v749 = vor.u32 %v747, %v745
      %v751 = vshll.u32 %v712, 16
      %v753 = vrot.slane %v751, 1
      %v754 = vsel %vm718, %v749, %v753
      %v755 = vshrl.u32 %v712, 16
      %v757 = vor.u32 %v755, %v753
      %v759 = vshll.u32 %v713, 16
      %v761 = vrot.slane %v759, 1
      %v762 = vsel %vm718, %v757, %v761
      %v763 = vshrl.u32 %v713, 16
      %v765 = vor.u32 %v763, %v761
      %v767 = vshll.u32 %v714, 16
      %v769 = vrot.slane %v767, 1
      %v770 = vsel %vm718, %v765, %v769
      %v771 = vshrl.u32 %v714, 16
      %v773 = vor.u32 %v771, %v769
      %v775 = vshll.u32 %v715, 16
      %v777 = vrot.slane %v775, 1
      %v778 = vsel %vm718, %v773, %v777
      %v779 = vshrl.u32 %v715, 16
      %v781 = vor.u32 %v779, %v777
      %v783 = vshll.u32 %v716, 16
      %v785 = vrot.slane %v783, 1
      %v786 = vsel %vm718, %v781, %v785
      %v787 = vshrl.u32 %v716, 16
      %v789 = vor.u32 %v787, %v785
      %v791 = vshll.u32 %v717, 16
      %v793 = vrot.slane %v791, 1
      %v794 = vsel %vm718, %v789, %v793
      %v820 = vunpack.c.l.b16 %v654
      %v821 = vunpack.c.l.b16 %v655
      %v822 = vunpack.c.l.b16 %v656
      %v823 = vunpack.c.l.b16 %v657
      %v824 = vunpack.c.l.b16 %v658
      %v825 = vunpack.c.l.b16 %v659
      %v826 = vunpack.c.l.b16 %v660
      %v827 = vunpack.c.l.b16 %v661
      %v828 = vunpack.c.l.b16 %v662
      %v829 = vunpack.c.l.b16 %v663
      %v830 = vunpack.c.l.b16 %v664
      %v831 = vunpack.c.l.b16 %v665
      %v832 = vunpack.c.l.b16 %v666
      %v833 = vunpack.c.l.b16 %v667
      %v834 = vunpack.c.l.b16 %v668
      %v835 = vunpack.c.l.b16 %v669
      %v836 = vpack.c.b16 %v821, %v820
      %v837 = vpack.c.b16 %v823, %v822
      %v838 = vpack.c.b16 %v825, %v824
      %v839 = vpack.c.b16 %v827, %v826
      %v840 = vpack.c.b16 %v829, %v828
      %v841 = vpack.c.b16 %v831, %v830
      %v842 = vpack.c.b16 %v833, %v832
      %v843 = vpack.c.b16 %v835, %v834
      %852 = vmatprep.subr.bf16.mxu0 0
      %853 = vmatpush1.bf16.msra.mxu0 %v836
      %854 = vmatprep.subr.bf16.mxu0 0
      %855 = vmatpush1.bf16.msra.mxu0 %v837
      %856 = vmatprep.subr.bf16.mxu0 0
      %857 = vmatpush1.bf16.msra.mxu0 %v838
      %858 = vmatprep.subr.bf16.mxu0 0
      %859 = vmatpush1.bf16.msra.mxu0 %v839
      %860 = vmatprep.subr.bf16.mxu0 0
      %861 = vmatpush1.bf16.msra.mxu0 %v840
      %862 = vmatprep.subr.bf16.mxu0 0
      %863 = vmatpush1.bf16.msra.mxu0 %v841
      %864 = vmatprep.subr.bf16.mxu0 0
      %865 = vmatpush1.bf16.msra.mxu0 %v842
      %866 = vmatprep.subr.bf16.mxu0 0
      %867 = vmatpush1.bf16.msra.mxu0 %v843
      %868 = vmatprep.subr.bf16.mxu0 0
      %869 = vmatpush1.bf16.msra.mxu0 0
      %870 = vmatprep.subr.bf16.mxu0 0
      %871 = vmatpush1.bf16.msra.mxu0 0
      %872 = vmatprep.subr.bf16.mxu0 0
      %873 = vmatpush1.bf16.msra.mxu0 0
      %874 = vmatprep.subr.bf16.mxu0 0
      %875 = vmatpush1.bf16.msra.mxu0 0
      %876 = vmatprep.subr.bf16.mxu0 0
      %877 = vmatpush1.bf16.msra.mxu0 0
      %878 = vmatprep.subr.bf16.mxu0 0
      %879 = vmatpush1.bf16.msra.mxu0 0
      %880 = vmatprep.subr.bf16.mxu0 0
      %881 = vmatpush1.bf16.msra.mxu0 0
      %882 = vmatprep.subr.bf16.mxu0 0
      %883 = vmatpush1.bf16.msra.mxu0 0
      %884 = vmatprep.mubr.bf16.mxu0 0
      %885 = vmatmul.mubr.bf16.gmra.mrb[0].mxu0 %v730
      %v886 = vpop.f32.mrb[0].mxu0
      %v887 = vadd.f32 0.0, %v886
      %v888 = vpop.f32.mrb[0].mxu0
      %v889 = vpop.f32.mrb[0].mxu0
      %v890 = vadd.f32 0.0, %v889
      %v891 = vpop.f32.mrb[0].mxu0
      %892 = vmatprep.mubr.bf16.mxu0 0
      %893 = vmatmul.mubr.bf16.gmra.mrb[0].mxu0 %v738
      %v894 = vpop.f32.mrb[0].mxu0
      %v895 = vadd.f32 0.0, %v894
      %v896 = vpop.f32.mrb[0].mxu0
      %v897 = vpop.f32.mrb[0].mxu0
      %v898 = vadd.f32 0.0, %v897
      %v899 = vpop.f32.mrb[0].mxu0
      %900 = vmatprep.mubr.bf16.mxu0 0
      %901 = vmatmul.mubr.bf16.gmra.mrb[0].mxu0 %v746
      %v902 = vpop.f32.mrb[0].mxu0
      %v903 = vadd.f32 0.0, %v902
      %v904 = vpop.f32.mrb[0].mxu0
      %v905 = vpop.f32.mrb[0].mxu0
      %v906 = vadd.f32 0.0, %v905
      %v907 = vpop.f32.mrb[0].mxu0
      %908 = vmatprep.mubr.bf16.mxu0 0
      %909 = vmatmul.mubr.bf16.gmra.mrb[0].mxu0 %v754
      %v910 = vpop.f32.mrb[0].mxu0
      %v911 = vadd.f32 0.0, %v910
      %v912 = vpop.f32.mrb[0].mxu0
      %v913 = vpop.f32.mrb[0].mxu0
      %v914 = vadd.f32 0.0, %v913
      %v915 = vpop.f32.mrb[0].mxu0
      %916 = vmatprep.mubr.bf16.mxu0 0
      %917 = vmatmul.mubr.bf16.gmra.mrb[0].mxu0 %v762
      %v918 = vpop.f32.mrb[0].mxu0
      %v919 = vadd.f32 0.0, %v918
      %v920 = vpop.f32.mrb[0].mxu0
      %v921 = vpop.f32.mrb[0].mxu0
      %v922 = vadd.f32 0.0, %v921
      %v923 = vpop.f32.mrb[0].mxu0
      %924 = vmatprep.mubr.bf16.mxu0 0
      %925 = vmatmul.mubr.bf16.gmra.mrb[0].mxu0 %v770
      %v926 = vpop.f32.mrb[0].mxu0
      %v927 = vadd.f32 0.0, %v926
      %v928 = vpop.f32.mrb[0].mxu0
      %v929 = vpop.f32.mrb[0].mxu0
      %v930 = vadd.f32 0.0, %v929
      %v931 = vpop.f32.mrb[0].mxu0
      %932 = vmatprep.mubr.bf16.mxu0 0
      %933 = vmatmul.mubr.bf16.gmra.mrb[0].mxu0 %v778
      %v934 = vpop.f32.mrb[0].mxu0
      %v935 = vadd.f32 0.0, %v934
      %v936 = vpop.f32.mrb[0].mxu0
      %v937 = vpop.f32.mrb[0].mxu0
      %v938 = vadd.f32 0.0, %v937
      %v939 = vpop.f32.mrb[0].mxu0
      %940 = vmatprep.mubr.bf16.mxu0 0
      %941 = vmatmul.mubr.bf16.gmra.mrb[0].mxu0 %v786
      %v942 = vpop.f32.mrb[0].mxu0
      %v943 = vadd.f32 0.0, %v942
      %v944 = vpop.f32.mrb[0].mxu0
      %v945 = vpop.f32.mrb[0].mxu0
      %v946 = vadd.f32 0.0, %v945
      %v947 = vpop.f32.mrb[0].mxu0
      %948 = vmatprep.mubr.bf16.mxu0 0
      %949 = vmatmul.mubr.bf16.gmra.mrb[0].mxu0 %v794
      %v950 = vpop.f32.mrb[0].mxu0
      %v951 = vadd.f32 0.0, %v950
      %v952 = vpop.f32.mrb[0].mxu0
      %v953 = vpop.f32.mrb[0].mxu0
      %v954 = vadd.f32 0.0, %v953
      %v955 = vpop.f32.mrb[0].mxu0
      %956 = vdwg.mxu0
      %v982 = vunpack.c.l.b16 %v636
      %v983 = vunpack.c.l.b16 %v637
      %v984 = vunpack.c.l.b16 %v638
      %v985 = vunpack.c.l.b16 %v639
      %v986 = vunpack.c.l.b16 %v640
      %v987 = vunpack.c.l.b16 %v641
      %v988 = vunpack.c.l.b16 %v642
      %v989 = vunpack.c.l.b16 %v643
      %v990 = vunpack.c.l.b16 %v644
      %v991 = vunpack.c.l.b16 %v645
      %v992 = vunpack.c.l.b16 %v646
      %v993 = vunpack.c.l.b16 %v647
      %v994 = vunpack.c.l.b16 %v648
      %v995 = vunpack.c.l.b16 %v649
      %v996 = vunpack.c.l.b16 %v650
      %v997 = vunpack.c.l.b16 %v651
      %v998 = vpack.c.b16 %v983, %v982
      %v999 = vpack.c.b16 %v985, %v984
      %v1000 = vpack.c.b16 %v987, %v986
      %v1001 = vpack.c.b16 %v989, %v988
      %v1002 = vpack.c.b16 %v991, %v990
      %v1003 = vpack.c.b16 %v993, %v992
      %v1004 = vpack.c.b16 %v995, %v994
      %v1005 = vpack.c.b16 %v997, %v996
      %1014 = vmatprep.subr.bf16.mxu0 0
      %1015 = vmatpush1.bf16.msra.mxu0 %v998
      %1016 = vmatprep.subr.bf16.mxu0 0
      %1017 = vmatpush1.bf16.msra.mxu0 %v999
      %1018 = vmatprep.subr.bf16.mxu0 0
      %1019 = vmatpush1.bf16.msra.mxu0 %v1000
      %1020 = vmatprep.subr.bf16.mxu0 0
      %1021 = vmatpush1.bf16.msra.mxu0 %v1001
      %1022 = vmatprep.subr.bf16.mxu0 0
      %1023 = vmatpush1.bf16.msra.mxu0 %v1002
      %1024 = vmatprep.subr.bf16.mxu0 0
      %1025 = vmatpush1.bf16.msra.mxu0 %v1003
      %1026 = vmatprep.subr.bf16.mxu0 0
      %1027 = vmatpush1.bf16.msra.mxu0 %v1004
      %1028 = vmatprep.subr.bf16.mxu0 0
      %1029 = vmatpush1.bf16.msra.mxu0 %v1005
      %1030 = vmatprep.subr.bf16.mxu0 0
      %1031 = vmatpush1.bf16.msra.mxu0 0
      %1032 = vmatprep.subr.bf16.mxu0 0
      %1033 = vmatpush1.bf16.msra.mxu0 0
      %1034 = vmatprep.subr.bf16.mxu0 0
      %1035 = vmatpush1.bf16.msra.mxu0 0
      %1036 = vmatprep.subr.bf16.mxu0 0
      %1037 = vmatpush1.bf16.msra.mxu0 0
      %1038 = vmatprep.subr.bf16.mxu0 0
      %1039 = vmatpush1.bf16.msra.mxu0 0
      %1040 = vmatprep.subr.bf16.mxu0 0
      %1041 = vmatpush1.bf16.msra.mxu0 0
      %1042 = vmatprep.subr.bf16.mxu0 0
      %1043 = vmatpush1.bf16.msra.mxu0 0
      %1044 = vmatprep.subr.bf16.mxu0 0
      %1045 = vmatpush1.bf16.msra.mxu0 0
      %1046 = vmatprep.mubr.bf16.mxu0 0
      %1047 = vmatmul.mubr.bf16.gmra.mrb[0].mxu0 %v708
      %v1048 = vpop.f32.mrb[0].mxu0
      %v1049 = vadd.f32 %v887, %v1048
      %v1050 = vpop.f32.mrb[0].mxu0
      %v1051 = vpop.f32.mrb[0].mxu0
      %v1052 = vadd.f32 %v890, %v1051
      %v1053 = vpop.f32.mrb[0].mxu0
      %1054 = vmatprep.mubr.bf16.mxu0 0
      %1055 = vmatmul.mubr.bf16.gmra.mrb[0].mxu0 %v709
      %v1056 = vpop.f32.mrb[0].mxu0
      %v1057 = vadd.f32 %v895, %v1056
      %v1058 = vpop.f32.mrb[0].mxu0
      %v1059 = vpop.f32.mrb[0].mxu0
      %v1060 = vadd.f32 %v898, %v1059
      %v1061 = vpop.f32.mrb[0].mxu0
      %1062 = vmatprep.mubr.bf16.mxu0 0
      %1063 = vmatmul.mubr.bf16.gmra.mrb[0].mxu0 %v710
      %v1064 = vpop.f32.mrb[0].mxu0
      %v1065 = vadd.f32 %v903, %v1064
      %v1066 = vpop.f32.mrb[0].mxu0
      %v1067 = vpop.f32.mrb[0].mxu0
      %v1068 = vadd.f32 %v906, %v1067
      %v1069 = vpop.f32.mrb[0].mxu0
      %1070 = vmatprep.mubr.bf16.mxu0 0
      %1071 = vmatmul.mubr.bf16.gmra.mrb[0].mxu0 %v711
      %v1072 = vpop.f32.mrb[0].mxu0
      %v1073 = vadd.f32 %v911, %v1072
      %v1074 = vpop.f32.mrb[0].mxu0
      %v1075 = vpop.f32.mrb[0].mxu0
      %v1076 = vadd.f32 %v914, %v1075
      %v1077 = vpop.f32.mrb[0].mxu0
      %1078 = vmatprep.mubr.bf16.mxu0 0
      %1079 = vmatmul.mubr.bf16.gmra.mrb[0].mxu0 %v712
      %v1080 = vpop.f32.mrb[0].mxu0
      %v1081 = vadd.f32 %v919, %v1080
      %v1082 = vpop.f32.mrb[0].mxu0
      %v1083 = vpop.f32.mrb[0].mxu0
      %v1084 = vadd.f32 %v922, %v1083
      %v1085 = vpop.f32.mrb[0].mxu0
      %1086 = vmatprep.mubr.bf16.mxu0 0
      %1087 = vmatmul.mubr.bf16.gmra.mrb[0].mxu0 %v713
      %v1088 = vpop.f32.mrb[0].mxu0
      %v1089 = vadd.f32 %v927, %v1088
      %v1090 = vpop.f32.mrb[0].mxu0
      %v1091 = vpop.f32.mrb[0].mxu0
      %v1092 = vadd.f32 %v930, %v1091
      %v1093 = vpop.f32.mrb[0].mxu0
      %1094 = vmatprep.mubr.bf16.mxu0 0
      %1095 = vmatmul.mubr.bf16.gmra.mrb[0].mxu0 %v714
      %v1096 = vpop.f32.mrb[0].mxu0
      %v1097 = vadd.f32 %v935, %v1096
      %v1098 = vpop.f32.mrb[0].mxu0
      %v1099 = vpop.f32.mrb[0].mxu0
      %v1100 = vadd.f32 %v938, %v1099
      %v1101 = vpop.f32.mrb[0].mxu0
      %1102 = vmatprep.mubr.bf16.mxu0 0
      %1103 = vmatmul.mubr.bf16.gmra.mrb[0].mxu0 %v715
      %v1104 = vpop.f32.mrb[0].mxu0
      %v1105 = vadd.f32 %v943, %v1104
      %v1106 = vpop.f32.mrb[0].mxu0
      %v1107 = vpop.f32.mrb[0].mxu0
      %v1108 = vadd.f32 %v946, %v1107
      %v1109 = vpop.f32.mrb[0].mxu0
      %1110 = vmatprep.mubr.bf16.mxu0 0
      %1111 = vmatmul.mubr.bf16.gmra.mrb[0].mxu0 %v716
      %v1112 = vpop.f32.mrb[0].mxu0
      %v1113 = vadd.f32 %v951, %v1112
      %v1114 = vpop.f32.mrb[0].mxu0
      %v1115 = vpop.f32.mrb[0].mxu0
      %v1116 = vadd.f32 %v954, %v1115
      %v1117 = vpop.f32.mrb[0].mxu0
      %1118 = vdwg.mxu0
      %v1119 = vld [vmem:[#allocation2] sm:$0xe]
      %s1120 = scalar_lea.vmem %s298, 128
      %v1121 = vld [vmem:[%s1120] sm:$0xf]
      %v1122 = vld [vmem:[%s1120 + $0x4] sm:$0xf]
      %v1123 = vld [vmem:[%s1120 + $0x8] sm:$0xf]
      %v1124 = vld [vmem:[%s1120 + $0xc] sm:$0xf]
      %v1125 = vld [vmem:[%s1120 + $0x10] sm:$0xf]
      %v1126 = vld [vmem:[%s1120 + $0x14] sm:$0xf]
      %v1127 = vld [vmem:[%s1120 + $0x18] sm:$0xf]
      %v1128 = vld [vmem:[%s1120 + $0x1c] sm:$0xf]
      %v1129 = vld [vmem:[%s1120 + $0x20] sm:$0xf]
      %v1130 = vld [vmem:[%s1120 + $0x24] sm:$0xf]
      %v1131 = vld [vmem:[%s1120 + $0x28] sm:$0xf]
      %v1132 = vld [vmem:[%s1120 + $0x2c] sm:$0xf]
      %v1133 = vld [vmem:[%s1120 + $0x30] sm:$0xf]
      %v1134 = vld [vmem:[%s1120 + $0x34] sm:$0xf]
      %v1135 = vld [vmem:[%s1120 + $0x38] sm:$0xf]
      %v1136 = vld [vmem:[%s1120 + $0x3c] sm:$0xf]
      %v1138 = vunpack.c.l.b16 %v1119
      %v1139 = vpack.c.b16 %v690, %v1138
      %vm1140 = vcmask 1046528
      %v1141 = vrot.slane %v1139, 1
      %v1142 = vrot.slane %v709, 1
      %v1143 = vsel %vm1140, %v1141, %v1142
      %v1144 = vrot.slane %v710, 1
      %v1145 = vsel %vm1140, %v1142, %v1144
      %v1146 = vrot.slane %v711, 1
      %v1147 = vsel %vm1140, %v1144, %v1146
      %v1148 = vrot.slane %v712, 1
      %v1149 = vsel %vm1140, %v1146, %v1148
      %v1150 = vrot.slane %v713, 1
      %v1151 = vsel %vm1140, %v1148, %v1150
      %v1152 = vrot.slane %v714, 1
      %v1153 = vsel %vm1140, %v1150, %v1152
      %v1154 = vrot.slane %v715, 1
      %v1155 = vsel %vm1140, %v1152, %v1154
      %v1156 = vrot.slane %v716, 1
      %v1157 = vsel %vm1140, %v1154, %v1156
      %v1158 = vrot.slane %v717, 1
      %v1159 = vsel %vm1140, %v1156, %v1158
      %v1185 = vunpack.c.l.b16 %v1121
      %v1186 = vunpack.c.l.b16 %v1122
      %v1187 = vunpack.c.l.b16 %v1123
      %v1188 = vunpack.c.l.b16 %v1124
      %v1189 = vunpack.c.l.b16 %v1125
      %v1190 = vunpack.c.l.b16 %v1126
      %v1191 = vunpack.c.l.b16 %v1127
      %v1192 = vunpack.c.l.b16 %v1128
      %v1193 = vunpack.c.l.b16 %v1129
      %v1194 = vunpack.c.l.b16 %v1130
      %v1195 = vunpack.c.l.b16 %v1131
      %v1196 = vunpack.c.l.b16 %v1132
      %v1197 = vunpack.c.l.b16 %v1133
      %v1198 = vunpack.c.l.b16 %v1134
      %v1199 = vunpack.c.l.b16 %v1135
      %v1200 = vunpack.c.l.b16 %v1136
      %v1201 = vpack.c.b16 %v1186, %v1185
      %v1202 = vpack.c.b16 %v1188, %v1187
      %v1203 = vpack.c.b16 %v1190, %v1189
      %v1204 = vpack.c.b16 %v1192, %v1191
      %v1205 = vpack.c.b16 %v1194, %v1193
      %v1206 = vpack.c.b16 %v1196, %v1195
      %v1207 = vpack.c.b16 %v1198, %v1197
      %v1208 = vpack.c.b16 %v1200, %v1199
      %1217 = vmatprep.subr.bf16.mxu0 0
      %1218 = vmatpush1.bf16.msra.mxu0 %v1201
      %1219 = vmatprep.subr.bf16.mxu0 0
      %1220 = vmatpush1.bf16.msra.mxu0 %v1202
      %1221 = vmatprep.subr.bf16.mxu0 0
      %1222 = vmatpush1.bf16.msra.mxu0 %v1203
      %1223 = vmatprep.subr.bf16.mxu0 0
      %1224 = vmatpush1.bf16.msra.mxu0 %v1204
      %1225 = vmatprep.subr.bf16.mxu0 0
      %1226 = vmatpush1.bf16.msra.mxu0 %v1205
      %1227 = vmatprep.subr.bf16.mxu0 0
      %1228 = vmatpush1.bf16.msra.mxu0 %v1206
      %1229 = vmatprep.subr.bf16.mxu0 0
      %1230 = vmatpush1.bf16.msra.mxu0 %v1207
      %1231 = vmatprep.subr.bf16.mxu0 0
      %1232 = vmatpush1.bf16.msra.mxu0 %v1208
      %1233 = vmatprep.subr.bf16.mxu0 0
      %1234 = vmatpush1.bf16.msra.mxu0 0
      %1235 = vmatprep.subr.bf16.mxu0 0
      %1236 = vmatpush1.bf16.msra.mxu0 0
      %1237 = vmatprep.subr.bf16.mxu0 0
      %1238 = vmatpush1.bf16.msra.mxu0 0
      %1239 = vmatprep.subr.bf16.mxu0 0
      %1240 = vmatpush1.bf16.msra.mxu0 0
      %1241 = vmatprep.subr.bf16.mxu0 0
      %1242 = vmatpush1.bf16.msra.mxu0 0
      %1243 = vmatprep.subr.bf16.mxu0 0
      %1244 = vmatpush1.bf16.msra.mxu0 0
      %1245 = vmatprep.subr.bf16.mxu0 0
      %1246 = vmatpush1.bf16.msra.mxu0 0
      %1247 = vmatprep.subr.bf16.mxu0 0
      %1248 = vmatpush1.bf16.msra.mxu0 0
      %1249 = vmatprep.mubr.bf16.mxu0 0
      %1250 = vmatmul.mubr.bf16.gmra.mrb[0].mxu0 %v1143
      %v1251 = vpop.f32.mrb[0].mxu0
      %v1252 = vadd.f32 0.0, %v1251
      %v1253 = vpop.f32.mrb[0].mxu0
      %v1254 = vpop.f32.mrb[0].mxu0
      %v1255 = vadd.f32 0.0, %v1254
      %v1256 = vpop.f32.mrb[0].mxu0
      %1257 = vmatprep.mubr.bf16.mxu0 0
      %1258 = vmatmul.mubr.bf16.gmra.mrb[0].mxu0 %v1145
      %v1259 = vpop.f32.mrb[0].mxu0
      %v1260 = vadd.f32 0.0, %v1259
      %v1261 = vpop.f32.mrb[0].mxu0
      %v1262 = vpop.f32.mrb[0].mxu0
      %v1263 = vadd.f32 0.0, %v1262
      %v1264 = vpop.f32.mrb[0].mxu0
      %1265 = vmatprep.mubr.bf16.mxu0 0
      %1266 = vmatmul.mubr.bf16.gmra.mrb[0].mxu0 %v1147
      %v1267 = vpop.f32.mrb[0].mxu0
      %v1268 = vadd.f32 0.0, %v1267
      %v1269 = vpop.f32.mrb[0].mxu0
      %v1270 = vpop.f32.mrb[0].mxu0
      %v1271 = vadd.f32 0.0, %v1270
      %v1272 = vpop.f32.mrb[0].mxu0
      %1273 = vmatprep.mubr.bf16.mxu0 0
      %1274 = vmatmul.mubr.bf16.gmra.mrb[0].mxu0 %v1149
      %v1275 = vpop.f32.mrb[0].mxu0
      %v1276 = vadd.f32 0.0, %v1275
      %v1277 = vpop.f32.mrb[0].mxu0
      %v1278 = vpop.f32.mrb[0].mxu0
      %v1279 = vadd.f32 0.0, %v1278
      %v1280 = vpop.f32.mrb[0].mxu0
      %1281 = vmatprep.mubr.bf16.mxu0 0
      %1282 = vmatmul.mubr.bf16.gmra.mrb[0].mxu0 %v1151
      %v1283 = vpop.f32.mrb[0].mxu0
      %v1284 = vadd.f32 0.0, %v1283
      %v1285 = vpop.f32.mrb[0].mxu0
      %v1286 = vpop.f32.mrb[0].mxu0
      %v1287 = vadd.f32 0.0, %v1286
      %v1288 = vpop.f32.mrb[0].mxu0
      %1289 = vmatprep.mubr.bf16.mxu0 0
      %1290 = vmatmul.mubr.bf16.gmra.mrb[0].mxu0 %v1153
      %v1291 = vpop.f32.mrb[0].mxu0
      %v1292 = vadd.f32 0.0, %v1291
      %v1293 = vpop.f32.mrb[0].mxu0
      %v1294 = vpop.f32.mrb[0].mxu0
      %v1295 = vadd.f32 0.0, %v1294
      %v1296 = vpop.f32.mrb[0].mxu0
      %1297 = vmatprep.mubr.bf16.mxu0 0
      %1298 = vmatmul.mubr.bf16.gmra.mrb[0].mxu0 %v1155
      %v1299 = vpop.f32.mrb[0].mxu0
      %v1300 = vadd.f32 0.0, %v1299
      %v1301 = vpop.f32.mrb[0].mxu0
      %v1302 = vpop.f32.mrb[0].mxu0
      %v1303 = vadd.f32 0.0, %v1302
      %v1304 = vpop.f32.mrb[0].mxu0
      %1305 = vmatprep.mubr.bf16.mxu0 0
      %1306 = vmatmul.mubr.bf16.gmra.mrb[0].mxu0 %v1157
      %v1307 = vpop.f32.mrb[0].mxu0
      %v1308 = vadd.f32 0.0, %v1307
      %v1309 = vpop.f32.mrb[0].mxu0
      %v1310 = vpop.f32.mrb[0].mxu0
      %v1311 = vadd.f32 0.0, %v1310
      %v1312 = vpop.f32.mrb[0].mxu0
      %1313 = vmatprep.mubr.bf16.mxu0 0
      %1314 = vmatmul.mubr.bf16.gmra.mrb[0].mxu0 %v1159
      %v1315 = vpop.f32.mrb[0].mxu0
      %v1316 = vadd.f32 0.0, %v1315
      %v1317 = vpop.f32.mrb[0].mxu0
      %v1318 = vpop.f32.mrb[0].mxu0
      %v1319 = vadd.f32 0.0, %v1318
      %v1320 = vpop.f32.mrb[0].mxu0
      %1321 = vdwg.mxu0
      %v1322 = vadd.f32 %v1049, %v1252
      %v1323 = vadd.f32 %v1052, %v1255
      %v1324 = vadd.f32 %v1057, %v1260
      %v1325 = vadd.f32 %v1060, %v1263
      %v1326 = vadd.f32 %v1065, %v1268
      %v1327 = vadd.f32 %v1068, %v1271
      %v1328 = vadd.f32 %v1073, %v1276
      %v1329 = vadd.f32 %v1076, %v1279
      %v1330 = vadd.f32 %v1081, %v1284
      %v1331 = vadd.f32 %v1084, %v1287
      %v1332 = vadd.f32 %v1089, %v1292
      %v1333 = vadd.f32 %v1092, %v1295
      %v1334 = vadd.f32 %v1097, %v1300
      %v1335 = vadd.f32 %v1100, %v1303
      %v1336 = vadd.f32 %v1105, %v1308
      %v1337 = vadd.f32 %v1108, %v1311
      %v1338 = vadd.f32 %v1113, %v1316
      %v1339 = vadd.f32 %v1116, %v1319
      %v1340 = vld [vmem:[#allocation2 + $0x8] sm:$0xe]
      %v1341 = vld [vmem:[#allocation2 + $0xc] sm:$0xf]
      %v1342 = vld [vmem:[#allocation2 + $0x10] sm:$0xf]
      %v1343 = vld [vmem:[#allocation2 + $0x14] sm:$0xf]
      %v1344 = vld [vmem:[#allocation2 + $0x18] sm:$0xf]
      %v1345 = vld [vmem:[#allocation2 + $0x1c] sm:$0xf]
      %v1346 = vld [vmem:[#allocation2 + $0x20] sm:$0xf]
      %v1347 = vld [vmem:[#allocation2 + $0x24] sm:$0xf]
      %v1348 = vld [vmem:[#allocation2 + $0x28] sm:$0xf]
      %v1349 = vld [vmem:[#allocation2 + $0x2c] sm:$0xf]
      %v1350 = vld [vmem:[#allocation2 + $0x30] sm:$0xf]
      %v1351 = vld [vmem:[#allocation2 + $0x34] sm:$0xf]
      %v1352 = vld [vmem:[#allocation2 + $0x38] sm:$0xf]
      %v1353 = vld [vmem:[#allocation2 + $0x3c] sm:$0xf]
      %v1354 = vld [vmem:[#allocation2 + $0x40] sm:$0xf]
      %v1355 = vld [vmem:[#allocation2 + $0x44] sm:$0xf]
      %v1356 = vld [vmem:[#allocation2 + $0x48] sm:$0xf]
      %v1357 = vld [vmem:[#allocation2 + $0x4c] sm:$0xf]
      %v1358 = vld [vmem:[#allocation2 + $0x50] sm:$0x1]
      %s1359 = scalar_lea.vmem %s298, 192
      %v1360 = vld [vmem:[%s1359] sm:$0xf]
      %v1361 = vld [vmem:[%s1359 + $0x4] sm:$0xf]
      %v1362 = vld [vmem:[%s1359 + $0x8] sm:$0xf]
      %v1363 = vld [vmem:[%s1359 + $0xc] sm:$0xf]
      %v1364 = vld [vmem:[%s1359 + $0x10] sm:$0xf]
      %v1365 = vld [vmem:[%s1359 + $0x14] sm:$0xf]
      %v1366 = vld [vmem:[%s1359 + $0x18] sm:$0xf]
      %v1367 = vld [vmem:[%s1359 + $0x1c] sm:$0xf]
      %v1368 = vld [vmem:[%s1359 + $0x20] sm:$0xf]
      %v1369 = vld [vmem:[%s1359 + $0x24] sm:$0xf]
      %v1370 = vld [vmem:[%s1359 + $0x28] sm:$0xf]
      %v1371 = vld [vmem:[%s1359 + $0x2c] sm:$0xf]
      %v1372 = vld [vmem:[%s1359 + $0x30] sm:$0xf]
      %v1373 = vld [vmem:[%s1359 + $0x34] sm:$0xf]
      %v1374 = vld [vmem:[%s1359 + $0x38] sm:$0xf]
      %v1375 = vld [vmem:[%s1359 + $0x3c] sm:$0xf]
      %v1395 = vunpack.c.l.b16 %v1340
      %v1396 = vunpack.c.l.b16 %v1341
      %v1397 = vunpack.c.l.b16 %v1342
      %v1398 = vunpack.c.l.b16 %v1343
      %v1399 = vunpack.c.l.b16 %v1344
      %v1400 = vunpack.c.l.b16 %v1345
      %v1401 = vunpack.c.l.b16 %v1346
      %v1402 = vunpack.c.l.b16 %v1347
      %v1403 = vunpack.c.l.b16 %v1348
      %v1404 = vunpack.c.l.b16 %v1349
      %v1405 = vunpack.c.l.b16 %v1350
      %v1406 = vunpack.c.l.b16 %v1351
      %v1407 = vunpack.c.l.b16 %v1352
      %v1408 = vunpack.c.l.b16 %v1353
      %v1409 = vunpack.c.l.b16 %v1354
      %v1410 = vunpack.c.l.b16 %v1355
      %v1411 = vunpack.c.l.b16 %v1356
      %v1412 = vunpack.c.l.b16 %v1357
      %v1413 = vunpack.c.l.b16 %v1358
      %v1414 = vpack.c.b16 %v1396, %v1395
      %v1415 = vpack.c.b16 %v1398, %v1397
      %v1416 = vpack.c.b16 %v1400, %v1399
      %v1417 = vpack.c.b16 %v1402, %v1401
      %v1418 = vpack.c.b16 %v1404, %v1403
      %v1419 = vpack.c.b16 %v1406, %v1405
      %v1420 = vpack.c.b16 %v1408, %v1407
      %v1421 = vpack.c.b16 %v1410, %v1409
      %v1422 = vpack.c.b16 %v1412, %v1411
      %v1423 = vpack.c.b16 %v1413, %v1413
      %v1424 = vrot.slane %v1414, 1
      %v1425 = vrot.slane %v1415, 1
      %v1426 = vsel %vm1140, %v1424, %v1425
      %v1427 = vrot.slane %v1416, 1
      %v1428 = vsel %vm1140, %v1425, %v1427
      %v1429 = vrot.slane %v1417, 1
      %v1430 = vsel %vm1140, %v1427, %v1429
      %v1431 = vrot.slane %v1418, 1
      %v1432 = vsel %vm1140, %v1429, %v1431
      %v1433 = vrot.slane %v1419, 1
      %v1434 = vsel %vm1140, %v1431, %v1433
      %v1435 = vrot.slane %v1420, 1
      %v1436 = vsel %vm1140, %v1433, %v1435
      %v1437 = vrot.slane %v1421, 1
      %v1438 = vsel %vm1140, %v1435, %v1437
      %v1439 = vrot.slane %v1422, 1
      %v1440 = vsel %vm1140, %v1437, %v1439
      %v1441 = vrot.slane %v1423, 1
      %v1442 = vsel %vm1140, %v1439, %v1441
      %v1468 = vunpack.c.l.b16 %v1360
      %v1469 = vunpack.c.l.b16 %v1361
      %v1470 = vunpack.c.l.b16 %v1362
      %v1471 = vunpack.c.l.b16 %v1363
      %v1472 = vunpack.c.l.b16 %v1364
      %v1473 = vunpack.c.l.b16 %v1365
      %v1474 = vunpack.c.l.b16 %v1366
      %v1475 = vunpack.c.l.b16 %v1367
      %v1476 = vunpack.c.l.b16 %v1368
      %v1477 = vunpack.c.l.b16 %v1369
      %v1478 = vunpack.c.l.b16 %v1370
      %v1479 = vunpack.c.l.b16 %v1371
      %v1480 = vunpack.c.l.b16 %v1372
      %v1481 = vunpack.c.l.b16 %v1373
      %v1482 = vunpack.c.l.b16 %v1374
      %v1483 = vunpack.c.l.b16 %v1375
      %v1484 = vpack.c.b16 %v1469, %v1468
      %v1485 = vpack.c.b16 %v1471, %v1470
      %v1486 = vpack.c.b16 %v1473, %v1472
      %v1487 = vpack.c.b16 %v1475, %v1474
      %v1488 = vpack.c.b16 %v1477, %v1476
      %v1489 = vpack.c.b16 %v1479, %v1478
      %v1490 = vpack.c.b16 %v1481, %v1480
      %v1491 = vpack.c.b16 %v1483, %v1482
      %1500 = vmatprep.subr.bf16.mxu0 0
      %1501 = vmatpush1.bf16.msra.mxu0 %v1484
      %1502 = vmatprep.subr.bf16.mxu0 0
      %1503 = vmatpush1.bf16.msra.mxu0 %v1485
      %1504 = vmatprep.subr.bf16.mxu0 0
      %1505 = vmatpush1.bf16.msra.mxu0 %v1486
      %1506 = vmatprep.subr.bf16.mxu0 0
      %1507 = vmatpush1.bf16.msra.mxu0 %v1487
      %1508 = vmatprep.subr.bf16.mxu0 0
      %1509 = vmatpush1.bf16.msra.mxu0 %v1488
      %1510 = vmatprep.subr.bf16.mxu0 0
      %1511 = vmatpush1.bf16.msra.mxu0 %v1489
      %1512 = vmatprep.subr.bf16.mxu0 0
      %1513 = vmatpush1.bf16.msra.mxu0 %v1490
      %1514 = vmatprep.subr.bf16.mxu0 0
      %1515 = vmatpush1.bf16.msra.mxu0 %v1491
      %1516 = vmatprep.subr.bf16.mxu0 0
      %1517 = vmatpush1.bf16.msra.mxu0 0
      %1518 = vmatprep.subr.bf16.mxu0 0
      %1519 = vmatpush1.bf16.msra.mxu0 0
      %1520 = vmatprep.subr.bf16.mxu0 0
      %1521 = vmatpush1.bf16.msra.mxu0 0
      %1522 = vmatprep.subr.bf16.mxu0 0
      %1523 = vmatpush1.bf16.msra.mxu0 0
      %1524 = vmatprep.subr.bf16.mxu0 0
      %1525 = vmatpush1.bf16.msra.mxu0 0
      %1526 = vmatprep.subr.bf16.mxu0 0
      %1527 = vmatpush1.bf16.msra.mxu0 0
      %1528 = vmatprep.subr.bf16.mxu0 0
      %1529 = vmatpush1.bf16.msra.mxu0 0
      %1530 = vmatprep.subr.bf16.mxu0 0
      %1531 = vmatpush1.bf16.msra.mxu0 0
      %1532 = vmatprep.mubr.bf16.mxu0 0
      %1533 = vmatmul.mubr.bf16.gmra.mrb[0].mxu0 %v1426
      %v1534 = vpop.f32.mrb[0].mxu0
      %v1535 = vadd.f32 0.0, %v1534
      %v1536 = vpop.f32.mrb[0].mxu0
      %v1537 = vpop.f32.mrb[0].mxu0
      %v1538 = vadd.f32 0.0, %v1537
      %v1539 = vpop.f32.mrb[0].mxu0
      %1540 = vmatprep.mubr.bf16.mxu0 0
      %1541 = vmatmul.mubr.bf16.gmra.mrb[0].mxu0 %v1428
      %v1542 = vpop.f32.mrb[0].mxu0
      %v1543 = vadd.f32 0.0, %v1542
      %v1544 = vpop.f32.mrb[0].mxu0
      %v1545 = vpop.f32.mrb[0].mxu0
      %v1546 = vadd.f32 0.0, %v1545
      %v1547 = vpop.f32.mrb[0].mxu0
      %1548 = vmatprep.mubr.bf16.mxu0 0
      %1549 = vmatmul.mubr.bf16.gmra.mrb[0].mxu0 %v1430
      %v1550 = vpop.f32.mrb[0].mxu0
      %v1551 = vadd.f32 0.0, %v1550
      %v1552 = vpop.f32.mrb[0].mxu0
      %v1553 = vpop.f32.mrb[0].mxu0
      %v1554 = vadd.f32 0.0, %v1553
      %v1555 = vpop.f32.mrb[0].mxu0
      %1556 = vmatprep.mubr.bf16.mxu0 0
      %1557 = vmatmul.mubr.bf16.gmra.mrb[0].mxu0 %v1432
      %v1558 = vpop.f32.mrb[0].mxu0
      %v1559 = vadd.f32 0.0, %v1558
      %v1560 = vpop.f32.mrb[0].mxu0
      %v1561 = vpop.f32.mrb[0].mxu0
      %v1562 = vadd.f32 0.0, %v1561
      %v1563 = vpop.f32.mrb[0].mxu0
      %1564 = vmatprep.mubr.bf16.mxu0 0
      %1565 = vmatmul.mubr.bf16.gmra.mrb[0].mxu0 %v1434
      %v1566 = vpop.f32.mrb[0].mxu0
      %v1567 = vadd.f32 0.0, %v1566
      %v1568 = vpop.f32.mrb[0].mxu0
      %v1569 = vpop.f32.mrb[0].mxu0
      %v1570 = vadd.f32 0.0, %v1569
      %v1571 = vpop.f32.mrb[0].mxu0
      %1572 = vmatprep.mubr.bf16.mxu0 0
      %1573 = vmatmul.mubr.bf16.gmra.mrb[0].mxu0 %v1436
      %v1574 = vpop.f32.mrb[0].mxu0
      %v1575 = vadd.f32 0.0, %v1574
      %v1576 = vpop.f32.mrb[0].mxu0
      %v1577 = vpop.f32.mrb[0].mxu0
      %v1578 = vadd.f32 0.0, %v1577
      %v1579 = vpop.f32.mrb[0].mxu0
      %1580 = vmatprep.mubr.bf16.mxu0 0
      %1581 = vmatmul.mubr.bf16.gmra.mrb[0].mxu0 %v1438
      %v1582 = vpop.f32.mrb[0].mxu0
      %v1583 = vadd.f32 0.0, %v1582
      %v1584 = vpop.f32.mrb[0].mxu0
      %v1585 = vpop.f32.mrb[0].mxu0
      %v1586 = vadd.f32 0.0, %v1585
      %v1587 = vpop.f32.mrb[0].mxu0
      %1588 = vmatprep.mubr.bf16.mxu0 0
      %1589 = vmatmul.mubr.bf16.gmra.mrb[0].mxu0 %v1440
      %v1590 = vpop.f32.mrb[0].mxu0
      %v1591 = vadd.f32 0.0, %v1590
      %v1592 = vpop.f32.mrb[0].mxu0
      %v1593 = vpop.f32.mrb[0].mxu0
      %v1594 = vadd.f32 0.0, %v1593
      %v1595 = vpop.f32.mrb[0].mxu0
      %1596 = vmatprep.mubr.bf16.mxu0 0
      %1597 = vmatmul.mubr.bf16.gmra.mrb[0].mxu0 %v1442
      %v1598 = vpop.f32.mrb[0].mxu0
      %v1599 = vadd.f32 0.0, %v1598
      %v1600 = vpop.f32.mrb[0].mxu0
      %v1601 = vpop.f32.mrb[0].mxu0
      %v1602 = vadd.f32 0.0, %v1601
      %v1603 = vpop.f32.mrb[0].mxu0
      %1604 = vdwg.mxu0
      %v1605 = vadd.f32 %v1322, %v1535
      %v1606 = vadd.f32 %v1323, %v1538
      %v1607 = vadd.f32 %v1324, %v1543
      %v1608 = vadd.f32 %v1325, %v1546
      %v1609 = vadd.f32 %v1326, %v1551
      %v1610 = vadd.f32 %v1327, %v1554
      %v1611 = vadd.f32 %v1328, %v1559
      %v1612 = vadd.f32 %v1329, %v1562
      %v1613 = vadd.f32 %v1330, %v1567
      %v1614 = vadd.f32 %v1331, %v1570
      %v1615 = vadd.f32 %v1332, %v1575
      %v1616 = vadd.f32 %v1333, %v1578
      %v1617 = vadd.f32 %v1334, %v1583
      %v1618 = vadd.f32 %v1335, %v1586
      %v1619 = vadd.f32 %v1336, %v1591
      %v1620 = vadd.f32 %v1337, %v1594
      %v1621 = vadd.f32 %v1338, %v1599
      %v1622 = vadd.f32 %v1339, %v1602
      %v1623 = vld [vmem:[#allocation2 + $0x50] sm:$0x3]
      %s1624 = scalar_lea.vmem %s298, 256
      %v1625 = vld [vmem:[%s1624] sm:$0xf]
      %v1626 = vld [vmem:[%s1624 + $0x4] sm:$0xf]
      %v1627 = vld [vmem:[%s1624 + $0x8] sm:$0xf]
      %v1628 = vld [vmem:[%s1624 + $0xc] sm:$0xf]
      %v1629 = vld [vmem:[%s1624 + $0x10] sm:$0xf]
      %v1630 = vld [vmem:[%s1624 + $0x14] sm:$0xf]
      %v1631 = vld [vmem:[%s1624 + $0x18] sm:$0xf]
      %v1632 = vld [vmem:[%s1624 + $0x1c] sm:$0xf]
      %v1633 = vld [vmem:[%s1624 + $0x20] sm:$0xf]
      %v1634 = vld [vmem:[%s1624 + $0x24] sm:$0xf]
      %v1635 = vld [vmem:[%s1624 + $0x28] sm:$0xf]
      %v1636 = vld [vmem:[%s1624 + $0x2c] sm:$0xf]
      %v1637 = vld [vmem:[%s1624 + $0x30] sm:$0xf]
      %v1638 = vld [vmem:[%s1624 + $0x34] sm:$0xf]
      %v1639 = vld [vmem:[%s1624 + $0x38] sm:$0xf]
      %v1640 = vld [vmem:[%s1624 + $0x3c] sm:$0xf]
      %v1642 = vunpack.c.l.b16 %v1623
      %v1643 = vpack.c.b16 %v1642, %v1642
      %vm1644 = vsmask.f32 6400
      %v1646 = vshrl.u32 %v1414, 16
      %v1648 = vrot.slane %v1646, 1
      %v1649 = vshll.u32 %v1414, 16
      %v1651 = vrot.slane %v1649, 2
      %v1652 = vor.u32 %v1648, %v1651
      %v1654 = vshrl.u32 %v1415, 16
      %v1656 = vrot.slane %v1654, 1
      %v1657 = vshll.u32 %v1415, 16
      %v1659 = vrot.slane %v1657, 2
      %v1660 = vor.u32 %v1656, %v1659
      %v1661 = vsel %vm1644, %v1652, %v1660
      %v1663 = vshrl.u32 %v1416, 16
      %v1665 = vrot.slane %v1663, 1
      %v1666 = vshll.u32 %v1416, 16
      %v1668 = vrot.slane %v1666, 2
      %v1669 = vor.u32 %v1665, %v1668
      %v1670 = vsel %vm1644, %v1660, %v1669
      %v1672 = vshrl.u32 %v1417, 16
      %v1674 = vrot.slane %v1672, 1
      %v1675 = vshll.u32 %v1417, 16
      %v1677 = vrot.slane %v1675, 2
      %v1678 = vor.u32 %v1674, %v1677
      %v1679 = vsel %vm1644, %v1669, %v1678
      %v1681 = vshrl.u32 %v1418, 16
      %v1683 = vrot.slane %v1681, 1
      %v1684 = vshll.u32 %v1418, 16
      %v1686 = vrot.slane %v1684, 2
      %v1687 = vor.u32 %v1683, %v1686
      %v1688 = vsel %vm1644, %v1678, %v1687
      %v1690 = vshrl.u32 %v1419, 16
      %v1692 = vrot.slane %v1690, 1
      %v1693 = vshll.u32 %v1419, 16
      %v1695 = vrot.slane %v1693, 2
      %v1696 = vor.u32 %v1692, %v1695
      %v1697 = vsel %vm1644, %v1687, %v1696
      %v1699 = vshrl.u32 %v1420, 16
      %v1701 = vrot.slane %v1699, 1
      %v1702 = vshll.u32 %v1420, 16
      %v1704 = vrot.slane %v1702, 2
      %v1705 = vor.u32 %v1701, %v1704
      %v1706 = vsel %vm1644, %v1696, %v1705
      %v1708 = vshrl.u32 %v1421, 16
      %v1710 = vrot.slane %v1708, 1
      %v1711 = vshll.u32 %v1421, 16
      %v1713 = vrot.slane %v1711, 2
      %v1714 = vor.u32 %v1710, %v1713
      %v1715 = vsel %vm1644, %v1705, %v1714
      %v1717 = vshrl.u32 %v1422, 16
      %v1719 = vrot.slane %v1717, 1
      %v1720 = vshll.u32 %v1422, 16
      %v1722 = vrot.slane %v1720, 2
      %v1723 = vor.u32 %v1719, %v1722
      %v1724 = vsel %vm1644, %v1714, %v1723
      %v1726 = vshrl.u32 %v1643, 16
      %v1728 = vrot.slane %v1726, 1
      %v1729 = vshll.u32 %v1643, 16
      %v1731 = vrot.slane %v1729, 2
      %v1732 = vor.u32 %v1728, %v1731
      %v1733 = vsel %vm1644, %v1723, %v1732
      %v1759 = vunpack.c.l.b16 %v1625
      %v1760 = vunpack.c.l.b16 %v1626
      %v1761 = vunpack.c.l.b16 %v1627
      %v1762 = vunpack.c.l.b16 %v1628
      %v1763 = vunpack.c.l.b16 %v1629
      %v1764 = vunpack.c.l.b16 %v1630
      %v1765 = vunpack.c.l.b16 %v1631
      %v1766 = vunpack.c.l.b16 %v1632
      %v1767 = vunpack.c.l.b16 %v1633
      %v1768 = vunpack.c.l.b16 %v1634
      %v1769 = vunpack.c.l.b16 %v1635
      %v1770 = vunpack.c.l.b16 %v1636
      %v1771 = vunpack.c.l.b16 %v1637
      %v1772 = vunpack.c.l.b16 %v1638
      %v1773 = vunpack.c.l.b16 %v1639
      %v1774 = vunpack.c.l.b16 %v1640
      %v1775 = vpack.c.b16 %v1760, %v1759
      %v1776 = vpack.c.b16 %v1762, %v1761
      %v1777 = vpack.c.b16 %v1764, %v1763
      %v1778 = vpack.c.b16 %v1766, %v1765
      %v1779 = vpack.c.b16 %v1768, %v1767
      %v1780 = vpack.c.b16 %v1770, %v1769
      %v1781 = vpack.c.b16 %v1772, %v1771
      %v1782 = vpack.c.b16 %v1774, %v1773
      %1791 = vmatprep.subr.bf16.mxu0 0
      %1792 = vmatpush1.bf16.msra.mxu0 %v1775
      %1793 = vmatprep.subr.bf16.mxu0 0
      %1794 = vmatpush1.bf16.msra.mxu0 %v1776
      %1795 = vmatprep.subr.bf16.mxu0 0
      %1796 = vmatpush1.bf16.msra.mxu0 %v1777
      %1797 = vmatprep.subr.bf16.mxu0 0
      %1798 = vmatpush1.bf16.msra.mxu0 %v1778
      %1799 = vmatprep.subr.bf16.mxu0 0
      %1800 = vmatpush1.bf16.msra.mxu0 %v1779
      %1801 = vmatprep.subr.bf16.mxu0 0
      %1802 = vmatpush1.bf16.msra.mxu0 %v1780
      %1803 = vmatprep.subr.bf16.mxu0 0
      %1804 = vmatpush1.bf16.msra.mxu0 %v1781
      %1805 = vmatprep.subr.bf16.mxu0 0
      %1806 = vmatpush1.bf16.msra.mxu0 %v1782
      %1807 = vmatprep.subr.bf16.mxu0 0
      %1808 = vmatpush1.bf16.msra.mxu0 0
      %1809 = vmatprep.subr.bf16.mxu0 0
      %1810 = vmatpush1.bf16.msra.mxu0 0
      %1811 = vmatprep.subr.bf16.mxu0 0
      %1812 = vmatpush1.bf16.msra.mxu0 0
      %1813 = vmatprep.subr.bf16.mxu0 0
      %1814 = vmatpush1.bf16.msra.mxu0 0
      %1815 = vmatprep.subr.bf16.mxu0 0
      %1816 = vmatpush1.bf16.msra.mxu0 0
      %1817 = vmatprep.subr.bf16.mxu0 0
      %1818 = vmatpush1.bf16.msra.mxu0 0
      %1819 = vmatprep.subr.bf16.mxu0 0
      %1820 = vmatpush1.bf16.msra.mxu0 0
      %1821 = vmatprep.subr.bf16.mxu0 0
      %1822 = vmatpush1.bf16.msra.mxu0 0
      %1823 = vmatprep.mubr.bf16.mxu0 0
      %1824 = vmatmul.mubr.bf16.gmra.mrb[0].mxu0 %v1661
      %v1825 = vpop.f32.mrb[0].mxu0
      %v1826 = vadd.f32 0.0, %v1825
      %v1827 = vpop.f32.mrb[0].mxu0
      %v1828 = vpop.f32.mrb[0].mxu0
      %v1829 = vadd.f32 0.0, %v1828
      %v1830 = vpop.f32.mrb[0].mxu0
      %1831 = vmatprep.mubr.bf16.mxu0 0
      %1832 = vmatmul.mubr.bf16.gmra.mrb[0].mxu0 %v1670
      %v1833 = vpop.f32.mrb[0].mxu0
      %v1834 = vadd.f32 0.0, %v1833
      %v1835 = vpop.f32.mrb[0].mxu0
      %v1836 = vpop.f32.mrb[0].mxu0
      %v1837 = vadd.f32 0.0, %v1836
      %v1838 = vpop.f32.mrb[0].mxu0
      %1839 = vmatprep.mubr.bf16.mxu0 0
      %1840 = vmatmul.mubr.bf16.gmra.mrb[0].mxu0 %v1679
      %v1841 = vpop.f32.mrb[0].mxu0
      %v1842 = vadd.f32 0.0, %v1841
      %v1843 = vpop.f32.mrb[0].mxu0
      %v1844 = vpop.f32.mrb[0].mxu0
      %v1845 = vadd.f32 0.0, %v1844
      %v1846 = vpop.f32.mrb[0].mxu0
      %1847 = vmatprep.mubr.bf16.mxu0 0
      %1848 = vmatmul.mubr.bf16.gmra.mrb[0].mxu0 %v1688
      %v1849 = vpop.f32.mrb[0].mxu0
      %v1850 = vadd.f32 0.0, %v1849
      %v1851 = vpop.f32.mrb[0].mxu0
      %v1852 = vpop.f32.mrb[0].mxu0
      %v1853 = vadd.f32 0.0, %v1852
      %v1854 = vpop.f32.mrb[0].mxu0
      %1855 = vmatprep.mubr.bf16.mxu0 0
      %1856 = vmatmul.mubr.bf16.gmra.mrb[0].mxu0 %v1697
      %v1857 = vpop.f32.mrb[0].mxu0
      %v1858 = vadd.f32 0.0, %v1857
      %v1859 = vpop.f32.mrb[0].mxu0
      %v1860 = vpop.f32.mrb[0].mxu0
      %v1861 = vadd.f32 0.0, %v1860
      %v1862 = vpop.f32.mrb[0].mxu0
      %1863 = vmatprep.mubr.bf16.mxu0 0
      %1864 = vmatmul.mubr.bf16.gmra.mrb[0].mxu0 %v1706
      %v1865 = vpop.f32.mrb[0].mxu0
      %v1866 = vadd.f32 0.0, %v1865
      %v1867 = vpop.f32.mrb[0].mxu0
      %v1868 = vpop.f32.mrb[0].mxu0
      %v1869 = vadd.f32 0.0, %v1868
      %v1870 = vpop.f32.mrb[0].mxu0
      %1871 = vmatprep.mubr.bf16.mxu0 0
      %1872 = vmatmul.mubr.bf16.gmra.mrb[0].mxu0 %v1715
      %v1873 = vpop.f32.mrb[0].mxu0
      %v1874 = vadd.f32 0.0, %v1873
      %v1875 = vpop.f32.mrb[0].mxu0
      %v1876 = vpop.f32.mrb[0].mxu0
      %v1877 = vadd.f32 0.0, %v1876
      %v1878 = vpop.f32.mrb[0].mxu0
      %1879 = vmatprep.mubr.bf16.mxu0 0
      %1880 = vmatmul.mubr.bf16.gmra.mrb[0].mxu0 %v1724
      %v1881 = vpop.f32.mrb[0].mxu0
      %v1882 = vadd.f32 0.0, %v1881
      %v1883 = vpop.f32.mrb[0].mxu0
      %v1884 = vpop.f32.mrb[0].mxu0
      %v1885 = vadd.f32 0.0, %v1884
      %v1886 = vpop.f32.mrb[0].mxu0
      %1887 = vmatprep.mubr.bf16.mxu0 0
      %1888 = vmatmul.mubr.bf16.gmra.mrb[0].mxu0 %v1733
      %v1889 = vpop.f32.mrb[0].mxu0
      %v1890 = vadd.f32 0.0, %v1889
      %v1891 = vpop.f32.mrb[0].mxu0
      %v1892 = vpop.f32.mrb[0].mxu0
      %v1893 = vadd.f32 0.0, %v1892
      %v1894 = vpop.f32.mrb[0].mxu0
      %1895 = vdwg.mxu0
      %v1896 = vadd.f32 %v1605, %v1826
      %v1897 = vadd.f32 %v1606, %v1829
      %v1898 = vadd.f32 %v1607, %v1834
      %v1899 = vadd.f32 %v1608, %v1837
      %v1900 = vadd.f32 %v1609, %v1842
      %v1901 = vadd.f32 %v1610, %v1845
      %v1902 = vadd.f32 %v1611, %v1850
      %v1903 = vadd.f32 %v1612, %v1853
      %v1904 = vadd.f32 %v1613, %v1858
      %v1905 = vadd.f32 %v1614, %v1861
      %v1906 = vadd.f32 %v1615, %v1866
      %v1907 = vadd.f32 %v1616, %v1869
      %v1908 = vadd.f32 %v1617, %v1874
      %v1909 = vadd.f32 %v1618, %v1877
      %v1910 = vadd.f32 %v1619, %v1882
      %v1911 = vadd.f32 %v1620, %v1885
      %v1912 = vadd.f32 %v1621, %v1890
      %v1913 = vadd.f32 %v1622, %v1893
      %v1914 = vld [vmem:[#allocation2 + $0x8] sm:$0xc]
      %s1915 = scalar_lea.vmem %s298, 320
      %v1916 = vld [vmem:[%s1915] sm:$0xf]
      %v1917 = vld [vmem:[%s1915 + $0x4] sm:$0xf]
      %v1918 = vld [vmem:[%s1915 + $0x8] sm:$0xf]
      %v1919 = vld [vmem:[%s1915 + $0xc] sm:$0xf]
      %v1920 = vld [vmem:[%s1915 + $0x10] sm:$0xf]
      %v1921 = vld [vmem:[%s1915 + $0x14] sm:$0xf]
      %v1922 = vld [vmem:[%s1915 + $0x18] sm:$0xf]
      %v1923 = vld [vmem:[%s1915 + $0x1c] sm:$0xf]
      %v1924 = vld [vmem:[%s1915 + $0x20] sm:$0xf]
      %v1925 = vld [vmem:[%s1915 + $0x24] sm:$0xf]
      %v1926 = vld [vmem:[%s1915 + $0x28] sm:$0xf]
      %v1927 = vld [vmem:[%s1915 + $0x2c] sm:$0xf]
      %v1928 = vld [vmem:[%s1915 + $0x30] sm:$0xf]
      %v1929 = vld [vmem:[%s1915 + $0x34] sm:$0xf]
      %v1930 = vld [vmem:[%s1915 + $0x38] sm:$0xf]
      %v1931 = vld [vmem:[%s1915 + $0x3c] sm:$0xf]
      %v1933 = vunpack.c.l.b16 %v1914
      %v1934 = vpack.c.b16 %v1396, %v1933
      %vm1935 = vcmask 1045504
      %v1936 = vrot.slane %v1934, 2
      %v1937 = vrot.slane %v1415, 2
      %v1938 = vsel %vm1935, %v1936, %v1937
      %v1939 = vrot.slane %v1416, 2
      %v1940 = vsel %vm1935, %v1937, %v1939
      %v1941 = vrot.slane %v1417, 2
      %v1942 = vsel %vm1935, %v1939, %v1941
      %v1943 = vrot.slane %v1418, 2
      %v1944 = vsel %vm1935, %v1941, %v1943
      %v1945 = vrot.slane %v1419, 2
      %v1946 = vsel %vm1935, %v1943, %v1945
      %v1947 = vrot.slane %v1420, 2
      %v1948 = vsel %vm1935, %v1945, %v1947
      %v1949 = vrot.slane %v1421, 2
      %v1950 = vsel %vm1935, %v1947, %v1949
      %v1951 = vrot.slane %v1422, 2
      %v1952 = vsel %vm1935, %v1949, %v1951
      %v1953 = vrot.slane %v1643, 2
      %v1954 = vsel %vm1935, %v1951, %v1953
      %v1980 = vunpack.c.l.b16 %v1916
      %v1981 = vunpack.c.l.b16 %v1917
      %v1982 = vunpack.c.l.b16 %v1918
      %v1983 = vunpack.c.l.b16 %v1919
      %v1984 = vunpack.c.l.b16 %v1920
      %v1985 = vunpack.c.l.b16 %v1921
      %v1986 = vunpack.c.l.b16 %v1922
      %v1987 = vunpack.c.l.b16 %v1923
      %v1988 = vunpack.c.l.b16 %v1924
      %v1989 = vunpack.c.l.b16 %v1925
      %v1990 = vunpack.c.l.b16 %v1926
      %v1991 = vunpack.c.l.b16 %v1927
      %v1992 = vunpack.c.l.b16 %v1928
      %v1993 = vunpack.c.l.b16 %v1929
      %v1994 = vunpack.c.l.b16 %v1930
      %v1995 = vunpack.c.l.b16 %v1931
      %v1996 = vpack.c.b16 %v1981, %v1980
      %v1997 = vpack.c.b16 %v1983, %v1982
      %v1998 = vpack.c.b16 %v1985, %v1984
      %v1999 = vpack.c.b16 %v1987, %v1986
      %v2000 = vpack.c.b16 %v1989, %v1988
      %v2001 = vpack.c.b16 %v1991, %v1990
      %v2002 = vpack.c.b16 %v1993, %v1992
      %v2003 = vpack.c.b16 %v1995, %v1994
      %2012 = vmatprep.subr.bf16.mxu0 0
      %2013 = vmatpush1.bf16.msra.mxu0 %v1996
      %2014 = vmatprep.subr.bf16.mxu0 0
      %2015 = vmatpush1.bf16.msra.mxu0 %v1997
      %2016 = vmatprep.subr.bf16.mxu0 0
      %2017 = vmatpush1.bf16.msra.mxu0 %v1998
      %2018 = vmatprep.subr.bf16.mxu0 0
      %2019 = vmatpush1.bf16.msra.mxu0 %v1999
      %2020 = vmatprep.subr.bf16.mxu0 0
      %2021 = vmatpush1.bf16.msra.mxu0 %v2000
      %2022 = vmatprep.subr.bf16.mxu0 0
      %2023 = vmatpush1.bf16.msra.mxu0 %v2001
      %2024 = vmatprep.subr.bf16.mxu0 0
      %2025 = vmatpush1.bf16.msra.mxu0 %v2002
      %2026 = vmatprep.subr.bf16.mxu0 0
      %2027 = vmatpush1.bf16.msra.mxu0 %v2003
      %2028 = vmatprep.subr.bf16.mxu0 0
      %2029 = vmatpush1.bf16.msra.mxu0 0
      %2030 = vmatprep.subr.bf16.mxu0 0
      %2031 = vmatpush1.bf16.msra.mxu0 0
      %2032 = vmatprep.subr.bf16.mxu0 0
      %2033 = vmatpush1.bf16.msra.mxu0 0
      %2034 = vmatprep.subr.bf16.mxu0 0
      %2035 = vmatpush1.bf16.msra.mxu0 0
      %2036 = vmatprep.subr.bf16.mxu0 0
      %2037 = vmatpush1.bf16.msra.mxu0 0
      %2038 = vmatprep.subr.bf16.mxu0 0
      %2039 = vmatpush1.bf16.msra.mxu0 0
      %2040 = vmatprep.subr.bf16.mxu0 0
      %2041 = vmatpush1.bf16.msra.mxu0 0
      %2042 = vmatprep.subr.bf16.mxu0 0
      %2043 = vmatpush1.bf16.msra.mxu0 0
      %2044 = vmatprep.mubr.bf16.mxu0 0
      %2045 = vmatmul.mubr.bf16.gmra.mrb[0].mxu0 %v1938
      %v2046 = vpop.f32.mrb[0].mxu0
      %v2047 = vadd.f32 0.0, %v2046
      %v2048 = vpop.f32.mrb[0].mxu0
      %v2049 = vpop.f32.mrb[0].mxu0
      %v2050 = vadd.f32 0.0, %v2049
      %v2051 = vpop.f32.mrb[0].mxu0
      %2052 = vmatprep.mubr.bf16.mxu0 0
      %2053 = vmatmul.mubr.bf16.gmra.mrb[0].mxu0 %v1940
      %v2054 = vpop.f32.mrb[0].mxu0
      %v2055 = vadd.f32 0.0, %v2054
      %v2056 = vpop.f32.mrb[0].mxu0
      %v2057 = vpop.f32.mrb[0].mxu0
      %v2058 = vadd.f32 0.0, %v2057
      %v2059 = vpop.f32.mrb[0].mxu0
      %2060 = vmatprep.mubr.bf16.mxu0 0
      %2061 = vmatmul.mubr.bf16.gmra.mrb[0].mxu0 %v1942
      %v2062 = vpop.f32.mrb[0].mxu0
      %v2063 = vadd.f32 0.0, %v2062
      %v2064 = vpop.f32.mrb[0].mxu0
      %v2065 = vpop.f32.mrb[0].mxu0
      %v2066 = vadd.f32 0.0, %v2065
      %v2067 = vpop.f32.mrb[0].mxu0
      %2068 = vmatprep.mubr.bf16.mxu0 0
      %2069 = vmatmul.mubr.bf16.gmra.mrb[0].mxu0 %v1944
      %v2070 = vpop.f32.mrb[0].mxu0
      %v2071 = vadd.f32 0.0, %v2070
      %v2072 = vpop.f32.mrb[0].mxu0
      %v2073 = vpop.f32.mrb[0].mxu0
      %v2074 = vadd.f32 0.0, %v2073
      %v2075 = vpop.f32.mrb[0].mxu0
      %2076 = vmatprep.mubr.bf16.mxu0 0
      %2077 = vmatmul.mubr.bf16.gmra.mrb[0].mxu0 %v1946
      %v2078 = vpop.f32.mrb[0].mxu0
      %v2079 = vadd.f32 0.0, %v2078
      %v2080 = vpop.f32.mrb[0].mxu0
      %v2081 = vpop.f32.mrb[0].mxu0
      %v2082 = vadd.f32 0.0, %v2081
      %v2083 = vpop.f32.mrb[0].mxu0
      %2084 = vmatprep.mubr.bf16.mxu0 0
      %2085 = vmatmul.mubr.bf16.gmra.mrb[0].mxu0 %v1948
      %v2086 = vpop.f32.mrb[0].mxu0
      %v2087 = vadd.f32 0.0, %v2086
      %v2088 = vpop.f32.mrb[0].mxu0
      %v2089 = vpop.f32.mrb[0].mxu0
      %v2090 = vadd.f32 0.0, %v2089
      %v2091 = vpop.f32.mrb[0].mxu0
      %2092 = vmatprep.mubr.bf16.mxu0 0
      %2093 = vmatmul.mubr.bf16.gmra.mrb[0].mxu0 %v1950
      %v2094 = vpop.f32.mrb[0].mxu0
      %v2095 = vadd.f32 0.0, %v2094
      %v2096 = vpop.f32.mrb[0].mxu0
      %v2097 = vpop.f32.mrb[0].mxu0
      %v2098 = vadd.f32 0.0, %v2097
      %v2099 = vpop.f32.mrb[0].mxu0
      %2100 = vmatprep.mubr.bf16.mxu0 0
      %2101 = vmatmul.mubr.bf16.gmra.mrb[0].mxu0 %v1952
      %v2102 = vpop.f32.mrb[0].mxu0
      %v2103 = vadd.f32 0.0, %v2102
      %v2104 = vpop.f32.mrb[0].mxu0
      %v2105 = vpop.f32.mrb[0].mxu0
      %v2106 = vadd.f32 0.0, %v2105
      %v2107 = vpop.f32.mrb[0].mxu0
      %2108 = vmatprep.mubr.bf16.mxu0 0
      %2109 = vmatmul.mubr.bf16.gmra.mrb[0].mxu0 %v1954
      %v2110 = vpop.f32.mrb[0].mxu0
      %v2111 = vadd.f32 0.0, %v2110
      %v2112 = vpop.f32.mrb[0].mxu0
      %v2113 = vpop.f32.mrb[0].mxu0
      %v2114 = vadd.f32 0.0, %v2113
      %v2115 = vpop.f32.mrb[0].mxu0
      %2116 = vdwg.mxu0
      %v2117 = vadd.f32 %v1896, %v2047
      %v2118 = vadd.f32 %v1897, %v2050
      %v2119 = vadd.f32 %v1898, %v2055
      %v2120 = vadd.f32 %v1899, %v2058
      %v2121 = vadd.f32 %v1900, %v2063
      %v2122 = vadd.f32 %v1901, %v2066
      %v2123 = vadd.f32 %v1902, %v2071
      %v2124 = vadd.f32 %v1903, %v2074
      %v2125 = vadd.f32 %v1904, %v2079
      %v2126 = vadd.f32 %v1905, %v2082
      %v2127 = vadd.f32 %v1906, %v2087
      %v2128 = vadd.f32 %v1907, %v2090
      %v2129 = vadd.f32 %v1908, %v2095
      %v2130 = vadd.f32 %v1909, %v2098
      %v2131 = vadd.f32 %v1910, %v2103
      %v2132 = vadd.f32 %v1911, %v2106
      %v2133 = vadd.f32 %v1912, %v2111
      %v2134 = vadd.f32 %v1913, %v2114
      %v2135 = vld [vmem:[#allocation2 + $0x10] sm:$0xc]
      %v2136 = vld [vmem:[#allocation2 + $0x14] sm:$0xf]
      %v2137 = vld [vmem:[#allocation2 + $0x18] sm:$0xf]
      %v2138 = vld [vmem:[#allocation2 + $0x1c] sm:$0xf]
      %v2139 = vld [vmem:[#allocation2 + $0x20] sm:$0xf]
      %v2140 = vld [vmem:[#allocation2 + $0x24] sm:$0xf]
      %v2141 = vld [vmem:[#allocation2 + $0x28] sm:$0xf]
      %v2142 = vld [vmem:[#allocation2 + $0x2c] sm:$0xf]
      %v2143 = vld [vmem:[#allocation2 + $0x30] sm:$0xf]
      %v2144 = vld [vmem:[#allocation2 + $0x34] sm:$0xf]
      %v2145 = vld [vmem:[#allocation2 + $0x38] sm:$0xf]
      %v2146 = vld [vmem:[#allocation2 + $0x3c] sm:$0xf]
      %v2147 = vld [vmem:[#allocation2 + $0x40] sm:$0xf]
      %v2148 = vld [vmem:[#allocation2 + $0x44] sm:$0xf]
      %v2149 = vld [vmem:[#allocation2 + $0x48] sm:$0xf]
      %v2150 = vld [vmem:[#allocation2 + $0x4c] sm:$0xf]
      %v2151 = vld [vmem:[#allocation2 + $0x50] sm:$0xf]
      %v2152 = vld [vmem:[#allocation2 + $0x54] sm:$0xf]
      %v2153 = vld [vmem:[#allocation2 + $0x58] sm:$0x3]
      %s2154 = scalar_lea.vmem %s298, 384
      %v2155 = vld [vmem:[%s2154] sm:$0xf]
      %v2156 = vld [vmem:[%s2154 + $0x4] sm:$0xf]
      %v2157 = vld [vmem:[%s2154 + $0x8] sm:$0xf]
      %v2158 = vld [vmem:[%s2154 + $0xc] sm:$0xf]
      %v2159 = vld [vmem:[%s2154 + $0x10] sm:$0xf]
      %v2160 = vld [vmem:[%s2154 + $0x14] sm:$0xf]
      %v2161 = vld [vmem:[%s2154 + $0x18] sm:$0xf]
      %v2162 = vld [vmem:[%s2154 + $0x1c] sm:$0xf]
      %v2163 = vld [vmem:[%s2154 + $0x20] sm:$0xf]
      %v2164 = vld [vmem:[%s2154 + $0x24] sm:$0xf]
      %v2165 = vld [vmem:[%s2154 + $0x28] sm:$0xf]
      %v2166 = vld [vmem:[%s2154 + $0x2c] sm:$0xf]
      %v2167 = vld [vmem:[%s2154 + $0x30] sm:$0xf]
      %v2168 = vld [vmem:[%s2154 + $0x34] sm:$0xf]
      %v2169 = vld [vmem:[%s2154 + $0x38] sm:$0xf]
      %v2170 = vld [vmem:[%s2154 + $0x3c] sm:$0xf]
      %v2190 = vunpack.c.l.b16 %v2135
      %v2191 = vunpack.c.l.b16 %v2136
      %v2192 = vunpack.c.l.b16 %v2137
      %v2193 = vunpack.c.l.b16 %v2138
      %v2194 = vunpack.c.l.b16 %v2139
      %v2195 = vunpack.c.l.b16 %v2140
      %v2196 = vunpack.c.l.b16 %v2141
      %v2197 = vunpack.c.l.b16 %v2142
      %v2198 = vunpack.c.l.b16 %v2143
      %v2199 = vunpack.c.l.b16 %v2144
      %v2200 = vunpack.c.l.b16 %v2145
      %v2201 = vunpack.c.l.b16 %v2146
      %v2202 = vunpack.c.l.b16 %v2147
      %v2203 = vunpack.c.l.b16 %v2148
      %v2204 = vunpack.c.l.b16 %v2149
      %v2205 = vunpack.c.l.b16 %v2150
      %v2206 = vunpack.c.l.b16 %v2151
      %v2207 = vunpack.c.l.b16 %v2152
      %v2208 = vunpack.c.l.b16 %v2153
      %v2209 = vpack.c.b16 %v2191, %v2190
      %v2210 = vpack.c.b16 %v2193, %v2192
      %v2211 = vpack.c.b16 %v2195, %v2194
      %v2212 = vpack.c.b16 %v2197, %v2196
      %v2213 = vpack.c.b16 %v2199, %v2198
      %v2214 = vpack.c.b16 %v2201, %v2200
      %v2215 = vpack.c.b16 %v2203, %v2202
      %v2216 = vpack.c.b16 %v2205, %v2204
      %v2217 = vpack.c.b16 %v2207, %v2206
      %v2218 = vpack.c.b16 %v2208, %v2208
      %v2219 = vrot.slane %v2209, 2
      %v2220 = vrot.slane %v2210, 2
      %v2221 = vsel %vm1935, %v2219, %v2220
      %v2222 = vrot.slane %v2211, 2
      %v2223 = vsel %vm1935, %v2220, %v2222
      %v2224 = vrot.slane %v2212, 2
      %v2225 = vsel %vm1935, %v2222, %v2224
      %v2226 = vrot.slane %v2213, 2
      %v2227 = vsel %vm1935, %v2224, %v2226
      %v2228 = vrot.slane %v2214, 2
      %v2229 = vsel %vm1935, %v2226, %v2228
      %v2230 = vrot.slane %v2215, 2
      %v2231 = vsel %vm1935, %v2228, %v2230
      %v2232 = vrot.slane %v2216, 2
      %v2233 = vsel %vm1935, %v2230, %v2232
      %v2234 = vrot.slane %v2217, 2
      %v2235 = vsel %vm1935, %v2232, %v2234
      %v2236 = vrot.slane %v2218, 2
      %v2237 = vsel %vm1935, %v2234, %v2236
      %v2263 = vunpack.c.l.b16 %v2155
      %v2264 = vunpack.c.l.b16 %v2156
      %v2265 = vunpack.c.l.b16 %v2157
      %v2266 = vunpack.c.l.b16 %v2158
      %v2267 = vunpack.c.l.b16 %v2159
      %v2268 = vunpack.c.l.b16 %v2160
      %v2269 = vunpack.c.l.b16 %v2161
      %v2270 = vunpack.c.l.b16 %v2162
      %v2271 = vunpack.c.l.b16 %v2163
      %v2272 = vunpack.c.l.b16 %v2164
      %v2273 = vunpack.c.l.b16 %v2165
      %v2274 = vunpack.c.l.b16 %v2166
      %v2275 = vunpack.c.l.b16 %v2167
      %v2276 = vunpack.c.l.b16 %v2168
      %v2277 = vunpack.c.l.b16 %v2169
      %v2278 = vunpack.c.l.b16 %v2170
      %v2279 = vpack.c.b16 %v2264, %v2263
      %v2280 = vpack.c.b16 %v2266, %v2265
      %v2281 = vpack.c.b16 %v2268, %v2267
      %v2282 = vpack.c.b16 %v2270, %v2269
      %v2283 = vpack.c.b16 %v2272, %v2271
      %v2284 = vpack.c.b16 %v2274, %v2273
      %v2285 = vpack.c.b16 %v2276, %v2275
      %v2286 = vpack.c.b16 %v2278, %v2277
      %2295 = vmatprep.subr.bf16.mxu0 0
      %2296 = vmatpush1.bf16.msra.mxu0 %v2279
      %2297 = vmatprep.subr.bf16.mxu0 0
      %2298 = vmatpush1.bf16.msra.mxu0 %v2280
      %2299 = vmatprep.subr.bf16.mxu0 0
      %2300 = vmatpush1.bf16.msra.mxu0 %v2281
      %2301 = vmatprep.subr.bf16.mxu0 0
      %2302 = vmatpush1.bf16.msra.mxu0 %v2282
      %2303 = vmatprep.subr.bf16.mxu0 0
      %2304 = vmatpush1.bf16.msra.mxu0 %v2283
      %2305 = vmatprep.subr.bf16.mxu0 0
      %2306 = vmatpush1.bf16.msra.mxu0 %v2284
      %2307 = vmatprep.subr.bf16.mxu0 0
      %2308 = vmatpush1.bf16.msra.mxu0 %v2285
      %2309 = vmatprep.subr.bf16.mxu0 0
      %2310 = vmatpush1.bf16.msra.mxu0 %v2286
      %2311 = vmatprep.subr.bf16.mxu0 0
      %2312 = vmatpush1.bf16.msra.mxu0 0
      %2313 = vmatprep.subr.bf16.mxu0 0
      %2314 = vmatpush1.bf16.msra.mxu0 0
      %2315 = vmatprep.subr.bf16.mxu0 0
      %2316 = vmatpush1.bf16.msra.mxu0 0
      %2317 = vmatprep.subr.bf16.mxu0 0
      %2318 = vmatpush1.bf16.msra.mxu0 0
      %2319 = vmatprep.subr.bf16.mxu0 0
      %2320 = vmatpush1.bf16.msra.mxu0 0
      %2321 = vmatprep.subr.bf16.mxu0 0
      %2322 = vmatpush1.bf16.msra.mxu0 0
      %2323 = vmatprep.subr.bf16.mxu0 0
      %2324 = vmatpush1.bf16.msra.mxu0 0
      %2325 = vmatprep.subr.bf16.mxu0 0
      %2326 = vmatpush1.bf16.msra.mxu0 0
      %2327 = vmatprep.mubr.bf16.mxu0 0
      %2328 = vmatmul.mubr.bf16.gmra.mrb[0].mxu0 %v2221
      %v2329 = vpop.f32.mrb[0].mxu0
      %v2330 = vadd.f32 0.0, %v2329
      %v2331 = vpop.f32.mrb[0].mxu0
      %v2332 = vpop.f32.mrb[0].mxu0
      %v2333 = vadd.f32 0.0, %v2332
      %v2334 = vpop.f32.mrb[0].mxu0
      %2335 = vmatprep.mubr.bf16.mxu0 0
      %2336 = vmatmul.mubr.bf16.gmra.mrb[0].mxu0 %v2223
      %v2337 = vpop.f32.mrb[0].mxu0
      %v2338 = vadd.f32 0.0, %v2337
      %v2339 = vpop.f32.mrb[0].mxu0
      %v2340 = vpop.f32.mrb[0].mxu0
      %v2341 = vadd.f32 0.0, %v2340
      %v2342 = vpop.f32.mrb[0].mxu0
      %2343 = vmatprep.mubr.bf16.mxu0 0
      %2344 = vmatmul.mubr.bf16.gmra.mrb[0].mxu0 %v2225
      %v2345 = vpop.f32.mrb[0].mxu0
      %v2346 = vadd.f32 0.0, %v2345
      %v2347 = vpop.f32.mrb[0].mxu0
      %v2348 = vpop.f32.mrb[0].mxu0
      %v2349 = vadd.f32 0.0, %v2348
      %v2350 = vpop.f32.mrb[0].mxu0
      %2351 = vmatprep.mubr.bf16.mxu0 0
      %2352 = vmatmul.mubr.bf16.gmra.mrb[0].mxu0 %v2227
      %v2353 = vpop.f32.mrb[0].mxu0
      %v2354 = vadd.f32 0.0, %v2353
      %v2355 = vpop.f32.mrb[0].mxu0
      %v2356 = vpop.f32.mrb[0].mxu0
      %v2357 = vadd.f32 0.0, %v2356
      %v2358 = vpop.f32.mrb[0].mxu0
      %2359 = vmatprep.mubr.bf16.mxu0 0
      %2360 = vmatmul.mubr.bf16.gmra.mrb[0].mxu0 %v2229
      %v2361 = vpop.f32.mrb[0].mxu0
      %v2362 = vadd.f32 0.0, %v2361
      %v2363 = vpop.f32.mrb[0].mxu0
      %v2364 = vpop.f32.mrb[0].mxu0
      %v2365 = vadd.f32 0.0, %v2364
      %v2366 = vpop.f32.mrb[0].mxu0
      %2367 = vmatprep.mubr.bf16.mxu0 0
      %2368 = vmatmul.mubr.bf16.gmra.mrb[0].mxu0 %v2231
      %v2369 = vpop.f32.mrb[0].mxu0
      %v2370 = vadd.f32 0.0, %v2369
      %v2371 = vpop.f32.mrb[0].mxu0
      %v2372 = vpop.f32.mrb[0].mxu0
      %v2373 = vadd.f32 0.0, %v2372
      %v2374 = vpop.f32.mrb[0].mxu0
      %2375 = vmatprep.mubr.bf16.mxu0 0
      %2376 = vmatmul.mubr.bf16.gmra.mrb[0].mxu0 %v2233
      %v2377 = vpop.f32.mrb[0].mxu0
      %v2378 = vadd.f32 0.0, %v2377
      %v2379 = vpop.f32.mrb[0].mxu0
      %v2380 = vpop.f32.mrb[0].mxu0
      %v2381 = vadd.f32 0.0, %v2380
      %v2382 = vpop.f32.mrb[0].mxu0
      %2383 = vmatprep.mubr.bf16.mxu0 0
      %2384 = vmatmul.mubr.bf16.gmra.mrb[0].mxu0 %v2235
      %v2385 = vpop.f32.mrb[0].mxu0
      %v2386 = vadd.f32 0.0, %v2385
      %v2387 = vpop.f32.mrb[0].mxu0
      %v2388 = vpop.f32.mrb[0].mxu0
      %v2389 = vadd.f32 0.0, %v2388
      %v2390 = vpop.f32.mrb[0].mxu0
      %2391 = vmatprep.mubr.bf16.mxu0 0
      %2392 = vmatmul.mubr.bf16.gmra.mrb[0].mxu0 %v2237
      %v2393 = vpop.f32.mrb[0].mxu0
      %v2394 = vadd.f32 0.0, %v2393
      %v2395 = vpop.f32.mrb[0].mxu0
      %v2396 = vpop.f32.mrb[0].mxu0
      %v2397 = vadd.f32 0.0, %v2396
      %v2398 = vpop.f32.mrb[0].mxu0
      %2399 = vdwg.mxu0
      %v2400 = vadd.f32 %v2117, %v2330
      %v2401 = vadd.f32 %v2118, %v2333
      %v2402 = vadd.f32 %v2119, %v2338
      %v2403 = vadd.f32 %v2120, %v2341
      %v2404 = vadd.f32 %v2121, %v2346
      %v2405 = vadd.f32 %v2122, %v2349
      %v2406 = vadd.f32 %v2123, %v2354
      %v2407 = vadd.f32 %v2124, %v2357
      %v2408 = vadd.f32 %v2125, %v2362
      %v2409 = vadd.f32 %v2126, %v2365
      %v2410 = vadd.f32 %v2127, %v2370
      %v2411 = vadd.f32 %v2128, %v2373
      %v2412 = vadd.f32 %v2129, %v2378
      %v2413 = vadd.f32 %v2130, %v2381
      %v2414 = vadd.f32 %v2131, %v2386
      %v2415 = vadd.f32 %v2132, %v2389
      %v2416 = vadd.f32 %v2133, %v2394
      %v2417 = vadd.f32 %v2134, %v2397
      %v2418 = vld [vmem:[#allocation2 + $0x58] sm:$0x7]
      %s2419 = scalar_lea.vmem %s298, 448
      %v2420 = vld [vmem:[%s2419] sm:$0xf]
      %v2421 = vld [vmem:[%s2419 + $0x4] sm:$0xf]
      %v2422 = vld [vmem:[%s2419 + $0x8] sm:$0xf]
      %v2423 = vld [vmem:[%s2419 + $0xc] sm:$0xf]
      %v2424 = vld [vmem:[%s2419 + $0x10] sm:$0xf]
      %v2425 = vld [vmem:[%s2419 + $0x14] sm:$0xf]
      %v2426 = vld [vmem:[%s2419 + $0x18] sm:$0xf]
      %v2427 = vld [vmem:[%s2419 + $0x1c] sm:$0xf]
      %v2428 = vld [vmem:[%s2419 + $0x20] sm:$0xf]
      %v2429 = vld [vmem:[%s2419 + $0x24] sm:$0xf]
      %v2430 = vld [vmem:[%s2419 + $0x28] sm:$0xf]
      %v2431 = vld [vmem:[%s2419 + $0x2c] sm:$0xf]
      %v2432 = vld [vmem:[%s2419 + $0x30] sm:$0xf]
      %v2433 = vld [vmem:[%s2419 + $0x34] sm:$0xf]
      %v2434 = vld [vmem:[%s2419 + $0x38] sm:$0xf]
      %v2435 = vld [vmem:[%s2419 + $0x3c] sm:$0xf]
      %v2437 = vunpack.c.l.b16 %v2418
      %v2438 = vpack.c.b16 %v2437, %v2437
      %vm2439 = vsmask.f32 5376
      %v2441 = vshrl.u32 %v2209, 16
      %v2443 = vrot.slane %v2441, 2
      %v2444 = vshll.u32 %v2209, 16
      %v2446 = vrot.slane %v2444, 3
      %v2447 = vor.u32 %v2443, %v2446
      %v2449 = vshrl.u32 %v2210, 16
      %v2451 = vrot.slane %v2449, 2
      %v2452 = vshll.u32 %v2210, 16
      %v2454 = vrot.slane %v2452, 3
      %v2455 = vor.u32 %v2451, %v2454
      %v2456 = vsel %vm2439, %v2447, %v2455
      %v2458 = vshrl.u32 %v2211, 16
      %v2460 = vrot.slane %v2458, 2
      %v2461 = vshll.u32 %v2211, 16
      %v2463 = vrot.slane %v2461, 3
      %v2464 = vor.u32 %v2460, %v2463
      %v2465 = vsel %vm2439, %v2455, %v2464
      %v2467 = vshrl.u32 %v2212, 16
      %v2469 = vrot.slane %v2467, 2
      %v2470 = vshll.u32 %v2212, 16
      %v2472 = vrot.slane %v2470, 3
      %v2473 = vor.u32 %v2469, %v2472
      %v2474 = vsel %vm2439, %v2464, %v2473
      %v2476 = vshrl.u32 %v2213, 16
      %v2478 = vrot.slane %v2476, 2
      %v2479 = vshll.u32 %v2213, 16
      %v2481 = vrot.slane %v2479, 3
      %v2482 = vor.u32 %v2478, %v2481
      %v2483 = vsel %vm2439, %v2473, %v2482
      %v2485 = vshrl.u32 %v2214, 16
      %v2487 = vrot.slane %v2485, 2
      %v2488 = vshll.u32 %v2214, 16
      %v2490 = vrot.slane %v2488, 3
      %v2491 = vor.u32 %v2487, %v2490
      %v2492 = vsel %vm2439, %v2482, %v2491
      %v2494 = vshrl.u32 %v2215, 16
      %v2496 = vrot.slane %v2494, 2
      %v2497 = vshll.u32 %v2215, 16
      %v2499 = vrot.slane %v2497, 3
      %v2500 = vor.u32 %v2496, %v2499
      %v2501 = vsel %vm2439, %v2491, %v2500
      %v2503 = vshrl.u32 %v2216, 16
      %v2505 = vrot.slane %v2503, 2
      %v2506 = vshll.u32 %v2216, 16
      %v2508 = vrot.slane %v2506, 3
      %v2509 = vor.u32 %v2505, %v2508
      %v2510 = vsel %vm2439, %v2500, %v2509
      %v2512 = vshrl.u32 %v2217, 16
      %v2514 = vrot.slane %v2512, 2
      %v2515 = vshll.u32 %v2217, 16
      %v2517 = vrot.slane %v2515, 3
      %v2518 = vor.u32 %v2514, %v2517
      %v2519 = vsel %vm2439, %v2509, %v2518
      %v2521 = vshrl.u32 %v2438, 16
      %v2523 = vrot.slane %v2521, 2
      %v2524 = vshll.u32 %v2438, 16
      %v2526 = vrot.slane %v2524, 3
      %v2527 = vor.u32 %v2523, %v2526
      %v2528 = vsel %vm2439, %v2518, %v2527
      %v2554 = vunpack.c.l.b16 %v2420
      %v2555 = vunpack.c.l.b16 %v2421
      %v2556 = vunpack.c.l.b16 %v2422
      %v2557 = vunpack.c.l.b16 %v2423
      %v2558 = vunpack.c.l.b16 %v2424
      %v2559 = vunpack.c.l.b16 %v2425
      %v2560 = vunpack.c.l.b16 %v2426
      %v2561 = vunpack.c.l.b16 %v2427
      %v2562 = vunpack.c.l.b16 %v2428
      %v2563 = vunpack.c.l.b16 %v2429
      %v2564 = vunpack.c.l.b16 %v2430
      %v2565 = vunpack.c.l.b16 %v2431
      %v2566 = vunpack.c.l.b16 %v2432
      %v2567 = vunpack.c.l.b16 %v2433
      %v2568 = vunpack.c.l.b16 %v2434
      %v2569 = vunpack.c.l.b16 %v2435
      %v2570 = vpack.c.b16 %v2555, %v2554
      %v2571 = vpack.c.b16 %v2557, %v2556
      %v2572 = vpack.c.b16 %v2559, %v2558
      %v2573 = vpack.c.b16 %v2561, %v2560
      %v2574 = vpack.c.b16 %v2563, %v2562
      %v2575 = vpack.c.b16 %v2565, %v2564
      %v2576 = vpack.c.b16 %v2567, %v2566
      %v2577 = vpack.c.b16 %v2569, %v2568
      %2586 = vmatprep.subr.bf16.mxu0 0
      %2587 = vmatpush1.bf16.msra.mxu0 %v2570
      %2588 = vmatprep.subr.bf16.mxu0 0
      %2589 = vmatpush1.bf16.msra.mxu0 %v2571
      %2590 = vmatprep.subr.bf16.mxu0 0
      %2591 = vmatpush1.bf16.msra.mxu0 %v2572
      %2592 = vmatprep.subr.bf16.mxu0 0
      %2593 = vmatpush1.bf16.msra.mxu0 %v2573
      %2594 = vmatprep.subr.bf16.mxu0 0
      %2595 = vmatpush1.bf16.msra.mxu0 %v2574
      %2596 = vmatprep.subr.bf16.mxu0 0
      %2597 = vmatpush1.bf16.msra.mxu0 %v2575
      %2598 = vmatprep.subr.bf16.mxu0 0
      %2599 = vmatpush1.bf16.msra.mxu0 %v2576
      %2600 = vmatprep.subr.bf16.mxu0 0
      %2601 = vmatpush1.bf16.msra.mxu0 %v2577
      %2602 = vmatprep.subr.bf16.mxu0 0
      %2603 = vmatpush1.bf16.msra.mxu0 0
      %2604 = vmatprep.subr.bf16.mxu0 0
      %2605 = vmatpush1.bf16.msra.mxu0 0
      %2606 = vmatprep.subr.bf16.mxu0 0
      %2607 = vmatpush1.bf16.msra.mxu0 0
      %2608 = vmatprep.subr.bf16.mxu0 0
      %2609 = vmatpush1.bf16.msra.mxu0 0
      %2610 = vmatprep.subr.bf16.mxu0 0
      %2611 = vmatpush1.bf16.msra.mxu0 0
      %2612 = vmatprep.subr.bf16.mxu0 0
      %2613 = vmatpush1.bf16.msra.mxu0 0
      %2614 = vmatprep.subr.bf16.mxu0 0
      %2615 = vmatpush1.bf16.msra.mxu0 0
      %2616 = vmatprep.subr.bf16.mxu0 0
      %2617 = vmatpush1.bf16.msra.mxu0 0
      %2618 = vmatprep.mubr.bf16.mxu0 0
      %2619 = vmatmul.mubr.bf16.gmra.mrb[0].mxu0 %v2456
      %v2620 = vpop.f32.mrb[0].mxu0
      %v2621 = vadd.f32 0.0, %v2620
      %v2622 = vpop.f32.mrb[0].mxu0
      %v2623 = vpop.f32.mrb[0].mxu0
      %v2624 = vadd.f32 0.0, %v2623
      %v2625 = vpop.f32.mrb[0].mxu0
      %2626 = vmatprep.mubr.bf16.mxu0 0
      %2627 = vmatmul.mubr.bf16.gmra.mrb[0].mxu0 %v2465
      %v2628 = vpop.f32.mrb[0].mxu0
      %v2629 = vadd.f32 0.0, %v2628
      %v2630 = vpop.f32.mrb[0].mxu0
      %v2631 = vpop.f32.mrb[0].mxu0
      %v2632 = vadd.f32 0.0, %v2631
      %v2633 = vpop.f32.mrb[0].mxu0
      %2634 = vmatprep.mubr.bf16.mxu0 0
      %2635 = vmatmul.mubr.bf16.gmra.mrb[0].mxu0 %v2474
      %v2636 = vpop.f32.mrb[0].mxu0
      %v2637 = vadd.f32 0.0, %v2636
      %v2638 = vpop.f32.mrb[0].mxu0
      %v2639 = vpop.f32.mrb[0].mxu0
      %v2640 = vadd.f32 0.0, %v2639
      %v2641 = vpop.f32.mrb[0].mxu0
      %2642 = vmatprep.mubr.bf16.mxu0 0
      %2643 = vmatmul.mubr.bf16.gmra.mrb[0].mxu0 %v2483
      %v2644 = vpop.f32.mrb[0].mxu0
      %v2645 = vadd.f32 0.0, %v2644
      %v2646 = vpop.f32.mrb[0].mxu0
      %v2647 = vpop.f32.mrb[0].mxu0
      %v2648 = vadd.f32 0.0, %v2647
      %v2649 = vpop.f32.mrb[0].mxu0
      %2650 = vmatprep.mubr.bf16.mxu0 0
      %2651 = vmatmul.mubr.bf16.gmra.mrb[0].mxu0 %v2492
      %v2652 = vpop.f32.mrb[0].mxu0
      %v2653 = vadd.f32 0.0, %v2652
      %v2654 = vpop.f32.mrb[0].mxu0
      %v2655 = vpop.f32.mrb[0].mxu0
      %v2656 = vadd.f32 0.0, %v2655
      %v2657 = vpop.f32.mrb[0].mxu0
      %2658 = vmatprep.mubr.bf16.mxu0 0
      %2659 = vmatmul.mubr.bf16.gmra.mrb[0].mxu0 %v2501
      %v2660 = vpop.f32.mrb[0].mxu0
      %v2661 = vadd.f32 0.0, %v2660
      %v2662 = vpop.f32.mrb[0].mxu0
      %v2663 = vpop.f32.mrb[0].mxu0
      %v2664 = vadd.f32 0.0, %v2663
      %v2665 = vpop.f32.mrb[0].mxu0
      %2666 = vmatprep.mubr.bf16.mxu0 0
      %2667 = vmatmul.mubr.bf16.gmra.mrb[0].mxu0 %v2510
      %v2668 = vpop.f32.mrb[0].mxu0
      %v2669 = vadd.f32 0.0, %v2668
      %v2670 = vpop.f32.mrb[0].mxu0
      %v2671 = vpop.f32.mrb[0].mxu0
      %v2672 = vadd.f32 0.0, %v2671
      %v2673 = vpop.f32.mrb[0].mxu0
      %2674 = vmatprep.mubr.bf16.mxu0 0
      %2675 = vmatmul.mubr.bf16.gmra.mrb[0].mxu0 %v2519
      %v2676 = vpop.f32.mrb[0].mxu0
      %v2677 = vadd.f32 0.0, %v2676
      %v2678 = vpop.f32.mrb[0].mxu0
      %v2679 = vpop.f32.mrb[0].mxu0
      %v2680 = vadd.f32 0.0, %v2679
      %v2681 = vpop.f32.mrb[0].mxu0
      %2682 = vmatprep.mubr.bf16.mxu0 0
      %2683 = vmatmul.mubr.bf16.gmra.mrb[0].mxu0 %v2528
      %v2684 = vpop.f32.mrb[0].mxu0
      %v2685 = vadd.f32 0.0, %v2684
      %v2686 = vpop.f32.mrb[0].mxu0
      %v2687 = vpop.f32.mrb[0].mxu0
      %v2688 = vadd.f32 0.0, %v2687
      %v2689 = vpop.f32.mrb[0].mxu0
      %2690 = vdwg.mxu0
      %v2691 = vadd.f32 %v2400, %v2621
      %v2692 = vadd.f32 %v2401, %v2624
      %v2693 = vadd.f32 %v2402, %v2629
      %v2694 = vadd.f32 %v2403, %v2632
      %v2695 = vadd.f32 %v2404, %v2637
      %v2696 = vadd.f32 %v2405, %v2640
      %v2697 = vadd.f32 %v2406, %v2645
      %v2698 = vadd.f32 %v2407, %v2648
      %v2699 = vadd.f32 %v2408, %v2653
      %v2700 = vadd.f32 %v2409, %v2656
      %v2701 = vadd.f32 %v2410, %v2661
      %v2702 = vadd.f32 %v2411, %v2664
      %v2703 = vadd.f32 %v2412, %v2669
      %v2704 = vadd.f32 %v2413, %v2672
      %v2705 = vadd.f32 %v2414, %v2677
      %v2706 = vadd.f32 %v2415, %v2680
      %v2707 = vadd.f32 %v2416, %v2685
      %v2708 = vadd.f32 %v2417, %v2688
      %v2709 = vld [vmem:[#allocation2 + $0x10] sm:$0x8]
      %s2710 = scalar_lea.vmem %s298, 512
      %v2711 = vld [vmem:[%s2710] sm:$0xf]
      %v2712 = vld [vmem:[%s2710 + $0x4] sm:$0xf]
      %v2713 = vld [vmem:[%s2710 + $0x8] sm:$0xf]
      %v2714 = vld [vmem:[%s2710 + $0xc] sm:$0xf]
      %v2715 = vld [vmem:[%s2710 + $0x10] sm:$0xf]
      %v2716 = vld [vmem:[%s2710 + $0x14] sm:$0xf]
      %v2717 = vld [vmem:[%s2710 + $0x18] sm:$0xf]
      %v2718 = vld [vmem:[%s2710 + $0x1c] sm:$0xf]
      %v2719 = vld [vmem:[%s2710 + $0x20] sm:$0xf]
      %v2720 = vld [vmem:[%s2710 + $0x24] sm:$0xf]
      %v2721 = vld [vmem:[%s2710 + $0x28] sm:$0xf]
      %v2722 = vld [vmem:[%s2710 + $0x2c] sm:$0xf]
      %v2723 = vld [vmem:[%s2710 + $0x30] sm:$0xf]
      %v2724 = vld [vmem:[%s2710 + $0x34] sm:$0xf]
      %v2725 = vld [vmem:[%s2710 + $0x38] sm:$0xf]
      %v2726 = vld [vmem:[%s2710 + $0x3c] sm:$0xf]
      %v2728 = vunpack.c.l.b16 %v2709
      %v2729 = vpack.c.b16 %v2191, %v2728
      %vm2730 = vcmask 1044480
      %v2731 = vrot.slane %v2729, 3
      %v2732 = vrot.slane %v2210, 3
      %v2733 = vsel %vm2730, %v2731, %v2732
      %v2734 = vrot.slane %v2211, 3
      %v2735 = vsel %vm2730, %v2732, %v2734
      %v2736 = vrot.slane %v2212, 3
      %v2737 = vsel %vm2730, %v2734, %v2736
      %v2738 = vrot.slane %v2213, 3
      %v2739 = vsel %vm2730, %v2736, %v2738
      %v2740 = vrot.slane %v2214, 3
      %v2741 = vsel %vm2730, %v2738, %v2740
      %v2742 = vrot.slane %v2215, 3
      %v2743 = vsel %vm2730, %v2740, %v2742
      %v2744 = vrot.slane %v2216, 3
      %v2745 = vsel %vm2730, %v2742, %v2744
      %v2746 = vrot.slane %v2217, 3
      %v2747 = vsel %vm2730, %v2744, %v2746
      %v2748 = vrot.slane %v2438, 3
      %v2749 = vsel %vm2730, %v2746, %v2748
      %v2775 = vunpack.c.l.b16 %v2711
      %v2776 = vunpack.c.l.b16 %v2712
      %v2777 = vunpack.c.l.b16 %v2713
      %v2778 = vunpack.c.l.b16 %v2714
      %v2779 = vunpack.c.l.b16 %v2715
      %v2780 = vunpack.c.l.b16 %v2716
      %v2781 = vunpack.c.l.b16 %v2717
      %v2782 = vunpack.c.l.b16 %v2718
      %v2783 = vunpack.c.l.b16 %v2719
      %v2784 = vunpack.c.l.b16 %v2720
      %v2785 = vunpack.c.l.b16 %v2721
      %v2786 = vunpack.c.l.b16 %v2722
      %v2787 = vunpack.c.l.b16 %v2723
      %v2788 = vunpack.c.l.b16 %v2724
      %v2789 = vunpack.c.l.b16 %v2725
      %v2790 = vunpack.c.l.b16 %v2726
      %v2791 = vpack.c.b16 %v2776, %v2775
      %v2792 = vpack.c.b16 %v2778, %v2777
      %v2793 = vpack.c.b16 %v2780, %v2779
      %v2794 = vpack.c.b16 %v2782, %v2781
      %v2795 = vpack.c.b16 %v2784, %v2783
      %v2796 = vpack.c.b16 %v2786, %v2785
      %v2797 = vpack.c.b16 %v2788, %v2787
      %v2798 = vpack.c.b16 %v2790, %v2789
      %2807 = vmatprep.subr.bf16.mxu0 0
      %2808 = vmatpush1.bf16.msra.mxu0 %v2791
      %2809 = vmatprep.subr.bf16.mxu0 0
      %2810 = vmatpush1.bf16.msra.mxu0 %v2792
      %2811 = vmatprep.subr.bf16.mxu0 0
      %2812 = vmatpush1.bf16.msra.mxu0 %v2793
      %2813 = vmatprep.subr.bf16.mxu0 0
      %2814 = vmatpush1.bf16.msra.mxu0 %v2794
      %2815 = vmatprep.subr.bf16.mxu0 0
      %2816 = vmatpush1.bf16.msra.mxu0 %v2795
      %2817 = vmatprep.subr.bf16.mxu0 0
      %2818 = vmatpush1.bf16.msra.mxu0 %v2796
      %2819 = vmatprep.subr.bf16.mxu0 0
      %2820 = vmatpush1.bf16.msra.mxu0 %v2797
      %2821 = vmatprep.subr.bf16.mxu0 0
      %2822 = vmatpush1.bf16.msra.mxu0 %v2798
      %2823 = vmatprep.subr.bf16.mxu0 0
      %2824 = vmatpush1.bf16.msra.mxu0 0
      %2825 = vmatprep.subr.bf16.mxu0 0
      %2826 = vmatpush1.bf16.msra.mxu0 0
      %2827 = vmatprep.subr.bf16.mxu0 0
      %2828 = vmatpush1.bf16.msra.mxu0 0
      %2829 = vmatprep.subr.bf16.mxu0 0
      %2830 = vmatpush1.bf16.msra.mxu0 0
      %2831 = vmatprep.subr.bf16.mxu0 0
      %2832 = vmatpush1.bf16.msra.mxu0 0
      %2833 = vmatprep.subr.bf16.mxu0 0
      %2834 = vmatpush1.bf16.msra.mxu0 0
      %2835 = vmatprep.subr.bf16.mxu0 0
      %2836 = vmatpush1.bf16.msra.mxu0 0
      %2837 = vmatprep.subr.bf16.mxu0 0
      %2838 = vmatpush1.bf16.msra.mxu0 0
      %2839 = vmatprep.mubr.bf16.mxu0 0
      %2840 = vmatmul.mubr.bf16.gmra.mrb[0].mxu0 %v2733
      %v2841 = vpop.f32.mrb[0].mxu0
      %v2842 = vadd.f32 0.0, %v2841
      %v2843 = vpop.f32.mrb[0].mxu0
      %v2844 = vpop.f32.mrb[0].mxu0
      %v2845 = vadd.f32 0.0, %v2844
      %v2846 = vpop.f32.mrb[0].mxu0
      %2847 = vmatprep.mubr.bf16.mxu0 0
      %2848 = vmatmul.mubr.bf16.gmra.mrb[0].mxu0 %v2735
      %v2849 = vpop.f32.mrb[0].mxu0
      %v2850 = vadd.f32 0.0, %v2849
      %v2851 = vpop.f32.mrb[0].mxu0
      %v2852 = vpop.f32.mrb[0].mxu0
      %v2853 = vadd.f32 0.0, %v2852
      %v2854 = vpop.f32.mrb[0].mxu0
      %2855 = vmatprep.mubr.bf16.mxu0 0
      %2856 = vmatmul.mubr.bf16.gmra.mrb[0].mxu0 %v2737
      %v2857 = vpop.f32.mrb[0].mxu0
      %v2858 = vadd.f32 0.0, %v2857
      %v2859 = vpop.f32.mrb[0].mxu0
      %v2860 = vpop.f32.mrb[0].mxu0
      %v2861 = vadd.f32 0.0, %v2860
      %v2862 = vpop.f32.mrb[0].mxu0
      %2863 = vmatprep.mubr.bf16.mxu0 0
      %2864 = vmatmul.mubr.bf16.gmra.mrb[0].mxu0 %v2739
      %v2865 = vpop.f32.mrb[0].mxu0
      %v2866 = vadd.f32 0.0, %v2865
      %v2867 = vpop.f32.mrb[0].mxu0
      %v2868 = vpop.f32.mrb[0].mxu0
      %v2869 = vadd.f32 0.0, %v2868
      %v2870 = vpop.f32.mrb[0].mxu0
      %2871 = vmatprep.mubr.bf16.mxu0 0
      %2872 = vmatmul.mubr.bf16.gmra.mrb[0].mxu0 %v2741
      %v2873 = vpop.f32.mrb[0].mxu0
      %v2874 = vadd.f32 0.0, %v2873
      %v2875 = vpop.f32.mrb[0].mxu0
      %v2876 = vpop.f32.mrb[0].mxu0
      %v2877 = vadd.f32 0.0, %v2876
      %v2878 = vpop.f32.mrb[0].mxu0
      %2879 = vmatprep.mubr.bf16.mxu0 0
      %2880 = vmatmul.mubr.bf16.gmra.mrb[0].mxu0 %v2743
      %v2881 = vpop.f32.mrb[0].mxu0
      %v2882 = vadd.f32 0.0, %v2881
      %v2883 = vpop.f32.mrb[0].mxu0
      %v2884 = vpop.f32.mrb[0].mxu0
      %v2885 = vadd.f32 0.0, %v2884
      %v2886 = vpop.f32.mrb[0].mxu0
      %2887 = vmatprep.mubr.bf16.mxu0 0
      %2888 = vmatmul.mubr.bf16.gmra.mrb[0].mxu0 %v2745
      %v2889 = vpop.f32.mrb[0].mxu0
      %v2890 = vadd.f32 0.0, %v2889
      %v2891 = vpop.f32.mrb[0].mxu0
      %v2892 = vpop.f32.mrb[0].mxu0
      %v2893 = vadd.f32 0.0, %v2892
      %v2894 = vpop.f32.mrb[0].mxu0
      %2895 = vmatprep.mubr.bf16.mxu0 0
      %2896 = vmatmul.mubr.bf16.gmra.mrb[0].mxu0 %v2747
      %v2897 = vpop.f32.mrb[0].mxu0
      %v2898 = vadd.f32 0.0, %v2897
      %v2899 = vpop.f32.mrb[0].mxu0
      %v2900 = vpop.f32.mrb[0].mxu0
      %v2901 = vadd.f32 0.0, %v2900
      %v2902 = vpop.f32.mrb[0].mxu0
      %2903 = vmatprep.mubr.bf16.mxu0 0
      %2904 = vmatmul.mubr.bf16.gmra.mrb[0].mxu0 %v2749
      %v2905 = vpop.f32.mrb[0].mxu0
      %v2906 = vadd.f32 0.0, %v2905
      %v2907 = vpop.f32.mrb[0].mxu0
      %v2908 = vpop.f32.mrb[0].mxu0
      %v2909 = vadd.f32 0.0, %v2908
      %v2910 = vpop.f32.mrb[0].mxu0
      %2911 = vdwg.mxu0
      %v2912 = vadd.f32 %v2691, %v2842
      %v2913 = vadd.f32 %v2692, %v2845
      %v2914 = vadd.f32 %v2693, %v2850
      %v2915 = vadd.f32 %v2694, %v2853
      %v2916 = vadd.f32 %v2695, %v2858
      %v2917 = vadd.f32 %v2696, %v2861
      %v2918 = vadd.f32 %v2697, %v2866
      %v2919 = vadd.f32 %v2698, %v2869
      %v2920 = vadd.f32 %v2699, %v2874
      %v2921 = vadd.f32 %v2700, %v2877
      %v2922 = vadd.f32 %v2701, %v2882
      %v2923 = vadd.f32 %v2702, %v2885
      %v2924 = vadd.f32 %v2703, %v2890
      %v2925 = vadd.f32 %v2704, %v2893
      %v2926 = vadd.f32 %v2705, %v2898
      %v2927 = vadd.f32 %v2706, %v2901
      %v2928 = vadd.f32 %v2707, %v2906
      %v2929 = vadd.f32 %v2708, %v2909
      %v2930 = vpack.c.bf16 %v2913, %v2912
      %v2931 = vpack.c.bf16 %v2915, %v2914
      %v2932 = vpack.c.bf16 %v2917, %v2916
      %v2933 = vpack.c.bf16 %v2919, %v2918
      %v2934 = vpack.c.bf16 %v2921, %v2920
      %v2935 = vpack.c.bf16 %v2923, %v2922
      %v2936 = vpack.c.bf16 %v2925, %v2924
      %v2937 = vpack.c.bf16 %v2927, %v2926
      %v2938 = vpack.c.bf16 %v2929, %v2928
      %v2948 = vunpack.c.l.b16 %v2930
      %v2949 = vunpack.c.h.b16 %v2930
      %v2950 = vunpack.c.l.b16 %v2931
      %v2951 = vunpack.c.h.b16 %v2931
      %v2952 = vunpack.c.l.b16 %v2932
      %v2953 = vunpack.c.h.b16 %v2932
      %v2954 = vunpack.c.l.b16 %v2933
      %v2955 = vunpack.c.h.b16 %v2933
      %v2956 = vunpack.c.l.b16 %v2934
      %v2957 = vunpack.c.h.b16 %v2934
      %v2958 = vunpack.c.l.b16 %v2935
      %v2959 = vunpack.c.h.b16 %v2935
      %v2960 = vunpack.c.l.b16 %v2936
      %v2961 = vunpack.c.h.b16 %v2936
      %v2962 = vunpack.c.l.b16 %v2937
      %v2963 = vunpack.c.h.b16 %v2937
      %v2964 = vunpack.c.l.b16 %v2938
      %v2965 = vunpack.c.h.b16 %v2938
      %v2966 = vpack.c.b16 %v2948, %v2948
      %v2967 = vpack.c.b16 %v2949, %v2949
      %v2968 = vpack.c.b16 %v2950, %v2950
      %v2969 = vpack.c.b16 %v2951, %v2951
      %v2970 = vpack.c.b16 %v2952, %v2952
      %v2971 = vpack.c.b16 %v2953, %v2953
      %v2972 = vpack.c.b16 %v2954, %v2954
      %v2973 = vpack.c.b16 %v2955, %v2955
      %v2974 = vpack.c.b16 %v2956, %v2956
      %v2975 = vpack.c.b16 %v2957, %v2957
      %v2976 = vpack.c.b16 %v2958, %v2958
      %v2977 = vpack.c.b16 %v2959, %v2959
      %v2978 = vpack.c.b16 %v2960, %v2960
      %v2979 = vpack.c.b16 %v2961, %v2961
      %v2980 = vpack.c.b16 %v2962, %v2962
      %v2981 = vpack.c.b16 %v2963, %v2963
      %v2982 = vpack.c.b16 %v2964, %v2964
      %v2983 = vpack.c.b16 %v2965, %v2965
      %3002 = vst [vmem:[%s310] sm:$0xf] %v2966
      %3003 = vst [vmem:[%s310 + $0x4] sm:$0xf] %v2967
      %3004 = vst [vmem:[%s310 + $0x8] sm:$0xf] %v2968
      %3005 = vst [vmem:[%s310 + $0xc] sm:$0xf] %v2969
      %3006 = vst [vmem:[%s310 + $0x10] sm:$0xf] %v2970
      %3007 = vst [vmem:[%s310 + $0x14] sm:$0xf] %v2971
      %3008 = vst [vmem:[%s310 + $0x18] sm:$0xf] %v2972
      %3009 = vst [vmem:[%s310 + $0x1c] sm:$0xf] %v2973
      %3010 = vst [vmem:[%s310 + $0x20] sm:$0xf] %v2974
      %3011 = vst [vmem:[%s310 + $0x24] sm:$0xf] %v2975
      %3012 = vst [vmem:[%s310 + $0x28] sm:$0xf] %v2976
      %3013 = vst [vmem:[%s310 + $0x2c] sm:$0xf] %v2977
      %3014 = vst [vmem:[%s310 + $0x30] sm:$0xf] %v2978
      %3015 = vst [vmem:[%s310 + $0x34] sm:$0xf] %v2979
      %3016 = vst [vmem:[%s310 + $0x38] sm:$0xf] %v2980
      %3017 = vst [vmem:[%s310 + $0x3c] sm:$0xf] %v2981
      %3018 = vst [vmem:[%s310 + $0x40] sm:$0xf] %v2982
      %3019 = vst [vmem:[%s310 + $0x44] sm:$0xf] %v2983
      %v3020 = vlaneseq
      %v3021 = vshrl.u32 %v3020, 7
      %v3022 = vadd.s32 %v3021, 8
      %v3023 = vadd.s32 %v3021, 16
      %v3024 = vadd.s32 %v3021, 24
      %v3025 = vadd.s32 %v3021, 32
      %v3026 = vadd.s32 %v3021, 40
      %v3027 = vadd.s32 %v3021, 48
      %v3028 = vadd.s32 %v3021, 56
      %v3029 = vadd.s32 %v3021, 64
      %v3030 = vadd.s32 %v3021, 72
      %v3031 = vadd.s32 %v3021, 80
      %v3032 = vadd.s32 %v3021, 88
      %v3033 = vadd.s32 %v3021, 96
      %v3034 = vadd.s32 %v3021, 104
      %v3035 = vadd.s32 %v3021, 112
      %v3036 = vadd.s32 %v3021, 120
      %v3037 = vadd.s32 %v3021, 128
      %v3038 = vadd.s32 %v3021, 136
      %v3039 = vcvt.s32.f32 %v3021
      %v3040 = vcvt.s32.f32 %v3022
      %v3041 = vcvt.s32.f32 %v3023
      %v3042 = vcvt.s32.f32 %v3024
      %v3043 = vcvt.s32.f32 %v3025
      %v3044 = vcvt.s32.f32 %v3026
      %v3045 = vcvt.s32.f32 %v3027
      %v3046 = vcvt.s32.f32 %v3028
      %v3047 = vcvt.s32.f32 %v3029
      %v3048 = vcvt.s32.f32 %v3030
      %v3049 = vcvt.s32.f32 %v3031
      %v3050 = vcvt.s32.f32 %v3032
      %v3051 = vcvt.s32.f32 %v3033
      %v3052 = vcvt.s32.f32 %v3034
      %v3053 = vcvt.s32.f32 %v3035
      %v3054 = vcvt.s32.f32 %v3036
      %v3055 = vcvt.s32.f32 %v3037
      %v3056 = vcvt.s32.f32 %v3038
      %v3057 = vrcp.pop 18.0
      %v3058 = vmul.f32 %v3039, %v3057
      %v3059 = vmul.f32 %v3040, %v3057
      %v3060 = vmul.f32 %v3041, %v3057
      %v3061 = vmul.f32 %v3042, %v3057
      %v3062 = vmul.f32 %v3043, %v3057
      %v3063 = vmul.f32 %v3044, %v3057
      %v3064 = vmul.f32 %v3045, %v3057
      %v3065 = vmul.f32 %v3046, %v3057
      %v3066 = vmul.f32 %v3047, %v3057
      %v3067 = vmul.f32 %v3048, %v3057
      %v3068 = vmul.f32 %v3049, %v3057
      %v3069 = vmul.f32 %v3050, %v3057
      %v3070 = vmul.f32 %v3051, %v3057
      %v3071 = vmul.f32 %v3052, %v3057
      %v3072 = vmul.f32 %v3053, %v3057
      %v3073 = vmul.f32 %v3054, %v3057
      %v3074 = vmul.f32 %v3055, %v3057
      %v3075 = vmul.f32 %v3056, %v3057
      %v3076 = vfloor.f32 %v3058
      %v3077 = vfloor.f32 %v3059
      %v3078 = vfloor.f32 %v3060
      %v3079 = vfloor.f32 %v3061
      %v3080 = vfloor.f32 %v3062
      %v3081 = vfloor.f32 %v3063
      %v3082 = vfloor.f32 %v3064
      %v3083 = vfloor.f32 %v3065
      %v3084 = vfloor.f32 %v3066
      %v3085 = vfloor.f32 %v3067
      %v3086 = vfloor.f32 %v3068
      %v3087 = vfloor.f32 %v3069
      %v3088 = vfloor.f32 %v3070
      %v3089 = vfloor.f32 %v3071
      %v3090 = vfloor.f32 %v3072
      %v3091 = vfloor.f32 %v3073
      %v3092 = vfloor.f32 %v3074
      %v3093 = vfloor.f32 %v3075
      %v3094 = vmul.f32 %v3076, 18.0
      %v3095 = vmul.f32 %v3077, 18.0
      %v3096 = vmul.f32 %v3078, 18.0
      %v3097 = vmul.f32 %v3079, 18.0
      %v3098 = vmul.f32 %v3080, 18.0
      %v3099 = vmul.f32 %v3081, 18.0
      %v3100 = vmul.f32 %v3082, 18.0
      %v3101 = vmul.f32 %v3083, 18.0
      %v3102 = vmul.f32 %v3084, 18.0
      %v3103 = vmul.f32 %v3085, 18.0
      %v3104 = vmul.f32 %v3086, 18.0
      %v3105 = vmul.f32 %v3087, 18.0
      %v3106 = vmul.f32 %v3088, 18.0
      %v3107 = vmul.f32 %v3089, 18.0
      %v3108 = vmul.f32 %v3090, 18.0
      %v3109 = vmul.f32 %v3091, 18.0
      %v3110 = vmul.f32 %v3092, 18.0
      %v3111 = vmul.f32 %v3093, 18.0
      %v3112 = vsub.f32 %v3039, %v3094
      %v3113 = vsub.f32 %v3040, %v3095
      %v3114 = vsub.f32 %v3041, %v3096
      %v3115 = vsub.f32 %v3042, %v3097
      %v3116 = vsub.f32 %v3043, %v3098
      %v3117 = vsub.f32 %v3044, %v3099
      %v3118 = vsub.f32 %v3045, %v3100
      %v3119 = vsub.f32 %v3046, %v3101
      %v3120 = vsub.f32 %v3047, %v3102
      %v3121 = vsub.f32 %v3048, %v3103
      %v3122 = vsub.f32 %v3049, %v3104
      %v3123 = vsub.f32 %v3050, %v3105
      %v3124 = vsub.f32 %v3051, %v3106
      %v3125 = vsub.f32 %v3052, %v3107
      %v3126 = vsub.f32 %v3053, %v3108
      %v3127 = vsub.f32 %v3054, %v3109
      %v3128 = vsub.f32 %v3055, %v3110
      %v3129 = vsub.f32 %v3056, %v3111
      %vm3130 = vcmp.lt.f32.partialorder %v3112, 16.0
      %vm3131 = vcmp.lt.f32.partialorder %v3113, 16.0
      %vm3132 = vcmp.lt.f32.partialorder %v3114, 16.0
      %vm3133 = vcmp.lt.f32.partialorder %v3115, 16.0
      %vm3134 = vcmp.lt.f32.partialorder %v3116, 16.0
      %vm3135 = vcmp.lt.f32.partialorder %v3117, 16.0
      %vm3136 = vcmp.lt.f32.partialorder %v3118, 16.0
      %vm3137 = vcmp.lt.f32.partialorder %v3119, 16.0
      %vm3138 = vcmp.lt.f32.partialorder %v3120, 16.0
      %vm3139 = vcmp.lt.f32.partialorder %v3121, 16.0
      %vm3140 = vcmp.lt.f32.partialorder %v3122, 16.0
      %vm3141 = vcmp.lt.f32.partialorder %v3123, 16.0
      %vm3142 = vcmp.lt.f32.partialorder %v3124, 16.0
      %vm3143 = vcmp.lt.f32.partialorder %v3125, 16.0
      %vm3144 = vcmp.lt.f32.partialorder %v3126, 16.0
      %vm3145 = vcmp.lt.f32.partialorder %v3127, 16.0
      %vm3146 = vcmp.lt.f32.partialorder %v3128, 16.0
      %vm3147 = vcmp.lt.f32.partialorder %v3129, 16.0
      %v3148 = vsel %vm3130, 1, 0
      %v3149 = vsel %vm3131, 1, 0
      %v3150 = vsel %vm3132, 1, 0
      %v3151 = vsel %vm3133, 1, 0
      %v3152 = vsel %vm3134, 1, 0
      %v3153 = vsel %vm3135, 1, 0
      %v3154 = vsel %vm3136, 1, 0
      %v3155 = vsel %vm3137, 1, 0
      %v3156 = vsel %vm3138, 1, 0
      %v3157 = vsel %vm3139, 1, 0
      %v3158 = vsel %vm3140, 1, 0
      %v3159 = vsel %vm3141, 1, 0
      %v3160 = vsel %vm3142, 1, 0
      %v3161 = vsel %vm3143, 1, 0
      %v3162 = vsel %vm3144, 1, 0
      %v3163 = vsel %vm3145, 1, 0
      %v3164 = vsel %vm3146, 1, 0
      %v3165 = vsel %vm3147, 1, 0
      %v3166 = vcvt.s32.f32 %v3148
      %v3167 = vcvt.s32.f32 %v3149
      %v3168 = vcvt.s32.f32 %v3150
      %v3169 = vcvt.s32.f32 %v3151
      %v3170 = vcvt.s32.f32 %v3152
      %v3171 = vcvt.s32.f32 %v3153
      %v3172 = vcvt.s32.f32 %v3154
      %v3173 = vcvt.s32.f32 %v3155
      %v3174 = vcvt.s32.f32 %v3156
      %v3175 = vcvt.s32.f32 %v3157
      %v3176 = vcvt.s32.f32 %v3158
      %v3177 = vcvt.s32.f32 %v3159
      %v3178 = vcvt.s32.f32 %v3160
      %v3179 = vcvt.s32.f32 %v3161
      %v3180 = vcvt.s32.f32 %v3162
      %v3181 = vcvt.s32.f32 %v3163
      %v3182 = vcvt.s32.f32 %v3164
      %v3183 = vcvt.s32.f32 %v3165
      %v3184 = vunpack.c.l.bf16 %v2930
      %v3185 = vunpack.c.h.bf16 %v2930
      %v3186 = vunpack.c.l.bf16 %v2931
      %v3187 = vunpack.c.h.bf16 %v2931
      %v3188 = vunpack.c.l.bf16 %v2932
      %v3189 = vunpack.c.h.bf16 %v2932
      %v3190 = vunpack.c.l.bf16 %v2933
      %v3191 = vunpack.c.h.bf16 %v2933
      %v3192 = vunpack.c.l.bf16 %v2934
      %v3193 = vunpack.c.h.bf16 %v2934
      %v3194 = vunpack.c.l.bf16 %v2935
      %v3195 = vunpack.c.h.bf16 %v2935
      %v3196 = vunpack.c.l.bf16 %v2936
      %v3197 = vunpack.c.h.bf16 %v2936
      %v3198 = vunpack.c.l.bf16 %v2937
      %v3199 = vunpack.c.h.bf16 %v2937
      %v3200 = vunpack.c.l.bf16 %v2938
      %v3201 = vunpack.c.h.bf16 %v2938
      %v3202 = vmul.f32 %v3184, %v3166
      %v3203 = vmul.f32 %v3185, %v3167
      %v3204 = vmul.f32 %v3186, %v3168
      %v3205 = vmul.f32 %v3187, %v3169
      %v3206 = vmul.f32 %v3188, %v3170
      %v3207 = vmul.f32 %v3189, %v3171
      %v3208 = vmul.f32 %v3190, %v3172
      %v3209 = vmul.f32 %v3191, %v3173
      %v3210 = vmul.f32 %v3192, %v3174
      %v3211 = vmul.f32 %v3193, %v3175
      %v3212 = vmul.f32 %v3194, %v3176
      %v3213 = vmul.f32 %v3195, %v3177
      %v3214 = vmul.f32 %v3196, %v3178
      %v3215 = vmul.f32 %v3197, %v3179
      %v3216 = vmul.f32 %v3198, %v3180
      %v3217 = vmul.f32 %v3199, %v3181
      %v3218 = vmul.f32 %v3200, %v3182
      %v3219 = vmul.f32 %v3201, %v3183
      %v3220 = vadd.f32 %v3202, %v3203
      %v3221 = vadd.f32 %v3220, %v3204
      %v3222 = vadd.f32 %v3221, %v3205
      %v3223 = vadd.f32 %v3222, %v3206
      %v3224 = vadd.f32 %v3223, %v3207
      %v3225 = vadd.f32 %v3224, %v3208
      %v3226 = vadd.f32 %v3225, %v3209
      %v3227 = vadd.f32 %v3226, %v3210
      %v3228 = vadd.f32 %v3227, %v3211
      %v3229 = vadd.f32 %v3228, %v3212
      %v3230 = vadd.f32 %v3229, %v3213
      %v3231 = vadd.f32 %v3230, %v3214
      %v3232 = vadd.f32 %v3231, %v3215
      %v3233 = vadd.f32 %v3232, %v3216
      %v3234 = vadd.f32 %v3233, %v3217
      %v3235 = vadd.f32 %v3234, %v3218
      %v3236 = vadd.f32 %v3235, %v3219
      %v3237 = vrot.slane %v3236, 4
      %v3238 = vadd.f32 %v3236, %v3237
      %v3239 = vrot.slane %v3238, 2
      %v3240 = vadd.f32 %v3238, %v3239
      %v3241 = vrot.slane %v3240, 1
      %v3242 = vadd.f32 %v3240, %v3241
      %v3243 = vmul.f32 %v3202, %v3202
      %v3244 = vmul.f32 %v3203, %v3203
      %v3245 = vmul.f32 %v3204, %v3204
      %v3246 = vmul.f32 %v3205, %v3205
      %v3247 = vmul.f32 %v3206, %v3206
      %v3248 = vmul.f32 %v3207, %v3207
      %v3249 = vmul.f32 %v3208, %v3208
      %v3250 = vmul.f32 %v3209, %v3209
      %v3251 = vmul.f32 %v3210, %v3210
      %v3252 = vmul.f32 %v3211, %v3211
      %v3253 = vmul.f32 %v3212, %v3212
      %v3254 = vmul.f32 %v3213, %v3213
      %v3255 = vmul.f32 %v3214, %v3214
      %v3256 = vmul.f32 %v3215, %v3215
      %v3257 = vmul.f32 %v3216, %v3216
      %v3258 = vmul.f32 %v3217, %v3217
      %v3259 = vmul.f32 %v3218, %v3218
      %v3260 = vmul.f32 %v3219, %v3219
      %v3261 = vadd.f32 %v3243, %v3244
      %v3262 = vadd.f32 %v3261, %v3245
      %v3263 = vadd.f32 %v3262, %v3246
      %v3264 = vadd.f32 %v3263, %v3247
      %v3265 = vadd.f32 %v3264, %v3248
      %v3266 = vadd.f32 %v3265, %v3249
      %v3267 = vadd.f32 %v3266, %v3250
      %v3268 = vadd.f32 %v3267, %v3251
      %v3269 = vadd.f32 %v3268, %v3252
      %v3270 = vadd.f32 %v3269, %v3253
      %v3271 = vadd.f32 %v3270, %v3254
      %v3272 = vadd.f32 %v3271, %v3255
      %v3273 = vadd.f32 %v3272, %v3256
      %v3274 = vadd.f32 %v3273, %v3257
      %v3275 = vadd.f32 %v3274, %v3258
      %v3276 = vadd.f32 %v3275, %v3259
      %v3277 = vadd.f32 %v3276, %v3260
      %v3278 = vrot.slane %v3277, 4
      %v3279 = vadd.f32 %v3277, %v3278
      %v3280 = vrot.slane %v3279, 2
      %v3281 = vadd.f32 %v3279, %v3280
      %v3282 = vrot.slane %v3281, 1
      %v3283 = vadd.f32 %v3281, %v3282
      %vm3284 = vcmask 1040384
      %v3285 = vsel %vm3284, %v3242, %v3283
      %3286 = vst [vmem:[%s321] sm:$0x3] %v3285
      %p3287 = scmp.lt.s32.totalorder %s22, 1
      %s3288 = scalar_select %p3287, %s22, 1
      %p3289 = scmp.lt.s32.totalorder %s23, 1
      %s3290 = scalar_select %p3289, %s23, 1
      %p3291 = scmp.lt.s32.totalorder %s24, 0
      %s3292 = scalar_select %p3291, %s24, 0
      %s3293 = smul.addr %s3290, 18
      %s3294 = sadd.s32 %s3292, %s3293
      %s3295 = smul.addr %s3288, 36
      %s3296 = sadd.s32 %s3294, %s3295
      %s3297 = smul.addr %s3296, 4
      %s3298 = scalar_lea.vmem %s4, %s3297
      %p3299 = scmp.lt.s32.totalorder %s22, 1
      %s3300 = scalar_select %p3299, %s22, 1
      %p3301 = scmp.lt.s32.totalorder %s23, 1
      %s3302 = scalar_select %p3301, %s23, 1
      %p3303 = scmp.lt.s32.totalorder %s24, 0
      %s3304 = scalar_select %p3303, %s24, 0
      %s3305 = sadd.s32 %s3304, %s3302
      %s3306 = smul.addr %s3300, 2
      %s3307 = sadd.s32 %s3305, %s3306
      %s3308 = smul.addr %s3307, 2
      %s3309 = scalar_lea.vmem %s5, %s3308
      // Predicated region
      $region41: #{double_conv.4} parent=35 // pred_check
        %p3310 = pneg %p154
      $region42: #{double_conv.4} parent=35 // pred_check_branch
        %3312 = sbr.rel (%p3310) target = $region44
      $region43: #{double_conv.4} parent=35 // pred_region
        _
      $region44: #{double_conv.4} parent=35 // pred_fallthru
        _
      // Predicated region
      $region45: #{double_conv.4} parent=35 // pred_check
        %p3313 = pneg %p184
      $region46: #{double_conv.4} parent=35 // pred_check_branch
        %3315 = sbr.rel (%p3313) target = $region48
      $region47: #{double_conv.4} parent=35 // pred_region
        _
      $region48: #{double_conv.4} parent=35 // pred_fallthru
        _
    $region36: #{double_conv.4} parent=5 // pred_fallthru
      _
    %p3316 = scmp.le.s32.totalorder 2, %s12
    // Predicated region
    $region49: #{double_conv.4} parent=5 // pred_check
      %p3317 = pneg %p3316
    $region50: #{double_conv.4} parent=5 // pred_check_branch
      %3319 = sbr.rel (%p3317) target = $region52
    $region51: #{double_conv.4} parent=5 // pred_region
      %s3320 = ssub.s32 %s12, 2
      // Predicated region
      $region53: #{double_conv.4} parent=51 // pred_check
        %p3321 = pneg %p160
      $region54: #{double_conv.4} parent=51 // pred_check_branch
        %3323 = sbr.rel (%p3321) target = $region56
      $region55: #{double_conv.4} parent=51 // pred_region
        %p3324 = scmp.lt.s32.totalorder %s25, 1
        %s3325 = scalar_select %p3324, %s25, 1
        %p3326 = scmp.lt.s32.totalorder %s26, 1
        %s3327 = scalar_select %p3326, %s26, 1
        %p3328 = scmp.lt.s32.totalorder %s27, 0
        %s3329 = scalar_select %p3328, %s27, 0
        %s3330 = smul.addr %s3327, 18
        %s3331 = sadd.s32 %s3329, %s3330
        %s3332 = smul.addr %s3325, 36
        %s3333 = sadd.s32 %s3331, %s3332
        %s3334 = smul.addr %s3333, 4
        %s3335 = scalar_lea.vmem %s4, %s3334
      $region56: #{double_conv.4} parent=51 // pred_fallthru
        _
      // Predicated region
      $region57: #{double_conv.4} parent=51 // pred_check
        %p3336 = pneg %p190
      $region58: #{double_conv.4} parent=51 // pred_check_branch
        %3338 = sbr.rel (%p3336) target = $region60
      $region59: #{double_conv.4} parent=51 // pred_region
        %p3339 = scmp.lt.s32.totalorder %s25, 1
        %s3340 = scalar_select %p3339, %s25, 1
        %p3341 = scmp.lt.s32.totalorder %s26, 1
        %s3342 = scalar_select %p3341, %s26, 1
        %p3343 = scmp.lt.s32.totalorder %s27, 0
        %s3344 = scalar_select %p3343, %s27, 0
        %s3345 = sadd.s32 %s3344, %s3342
        %s3346 = smul.addr %s3340, 2
        %s3347 = sadd.s32 %s3345, %s3346
        %s3348 = smul.addr %s3347, 2
        %s3349 = scalar_lea.vmem %s5, %s3348
      $region60: #{double_conv.4} parent=51 // pred_fallthru
        _
    $region52: #{double_conv.4} parent=5 // pred_fallthru
      _
  $region6: #{double_conv.4} parent=0 // loop_footer
    %s16 = sadd.s32 1, %s12
  $region7: #{double_conv.4} parent=0 // loop_footer_branch
    %11 = sbr.rel target = $region3
  $region8: #{double_conv.4} parent=0 // loop_exit
    _

</llo_original>
